<compile_context>
chip_gen: v7x
topology: tpu7x:2x2x1
jax: 0.10.0
libtpu: 0.0.40
codegen_flags: <defaults>
</compile_context>

<pallas_src>
import functools

import jax
import jax.numpy as jnp
from jax.experimental import pallas as pl
from jax.experimental.pallas import tpu as pltpu

# Flip to jnp.bfloat16 on v6e/v7x for MXU rate + halved weight DMA (relax the
# tolerance check if you do); float32 keeps exact PyTorch-module numerics.
MATMUL_DTYPE = jnp.float32


# ------------------------------ kernel ---------------------------------------
def _conv3x3_relu(x_act, w_ref, b_ref, *, mask_ref, W, L):
    """3x3 SAME conv + ReLU in channels-major layout.

    x_act:    (Cin, L) activation value; L = batch_block * H * W, images
              concatenated along the lane axis.
    w_ref:    (9, Cout, Cin) weights, tap-major (tap = (dy+1)*3 + (dx+1)).
    b_ref:    (Cout, 1).
    mask_ref: (9, L) f32 validity mask (0 where the rolled source pixel falls
              outside the image for that tap).
    Each tap is a lane roll of the activation (dx=+-1 -> +-1, dy=+-1 -> +-W)
    fed straight into an accumulating MXU matmul, so the (9*Cin, L) patch
    matrix is never materialised and live vreg state stays small.
    """
    acc = None
    t = 0
    for dy in (-1, 0, 1):
        for dx in (-1, 0, 1):
            if dy == 0 and dx == 0:
                tap = x_act
            else:
                shift = (-(dy * W + dx)) % L          # rolled[p] = x[p + dy*W + dx]
                tap = pltpu.roll(x_act, shift, axis=1) * mask_ref[t:t + 1, :]
            d = jnp.dot(w_ref[t].astype(MATMUL_DTYPE), tap.astype(MATMUL_DTYPE),
                        preferred_element_type=jnp.float32)
            acc = d if acc is None else acc + d
            t += 1
    return jnp.maximum(acc + b_ref[...], 0.0)


def _mini_unet_kernel(x_ref, mask_ref, w1_ref, b1_ref, w2_ref, b2_ref,
                      w3_ref, b3_ref, w4_ref, b4_ref, o_ref, *, W):
    L = x_ref.shape[-1]
    conv = functools.partial(_conv3x3_relu, mask_ref=mask_ref, W=W, L=L)

    a1 = conv(x_ref[...], w1_ref, b1_ref)     # (32, L)
    a2 = conv(a1, w2_ref, b2_ref)             # (64, L)
    a3 = conv(a2, w3_ref, b3_ref)             # (32, L)

    # 1x1 conv (32 -> 1) on the VPU: broadcast-multiply + cross-sublane reduce
    # (avoids an M=1 MXU push/drain in an overhead-bound kernel).
    out = jnp.sum(a3 * w4_ref[...], axis=0, keepdims=True) + b4_ref[...]
    o_ref[...] = out.astype(o_ref.dtype)      # (1, L), lane-dense


# ------------------------------ wrapper ---------------------------------------
def _tap_masks(H, W):
    """(9, H*W) per-tap validity masks for 'SAME' zero padding in flat layout."""
    yy, xx = jnp.meshgrid(jnp.arange(H), jnp.arange(W), indexing="ij")
    rows = []
    for dy in (-1, 0, 1):
        for dx in (-1, 0, 1):
            ok = ((yy + dy >= 0) & (yy + dy < H) &
                  (xx + dx >= 0) & (xx + dx < W))
            rows.append(ok.reshape(-1))
    return jnp.stack(rows, axis=0).astype(jnp.float32)


def _pack_conv3x3(w_hwio, cin_pad=None):
    """(kh, kw, cin, cout) -> tap-major (9, cout, cin[_pad]) in MATMUL_DTYPE."""
    kh, kw, cin, cout = w_hwio.shape
    if cin_pad is not None and cin_pad > cin:
        w_hwio = jnp.pad(w_hwio, ((0, 0), (0, 0), (0, cin_pad - cin), (0, 0)))
        cin = cin_pad
    return (jnp.transpose(w_hwio, (0, 1, 3, 2))
            .reshape(kh * kw, cout, cin).astype(MATMUL_DTYPE))


def _default_batch_block(N):
    # Largest divisor of N that is <= 8 while keeping >= 2 grid steps (megacore).
    for d in range(min(8, N), 0, -1):
        if N % d == 0 and N // d >= 2:
            return d
    return 1


def mini_unet_forward(x_nchw, p, *, batch_block=None):
    """PyTorch-equivalent forward; input/output NCHW like the nn.Module."""
    N, Cin, H, W = x_nchw.shape
    HW = H * W
    if batch_block is None:
        batch_block = _default_batch_block(N)
    assert N % batch_block == 0, (N, batch_block)
    steps = N // batch_block
    L = batch_block * HW          # lane width per grid step (multiple of 128 here)

    # Channels-major input, images lane-concatenated; pad Cin 3 -> 8 so every
    # MXU operand is sublane-aligned (the zero rows contribute nothing).
    cin_p = max(8, Cin)
    x_cm = jnp.transpose(x_nchw.reshape(N, Cin, HW), (1, 0, 2)).reshape(Cin, N * HW)
    if cin_p > Cin:
        x_cm = jnp.pad(x_cm, ((0, cin_p - Cin), (0, 0)))

    mask = jnp.tile(_tap_masks(H, W), (1, batch_block))            # (9, L)

    w1 = _pack_conv3x3(p["w1"], cin_pad=cin_p)                     # (9, 32, 8)
    w2 = _pack_conv3x3(p["w2"])                                    # (9, 64, 32)
    w3 = _pack_conv3x3(p["w3"])                                    # (9, 32, 64)
    C1, C2 = w1.shape[1], w2.shape[1]
    w4 = p["w4"].reshape(C1, 1).astype(jnp.float32)                # (32, 1), VPU path
    b1 = p["b1"].reshape(C1, 1).astype(jnp.float32)
    b2 = p["b2"].reshape(C2, 1).astype(jnp.float32)
    b3 = p["b3"].reshape(C1, 1).astype(jnp.float32)
    b4 = p["b4"].reshape(1, 1).astype(jnp.float32)

    def full(arr):
        nd = arr.ndim
        return pl.BlockSpec(arr.shape, lambda *_: (0,) * nd)

    kernel = functools.partial(_mini_unet_kernel, W=W)

    # NOTE: at large resolutions (v7x: 64 MiB VMEM, v5e: 16 MiB scoped default)
    # tile the pixel axis into row blocks (fold the 1-row halo into the masks)
    # and set vmem_limit_bytes explicitly; whole images fit trivially here.
    out_flat = pl.pallas_call(
        kernel,
        out_shape=jax.ShapeDtypeStruct((1, N * HW), jnp.float32),
        grid=(steps,),
        in_specs=[
            pl.BlockSpec((cin_p, L), lambda n: (0, n)),    # channels-major input
            full(mask),
            full(w1), full(b1),
            full(w2), full(b2),
            full(w3), full(b3),
            full(w4), full(b4),
        ],
        out_specs=pl.BlockSpec((1, L), lambda n: (0, n)),  # lane-dense output
        compiler_params=pltpu.CompilerParams(dimension_semantics=("parallel",)),
    )(x_cm, mask, w1, b1, w2, b2, w3, b3, w4, b4)

    # Lanes are image-major, so this reshape back to NCHW is pure metadata.
    return out_flat.reshape(N, 1, H, W)


# ------------------------------ params / reference ----------------------------
def init_params(key):
    """Weights in HWIO layout, mirroring the PyTorch MiniUNet layers."""
    ks = jax.random.split(key, 8)

    def conv_w(k, kh, kw, cin, cout):
        fan_in = cin * kh * kw
        return jax.random.normal(k, (kh, kw, cin, cout), jnp.float32) * jnp.sqrt(2.0 / fan_in)

    return {
        "w1": conv_w(ks[0], 3, 3, 3, 32),
        "b1": jax.random.normal(ks[1], (1, 32), jnp.float32) * 0.01,
        "w2": conv_w(ks[2], 3, 3, 32, 64),
        "b2": jax.random.normal(ks[3], (1, 64), jnp.float32) * 0.01,
        "w3": conv_w(ks[4], 3, 3, 64, 32),
        "b3": jax.random.normal(ks[5], (1, 32), jnp.float32) * 0.01,
        "w4": jax.random.normal(ks[6], (32, 1), jnp.float32) * jnp.sqrt(2.0 / 32),
        "b4": jax.random.normal(ks[7], (1, 1), jnp.float32) * 0.01,
    }


def reference_forward(x_nchw, p):
    """Pure-JAX reference mirroring the PyTorch module (correctness check)."""
    def conv(x, w, b):
        y = jax.lax.conv_general_dilated(
            x, w, (1, 1), "SAME",
            dimension_numbers=("NHWC", "HWIO", "NHWC"),
            precision=jax.lax.Precision.HIGHEST)
        return y + b.reshape(1, 1, 1, -1)

    x = jnp.transpose(x_nchw, (0, 2, 3, 1))
    x = jax.nn.relu(conv(x, p["w1"], p["b1"]))
    x = jax.nn.relu(conv(x, p["w2"], p["b2"]))
    x = jax.nn.relu(conv(x, p["w3"], p["b3"]))
    x = conv(x, p["w4"].reshape(1, 1, 32, 1), p["b4"])
    return jnp.transpose(x, (0, 3, 1, 2))


if __name__ == "__main__":
    key = jax.random.PRNGKey(0)
    pkey, xkey = jax.random.split(key)
    params = init_params(pkey)

    # NCHW input like the PyTorch module: batch=2, channels=3 (fixed by conv1), 16x16.
    x = jax.random.normal(xkey, (2, 3, 16, 16), jnp.float32)

    out = jax.jit(mini_unet_forward)(x, params)
    jax.block_until_ready(out)

    ref = reference_forward(x, params)
    assert out.shape == (2, 1, 16, 16), out.shape
    err = float(jnp.max(jnp.abs(out - ref)))
    assert jnp.allclose(out, ref, atol=1e-3, rtol=1e-3), f"max abs err = {err}"
    print("KERNEL_OK")
</pallas_src>

<mosaic_0001>
module attributes {stable_mosaic.version = 11 : i64} {
  func.func @_mini_unet_kernel(%arg0: i32, %arg1: memref<8x256xf32, #tpu.memory_space<vmem>>, %arg2: memref<9x256xf32, #tpu.memory_space<vmem>>, %arg3: memref<9x32x8xf32, #tpu.memory_space<vmem>>, %arg4: memref<32x1xf32, #tpu.memory_space<vmem>>, %arg5: memref<9x64x32xf32, #tpu.memory_space<vmem>>, %arg6: memref<64x1xf32, #tpu.memory_space<vmem>>, %arg7: memref<9x32x64xf32, #tpu.memory_space<vmem>>, %arg8: memref<32x1xf32, #tpu.memory_space<vmem>>, %arg9: memref<32x1xf32, #tpu.memory_space<vmem>>, %arg10: memref<1x1xf32, #tpu.memory_space<vmem>>, %arg11: memref<1x256xf32, #tpu.memory_space<vmem>>) attributes {dimension_semantics = [#tpu.dimension_semantics<parallel>], iteration_bounds = array<i64: 2>, scalar_prefetch = 0 : i64, scratch_operands = 0 : i64, tpu.core_type = #tpu.core_type<tc>, window_params = [{transform_indices = @transform_0, window_bounds = array<i64: 8, 256>}, {pipeline_mode = #tpu.pipeline_mode<synchronous>, transform_indices = @transform_1, window_bounds = array<i64: 9, 256>}, {pipeline_mode = #tpu.pipeline_mode<synchronous>, transform_indices = @transform_2, window_bounds = array<i64: 9, 32, 8>}, {pipeline_mode = #tpu.pipeline_mode<synchronous>, transform_indices = @transform_3, window_bounds = array<i64: 32, 1>}, {pipeline_mode = #tpu.pipeline_mode<synchronous>, transform_indices = @transform_4, window_bounds = array<i64: 9, 64, 32>}, {pipeline_mode = #tpu.pipeline_mode<synchronous>, transform_indices = @transform_5, window_bounds = array<i64: 64, 1>}, {pipeline_mode = #tpu.pipeline_mode<synchronous>, transform_indices = @transform_6, window_bounds = array<i64: 9, 32, 64>}, {pipeline_mode = #tpu.pipeline_mode<synchronous>, transform_indices = @transform_7, window_bounds = array<i64: 32, 1>}, {pipeline_mode = #tpu.pipeline_mode<synchronous>, transform_indices = @transform_8, window_bounds = array<i64: 32, 1>}, {pipeline_mode = #tpu.pipeline_mode<synchronous>, transform_indices = @transform_9, window_bounds = array<i64: 1, 1>}, {transform_indices = @transform_10, window_bounds = array<i64: 1, 256>}]} {
    %c0 = arith.constant 0 : index
    %c0_0 = arith.constant 0 : index
    %0 = vector.load %arg1[%c0, %c0_0] : memref<8x256xf32, #tpu.memory_space<vmem>>, vector<8x256xf32>
    %c17_i32 = arith.constant 17 : i32
    %1 = tpu.dynamic_rotate %0 by %c17_i32 dim 1 : vector<8x256xf32>, i32 -> vector<8x256xf32>
    %c0_1 = arith.constant 0 : index
    %c0_2 = arith.constant 0 : index
    %2 = vector.load %arg2[%c0_1, %c0_2] : memref<9x256xf32, #tpu.memory_space<vmem>>, vector<1x256xf32>
    %3 = vector.broadcast %2 : vector<1x256xf32> to vector<8x256xf32>
    %4 = arith.mulf %1, %3 : vector<8x256xf32>
    %c0_3 = arith.constant 0 : index
    %c0_4 = arith.constant 0 : index
    %c0_5 = arith.constant 0 : index
    %5 = vector.load %arg3[%c0_3, %c0_4, %c0_5] : memref<9x32x8xf32, #tpu.memory_space<vmem>>, vector<1x32x8xf32>
    %6 = vector.shape_cast %5 : vector<1x32x8xf32> to vector<32x8xf32>
    %cst = arith.constant dense<0.000000e+00> : vector<32x256xf32>
    %7 = tpu.matmul %6, %4, %cst {dimension_numbers = #tpu.dot_dimension_numbers<[1], [0], [0], [1], [0, 0, 1, 1], [], []>} : vector<32x8xf32>, vector<8x256xf32>, vector<32x256xf32> -> vector<32x256xf32>
    %c16_i32 = arith.constant 16 : i32
    %8 = tpu.dynamic_rotate %0 by %c16_i32 dim 1 : vector<8x256xf32>, i32 -> vector<8x256xf32>
    %c1 = arith.constant 1 : index
    %c0_6 = arith.constant 0 : index
    %9 = vector.load %arg2[%c1, %c0_6] : memref<9x256xf32, #tpu.memory_space<vmem>>, vector<1x256xf32>
    %10 = vector.broadcast %9 : vector<1x256xf32> to vector<8x256xf32>
    %11 = arith.mulf %8, %10 : vector<8x256xf32>
    %c1_7 = arith.constant 1 : index
    %c0_8 = arith.constant 0 : index
    %c0_9 = arith.constant 0 : index
    %12 = vector.load %arg3[%c1_7, %c0_8, %c0_9] : memref<9x32x8xf32, #tpu.memory_space<vmem>>, vector<1x32x8xf32>
    %13 = vector.shape_cast %12 : vector<1x32x8xf32> to vector<32x8xf32>
    %cst_10 = arith.constant dense<0.000000e+00> : vector<32x256xf32>
    %14 = tpu.matmul %13, %11, %cst_10 {dimension_numbers = #tpu.dot_dimension_numbers<[1], [0], [0], [1], [0, 0, 1, 1], [], []>} : vector<32x8xf32>, vector<8x256xf32>, vector<32x256xf32> -> vector<32x256xf32>
    %15 = arith.addf %7, %14 : vector<32x256xf32>
    %c15_i32 = arith.constant 15 : i32
    %16 = tpu.dynamic_rotate %0 by %c15_i32 dim 1 : vector<8x256xf32>, i32 -> vector<8x256xf32>
    %c2 = arith.constant 2 : index
    %c0_11 = arith.constant 0 : index
    %17 = vector.load %arg2[%c2, %c0_11] : memref<9x256xf32, #tpu.memory_space<vmem>>, vector<1x256xf32>
    %18 = vector.broadcast %17 : vector<1x256xf32> to vector<8x256xf32>
    %19 = arith.mulf %16, %18 : vector<8x256xf32>
    %c2_12 = arith.constant 2 : index
    %c0_13 = arith.constant 0 : index
    %c0_14 = arith.constant 0 : index
    %20 = vector.load %arg3[%c2_12, %c0_13, %c0_14] : memref<9x32x8xf32, #tpu.memory_space<vmem>>, vector<1x32x8xf32>
    %21 = vector.shape_cast %20 : vector<1x32x8xf32> to vector<32x8xf32>
    %cst_15 = arith.constant dense<0.000000e+00> : vector<32x256xf32>
    %22 = tpu.matmul %21, %19, %cst_15 {dimension_numbers = #tpu.dot_dimension_numbers<[1], [0], [0], [1], [0, 0, 1, 1], [], []>} : vector<32x8xf32>, vector<8x256xf32>, vector<32x256xf32> -> vector<32x256xf32>
    %23 = arith.addf %15, %22 : vector<32x256xf32>
    %c1_i32 = arith.constant 1 : i32
    %24 = tpu.dynamic_rotate %0 by %c1_i32 dim 1 : vector<8x256xf32>, i32 -> vector<8x256xf32>
    %c3 = arith.constant 3 : index
    %c0_16 = arith.constant 0 : index
    %25 = vector.load %arg2[%c3, %c0_16] : memref<9x256xf32, #tpu.memory_space<vmem>>, vector<1x256xf32>
    %26 = vector.broadcast %25 : vector<1x256xf32> to vector<8x256xf32>
    %27 = arith.mulf %24, %26 : vector<8x256xf32>
    %c3_17 = arith.constant 3 : index
    %c0_18 = arith.constant 0 : index
    %c0_19 = arith.constant 0 : index
    %28 = vector.load %arg3[%c3_17, %c0_18, %c0_19] : memref<9x32x8xf32, #tpu.memory_space<vmem>>, vector<1x32x8xf32>
    %29 = vector.shape_cast %28 : vector<1x32x8xf32> to vector<32x8xf32>
    %cst_20 = arith.constant dense<0.000000e+00> : vector<32x256xf32>
    %30 = tpu.matmul %29, %27, %cst_20 {dimension_numbers = #tpu.dot_dimension_numbers<[1], [0], [0], [1], [0, 0, 1, 1], [], []>} : vector<32x8xf32>, vector<8x256xf32>, vector<32x256xf32> -> vector<32x256xf32>
    %31 = arith.addf %23, %30 : vector<32x256xf32>
    %c4 = arith.constant 4 : index
    %c0_21 = arith.constant 0 : index
    %c0_22 = arith.constant 0 : index
    %32 = vector.load %arg3[%c4, %c0_21, %c0_22] : memref<9x32x8xf32, #tpu.memory_space<vmem>>, vector<1x32x8xf32>
    %33 = vector.shape_cast %32 : vector<1x32x8xf32> to vector<32x8xf32>
    %cst_23 = arith.constant dense<0.000000e+00> : vector<32x256xf32>
    %34 = tpu.matmul %33, %0, %cst_23 {dimension_numbers = #tpu.dot_dimension_numbers<[1], [0], [0], [1], [0, 0, 1, 1], [], []>} : vector<32x8xf32>, vector<8x256xf32>, vector<32x256xf32> -> vector<32x256xf32>
    %35 = arith.addf %31, %34 : vector<32x256xf32>
    %c255_i32 = arith.constant 255 : i32
    %36 = tpu.dynamic_rotate %0 by %c255_i32 dim 1 : vector<8x256xf32>, i32 -> vector<8x256xf32>
    %c5 = arith.constant 5 : index
    %c0_24 = arith.constant 0 : index
    %37 = vector.load %arg2[%c5, %c0_24] : memref<9x256xf32, #tpu.memory_space<vmem>>, vector<1x256xf32>
    %38 = vector.broadcast %37 : vector<1x256xf32> to vector<8x256xf32>
    %39 = arith.mulf %36, %38 : vector<8x256xf32>
    %c5_25 = arith.constant 5 : index
    %c0_26 = arith.constant 0 : index
    %c0_27 = arith.constant 0 : index
    %40 = vector.load %arg3[%c5_25, %c0_26, %c0_27] : memref<9x32x8xf32, #tpu.memory_space<vmem>>, vector<1x32x8xf32>
    %41 = vector.shape_cast %40 : vector<1x32x8xf32> to vector<32x8xf32>
    %cst_28 = arith.constant dense<0.000000e+00> : vector<32x256xf32>
    %42 = tpu.matmul %41, %39, %cst_28 {dimension_numbers = #tpu.dot_dimension_numbers<[1], [0], [0], [1], [0, 0, 1, 1], [], []>} : vector<32x8xf32>, vector<8x256xf32>, vector<32x256xf32> -> vector<32x256xf32>
    %43 = arith.addf %35, %42 : vector<32x256xf32>
    %c241_i32 = arith.constant 241 : i32
    %44 = tpu.dynamic_rotate %0 by %c241_i32 dim 1 : vector<8x256xf32>, i32 -> vector<8x256xf32>
    %c6 = arith.constant 6 : index
    %c0_29 = arith.constant 0 : index
    %45 = vector.load %arg2[%c6, %c0_29] : memref<9x256xf32, #tpu.memory_space<vmem>>, vector<1x256xf32>
    %46 = vector.broadcast %45 : vector<1x256xf32> to vector<8x256xf32>
    %47 = arith.mulf %44, %46 : vector<8x256xf32>
    %c6_30 = arith.constant 6 : index
    %c0_31 = arith.constant 0 : index
    %c0_32 = arith.constant 0 : index
    %48 = vector.load %arg3[%c6_30, %c0_31, %c0_32] : memref<9x32x8xf32, #tpu.memory_space<vmem>>, vector<1x32x8xf32>
    %49 = vector.shape_cast %48 : vector<1x32x8xf32> to vector<32x8xf32>
    %cst_33 = arith.constant dense<0.000000e+00> : vector<32x256xf32>
    %50 = tpu.matmul %49, %47, %cst_33 {dimension_numbers = #tpu.dot_dimension_numbers<[1], [0], [0], [1], [0, 0, 1, 1], [], []>} : vector<32x8xf32>, vector<8x256xf32>, vector<32x256xf32> -> vector<32x256xf32>
    %51 = arith.addf %43, %50 : vector<32x256xf32>
    %c240_i32 = arith.constant 240 : i32
    %52 = tpu.dynamic_rotate %0 by %c240_i32 dim 1 : vector<8x256xf32>, i32 -> vector<8x256xf32>
    %c7 = arith.constant 7 : index
    %c0_34 = arith.constant 0 : index
    %53 = vector.load %arg2[%c7, %c0_34] : memref<9x256xf32, #tpu.memory_space<vmem>>, vector<1x256xf32>
    %54 = vector.broadcast %53 : vector<1x256xf32> to vector<8x256xf32>
    %55 = arith.mulf %52, %54 : vector<8x256xf32>
    %c7_35 = arith.constant 7 : index
    %c0_36 = arith.constant 0 : index
    %c0_37 = arith.constant 0 : index
    %56 = vector.load %arg3[%c7_35, %c0_36, %c0_37] : memref<9x32x8xf32, #tpu.memory_space<vmem>>, vector<1x32x8xf32>
    %57 = vector.shape_cast %56 : vector<1x32x8xf32> to vector<32x8xf32>
    %cst_38 = arith.constant dense<0.000000e+00> : vector<32x256xf32>
    %58 = tpu.matmul %57, %55, %cst_38 {dimension_numbers = #tpu.dot_dimension_numbers<[1], [0], [0], [1], [0, 0, 1, 1], [], []>} : vector<32x8xf32>, vector<8x256xf32>, vector<32x256xf32> -> vector<32x256xf32>
    %59 = arith.addf %51, %58 : vector<32x256xf32>
    %c239_i32 = arith.constant 239 : i32
    %60 = tpu.dynamic_rotate %0 by %c239_i32 dim 1 : vector<8x256xf32>, i32 -> vector<8x256xf32>
    %c8 = arith.constant 8 : index
    %c0_39 = arith.constant 0 : index
    %61 = vector.load %arg2[%c8, %c0_39] : memref<9x256xf32, #tpu.memory_space<vmem>>, vector<1x256xf32>
    %62 = vector.broadcast %61 : vector<1x256xf32> to vector<8x256xf32>
    %63 = arith.mulf %60, %62 : vector<8x256xf32>
    %c8_40 = arith.constant 8 : index
    %c0_41 = arith.constant 0 : index
    %c0_42 = arith.constant 0 : index
    %64 = vector.load %arg3[%c8_40, %c0_41, %c0_42] : memref<9x32x8xf32, #tpu.memory_space<vmem>>, vector<1x32x8xf32>
    %65 = vector.shape_cast %64 : vector<1x32x8xf32> to vector<32x8xf32>
    %cst_43 = arith.constant dense<0.000000e+00> : vector<32x256xf32>
    %66 = tpu.matmul %65, %63, %cst_43 {dimension_numbers = #tpu.dot_dimension_numbers<[1], [0], [0], [1], [0, 0, 1, 1], [], []>} : vector<32x8xf32>, vector<8x256xf32>, vector<32x256xf32> -> vector<32x256xf32>
    %67 = arith.addf %59, %66 : vector<32x256xf32>
    %c0_44 = arith.constant 0 : index
    %c0_45 = arith.constant 0 : index
    %68 = vector.load %arg4[%c0_44, %c0_45] : memref<32x1xf32, #tpu.memory_space<vmem>>, vector<32x1xf32>
    %69 = vector.broadcast %68 : vector<32x1xf32> to vector<32x256xf32>
    %70 = arith.addf %67, %69 : vector<32x256xf32>
    %cst_46 = arith.constant 0.000000e+00 : f32
    %71 = vector.broadcast %cst_46 : f32 to vector<32x256xf32>
    %72 = arith.maximumf %70, %71 : vector<32x256xf32>
    %c17_i32_47 = arith.constant 17 : i32
    %73 = tpu.dynamic_rotate %72 by %c17_i32_47 dim 1 : vector<32x256xf32>, i32 -> vector<32x256xf32>
    %c0_48 = arith.constant 0 : index
    %c0_49 = arith.constant 0 : index
    %74 = vector.load %arg2[%c0_48, %c0_49] : memref<9x256xf32, #tpu.memory_space<vmem>>, vector<1x256xf32>
    %75 = vector.broadcast %74 : vector<1x256xf32> to vector<32x256xf32>
    %76 = arith.mulf %73, %75 : vector<32x256xf32>
    %c0_50 = arith.constant 0 : index
    %c0_51 = arith.constant 0 : index
    %c0_52 = arith.constant 0 : index
    %77 = vector.load %arg5[%c0_50, %c0_51, %c0_52] : memref<9x64x32xf32, #tpu.memory_space<vmem>>, vector<1x64x32xf32>
    %78 = vector.shape_cast %77 : vector<1x64x32xf32> to vector<64x32xf32>
    %cst_53 = arith.constant dense<0.000000e+00> : vector<64x256xf32>
    %79 = tpu.matmul %78, %76, %cst_53 {dimension_numbers = #tpu.dot_dimension_numbers<[1], [0], [0], [1], [0, 0, 1, 1], [], []>} : vector<64x32xf32>, vector<32x256xf32>, vector<64x256xf32> -> vector<64x256xf32>
    %c16_i32_54 = arith.constant 16 : i32
    %80 = tpu.dynamic_rotate %72 by %c16_i32_54 dim 1 : vector<32x256xf32>, i32 -> vector<32x256xf32>
    %c1_55 = arith.constant 1 : index
    %c0_56 = arith.constant 0 : index
    %81 = vector.load %arg2[%c1_55, %c0_56] : memref<9x256xf32, #tpu.memory_space<vmem>>, vector<1x256xf32>
    %82 = vector.broadcast %81 : vector<1x256xf32> to vector<32x256xf32>
    %83 = arith.mulf %80, %82 : vector<32x256xf32>
    %c1_57 = arith.constant 1 : index
    %c0_58 = arith.constant 0 : index
    %c0_59 = arith.constant 0 : index
    %84 = vector.load %arg5[%c1_57, %c0_58, %c0_59] : memref<9x64x32xf32, #tpu.memory_space<vmem>>, vector<1x64x32xf32>
    %85 = vector.shape_cast %84 : vector<1x64x32xf32> to vector<64x32xf32>
    %cst_60 = arith.constant dense<0.000000e+00> : vector<64x256xf32>
    %86 = tpu.matmul %85, %83, %cst_60 {dimension_numbers = #tpu.dot_dimension_numbers<[1], [0], [0], [1], [0, 0, 1, 1], [], []>} : vector<64x32xf32>, vector<32x256xf32>, vector<64x256xf32> -> vector<64x256xf32>
    %87 = arith.addf %79, %86 : vector<64x256xf32>
    %c15_i32_61 = arith.constant 15 : i32
    %88 = tpu.dynamic_rotate %72 by %c15_i32_61 dim 1 : vector<32x256xf32>, i32 -> vector<32x256xf32>
    %c2_62 = arith.constant 2 : index
    %c0_63 = arith.constant 0 : index
    %89 = vector.load %arg2[%c2_62, %c0_63] : memref<9x256xf32, #tpu.memory_space<vmem>>, vector<1x256xf32>
    %90 = vector.broadcast %89 : vector<1x256xf32> to vector<32x256xf32>
    %91 = arith.mulf %88, %90 : vector<32x256xf32>
    %c2_64 = arith.constant 2 : index
    %c0_65 = arith.constant 0 : index
    %c0_66 = arith.constant 0 : index
    %92 = vector.load %arg5[%c2_64, %c0_65, %c0_66] : memref<9x64x32xf32, #tpu.memory_space<vmem>>, vector<1x64x32xf32>
    %93 = vector.shape_cast %92 : vector<1x64x32xf32> to vector<64x32xf32>
    %cst_67 = arith.constant dense<0.000000e+00> : vector<64x256xf32>
    %94 = tpu.matmul %93, %91, %cst_67 {dimension_numbers = #tpu.dot_dimension_numbers<[1], [0], [0], [1], [0, 0, 1, 1], [], []>} : vector<64x32xf32>, vector<32x256xf32>, vector<64x256xf32> -> vector<64x256xf32>
    %95 = arith.addf %87, %94 : vector<64x256xf32>
    %c1_i32_68 = arith.constant 1 : i32
    %96 = tpu.dynamic_rotate %72 by %c1_i32_68 dim 1 : vector<32x256xf32>, i32 -> vector<32x256xf32>
    %c3_69 = arith.constant 3 : index
    %c0_70 = arith.constant 0 : index
    %97 = vector.load %arg2[%c3_69, %c0_70] : memref<9x256xf32, #tpu.memory_space<vmem>>, vector<1x256xf32>
    %98 = vector.broadcast %97 : vector<1x256xf32> to vector<32x256xf32>
    %99 = arith.mulf %96, %98 : vector<32x256xf32>
    %c3_71 = arith.constant 3 : index
    %c0_72 = arith.constant 0 : index
    %c0_73 = arith.constant 0 : index
    %100 = vector.load %arg5[%c3_71, %c0_72, %c0_73] : memref<9x64x32xf32, #tpu.memory_space<vmem>>, vector<1x64x32xf32>
    %101 = vector.shape_cast %100 : vector<1x64x32xf32> to vector<64x32xf32>
    %cst_74 = arith.constant dense<0.000000e+00> : vector<64x256xf32>
    %102 = tpu.matmul %101, %99, %cst_74 {dimension_numbers = #tpu.dot_dimension_numbers<[1], [0], [0], [1], [0, 0, 1, 1], [], []>} : vector<64x32xf32>, vector<32x256xf32>, vector<64x256xf32> -> vector<64x256xf32>
    %103 = arith.addf %95, %102 : vector<64x256xf32>
    %c4_75 = arith.constant 4 : index
    %c0_76 = arith.constant 0 : index
    %c0_77 = arith.constant 0 : index
    %104 = vector.load %arg5[%c4_75, %c0_76, %c0_77] : memref<9x64x32xf32, #tpu.memory_space<vmem>>, vector<1x64x32xf32>
    %105 = vector.shape_cast %104 : vector<1x64x32xf32> to vector<64x32xf32>
    %cst_78 = arith.constant dense<0.000000e+00> : vector<64x256xf32>
    %106 = tpu.matmul %105, %72, %cst_78 {dimension_numbers = #tpu.dot_dimension_numbers<[1], [0], [0], [1], [0, 0, 1, 1], [], []>} : vector<64x32xf32>, vector<32x256xf32>, vector<64x256xf32> -> vector<64x256xf32>
    %107 = arith.addf %103, %106 : vector<64x256xf32>
    %c255_i32_79 = arith.constant 255 : i32
    %108 = tpu.dynamic_rotate %72 by %c255_i32_79 dim 1 : vector<32x256xf32>, i32 -> vector<32x256xf32>
    %c5_80 = arith.constant 5 : index
    %c0_81 = arith.constant 0 : index
    %109 = vector.load %arg2[%c5_80, %c0_81] : memref<9x256xf32, #tpu.memory_space<vmem>>, vector<1x256xf32>
    %110 = vector.broadcast %109 : vector<1x256xf32> to vector<32x256xf32>
    %111 = arith.mulf %108, %110 : vector<32x256xf32>
    %c5_82 = arith.constant 5 : index
    %c0_83 = arith.constant 0 : index
    %c0_84 = arith.constant 0 : index
    %112 = vector.load %arg5[%c5_82, %c0_83, %c0_84] : memref<9x64x32xf32, #tpu.memory_space<vmem>>, vector<1x64x32xf32>
    %113 = vector.shape_cast %112 : vector<1x64x32xf32> to vector<64x32xf32>
    %cst_85 = arith.constant dense<0.000000e+00> : vector<64x256xf32>
    %114 = tpu.matmul %113, %111, %cst_85 {dimension_numbers = #tpu.dot_dimension_numbers<[1], [0], [0], [1], [0, 0, 1, 1], [], []>} : vector<64x32xf32>, vector<32x256xf32>, vector<64x256xf32> -> vector<64x256xf32>
    %115 = arith.addf %107, %114 : vector<64x256xf32>
    %c241_i32_86 = arith.constant 241 : i32
    %116 = tpu.dynamic_rotate %72 by %c241_i32_86 dim 1 : vector<32x256xf32>, i32 -> vector<32x256xf32>
    %c6_87 = arith.constant 6 : index
    %c0_88 = arith.constant 0 : index
    %117 = vector.load %arg2[%c6_87, %c0_88] : memref<9x256xf32, #tpu.memory_space<vmem>>, vector<1x256xf32>
    %118 = vector.broadcast %117 : vector<1x256xf32> to vector<32x256xf32>
    %119 = arith.mulf %116, %118 : vector<32x256xf32>
    %c6_89 = arith.constant 6 : index
    %c0_90 = arith.constant 0 : index
    %c0_91 = arith.constant 0 : index
    %120 = vector.load %arg5[%c6_89, %c0_90, %c0_91] : memref<9x64x32xf32, #tpu.memory_space<vmem>>, vector<1x64x32xf32>
    %121 = vector.shape_cast %120 : vector<1x64x32xf32> to vector<64x32xf32>
    %cst_92 = arith.constant dense<0.000000e+00> : vector<64x256xf32>
    %122 = tpu.matmul %121, %119, %cst_92 {dimension_numbers = #tpu.dot_dimension_numbers<[1], [0], [0], [1], [0, 0, 1, 1], [], []>} : vector<64x32xf32>, vector<32x256xf32>, vector<64x256xf32> -> vector<64x256xf32>
    %123 = arith.addf %115, %122 : vector<64x256xf32>
    %c240_i32_93 = arith.constant 240 : i32
    %124 = tpu.dynamic_rotate %72 by %c240_i32_93 dim 1 : vector<32x256xf32>, i32 -> vector<32x256xf32>
    %c7_94 = arith.constant 7 : index
    %c0_95 = arith.constant 0 : index
    %125 = vector.load %arg2[%c7_94, %c0_95] : memref<9x256xf32, #tpu.memory_space<vmem>>, vector<1x256xf32>
    %126 = vector.broadcast %125 : vector<1x256xf32> to vector<32x256xf32>
    %127 = arith.mulf %124, %126 : vector<32x256xf32>
    %c7_96 = arith.constant 7 : index
    %c0_97 = arith.constant 0 : index
    %c0_98 = arith.constant 0 : index
    %128 = vector.load %arg5[%c7_96, %c0_97, %c0_98] : memref<9x64x32xf32, #tpu.memory_space<vmem>>, vector<1x64x32xf32>
    %129 = vector.shape_cast %128 : vector<1x64x32xf32> to vector<64x32xf32>
    %cst_99 = arith.constant dense<0.000000e+00> : vector<64x256xf32>
    %130 = tpu.matmul %129, %127, %cst_99 {dimension_numbers = #tpu.dot_dimension_numbers<[1], [0], [0], [1], [0, 0, 1, 1], [], []>} : vector<64x32xf32>, vector<32x256xf32>, vector<64x256xf32> -> vector<64x256xf32>
    %131 = arith.addf %123, %130 : vector<64x256xf32>
    %c239_i32_100 = arith.constant 239 : i32
    %132 = tpu.dynamic_rotate %72 by %c239_i32_100 dim 1 : vector<32x256xf32>, i32 -> vector<32x256xf32>
    %c8_101 = arith.constant 8 : index
    %c0_102 = arith.constant 0 : index
    %133 = vector.load %arg2[%c8_101, %c0_102] : memref<9x256xf32, #tpu.memory_space<vmem>>, vector<1x256xf32>
    %134 = vector.broadcast %133 : vector<1x256xf32> to vector<32x256xf32>
    %135 = arith.mulf %132, %134 : vector<32x256xf32>
    %c8_103 = arith.constant 8 : index
    %c0_104 = arith.constant 0 : index
    %c0_105 = arith.constant 0 : index
    %136 = vector.load %arg5[%c8_103, %c0_104, %c0_105] : memref<9x64x32xf32, #tpu.memory_space<vmem>>, vector<1x64x32xf32>
    %137 = vector.shape_cast %136 : vector<1x64x32xf32> to vector<64x32xf32>
    %cst_106 = arith.constant dense<0.000000e+00> : vector<64x256xf32>
    %138 = tpu.matmul %137, %135, %cst_106 {dimension_numbers = #tpu.dot_dimension_numbers<[1], [0], [0], [1], [0, 0, 1, 1], [], []>} : vector<64x32xf32>, vector<32x256xf32>, vector<64x256xf32> -> vector<64x256xf32>
    %139 = arith.addf %131, %138 : vector<64x256xf32>
    %c0_107 = arith.constant 0 : index
    %c0_108 = arith.constant 0 : index
    %140 = vector.load %arg6[%c0_107, %c0_108] : memref<64x1xf32, #tpu.memory_space<vmem>>, vector<64x1xf32>
    %141 = vector.broadcast %140 : vector<64x1xf32> to vector<64x256xf32>
    %142 = arith.addf %139, %141 : vector<64x256xf32>
    %cst_109 = arith.constant 0.000000e+00 : f32
    %143 = vector.broadcast %cst_109 : f32 to vector<64x256xf32>
    %144 = arith.maximumf %142, %143 : vector<64x256xf32>
    %c17_i32_110 = arith.constant 17 : i32
    %145 = tpu.dynamic_rotate %144 by %c17_i32_110 dim 1 : vector<64x256xf32>, i32 -> vector<64x256xf32>
    %c0_111 = arith.constant 0 : index
    %c0_112 = arith.constant 0 : index
    %146 = vector.load %arg2[%c0_111, %c0_112] : memref<9x256xf32, #tpu.memory_space<vmem>>, vector<1x256xf32>
    %147 = vector.broadcast %146 : vector<1x256xf32> to vector<64x256xf32>
    %148 = arith.mulf %145, %147 : vector<64x256xf32>
    %c0_113 = arith.constant 0 : index
    %c0_114 = arith.constant 0 : index
    %c0_115 = arith.constant 0 : index
    %149 = vector.load %arg7[%c0_113, %c0_114, %c0_115] : memref<9x32x64xf32, #tpu.memory_space<vmem>>, vector<1x32x64xf32>
    %150 = vector.shape_cast %149 : vector<1x32x64xf32> to vector<32x64xf32>
    %cst_116 = arith.constant dense<0.000000e+00> : vector<32x256xf32>
    %151 = tpu.matmul %150, %148, %cst_116 {dimension_numbers = #tpu.dot_dimension_numbers<[1], [0], [0], [1], [0, 0, 1, 1], [], []>} : vector<32x64xf32>, vector<64x256xf32>, vector<32x256xf32> -> vector<32x256xf32>
    %c16_i32_117 = arith.constant 16 : i32
    %152 = tpu.dynamic_rotate %144 by %c16_i32_117 dim 1 : vector<64x256xf32>, i32 -> vector<64x256xf32>
    %c1_118 = arith.constant 1 : index
    %c0_119 = arith.constant 0 : index
    %153 = vector.load %arg2[%c1_118, %c0_119] : memref<9x256xf32, #tpu.memory_space<vmem>>, vector<1x256xf32>
    %154 = vector.broadcast %153 : vector<1x256xf32> to vector<64x256xf32>
    %155 = arith.mulf %152, %154 : vector<64x256xf32>
    %c1_120 = arith.constant 1 : index
    %c0_121 = arith.constant 0 : index
    %c0_122 = arith.constant 0 : index
    %156 = vector.load %arg7[%c1_120, %c0_121, %c0_122] : memref<9x32x64xf32, #tpu.memory_space<vmem>>, vector<1x32x64xf32>
    %157 = vector.shape_cast %156 : vector<1x32x64xf32> to vector<32x64xf32>
    %cst_123 = arith.constant dense<0.000000e+00> : vector<32x256xf32>
    %158 = tpu.matmul %157, %155, %cst_123 {dimension_numbers = #tpu.dot_dimension_numbers<[1], [0], [0], [1], [0, 0, 1, 1], [], []>} : vector<32x64xf32>, vector<64x256xf32>, vector<32x256xf32> -> vector<32x256xf32>
    %159 = arith.addf %151, %158 : vector<32x256xf32>
    %c15_i32_124 = arith.constant 15 : i32
    %160 = tpu.dynamic_rotate %144 by %c15_i32_124 dim 1 : vector<64x256xf32>, i32 -> vector<64x256xf32>
    %c2_125 = arith.constant 2 : index
    %c0_126 = arith.constant 0 : index
    %161 = vector.load %arg2[%c2_125, %c0_126] : memref<9x256xf32, #tpu.memory_space<vmem>>, vector<1x256xf32>
    %162 = vector.broadcast %161 : vector<1x256xf32> to vector<64x256xf32>
    %163 = arith.mulf %160, %162 : vector<64x256xf32>
    %c2_127 = arith.constant 2 : index
    %c0_128 = arith.constant 0 : index
    %c0_129 = arith.constant 0 : index
    %164 = vector.load %arg7[%c2_127, %c0_128, %c0_129] : memref<9x32x64xf32, #tpu.memory_space<vmem>>, vector<1x32x64xf32>
    %165 = vector.shape_cast %164 : vector<1x32x64xf32> to vector<32x64xf32>
    %cst_130 = arith.constant dense<0.000000e+00> : vector<32x256xf32>
    %166 = tpu.matmul %165, %163, %cst_130 {dimension_numbers = #tpu.dot_dimension_numbers<[1], [0], [0], [1], [0, 0, 1, 1], [], []>} : vector<32x64xf32>, vector<64x256xf32>, vector<32x256xf32> -> vector<32x256xf32>
    %167 = arith.addf %159, %166 : vector<32x256xf32>
    %c1_i32_131 = arith.constant 1 : i32
    %168 = tpu.dynamic_rotate %144 by %c1_i32_131 dim 1 : vector<64x256xf32>, i32 -> vector<64x256xf32>
    %c3_132 = arith.constant 3 : index
    %c0_133 = arith.constant 0 : index
    %169 = vector.load %arg2[%c3_132, %c0_133] : memref<9x256xf32, #tpu.memory_space<vmem>>, vector<1x256xf32>
    %170 = vector.broadcast %169 : vector<1x256xf32> to vector<64x256xf32>
    %171 = arith.mulf %168, %170 : vector<64x256xf32>
    %c3_134 = arith.constant 3 : index
    %c0_135 = arith.constant 0 : index
    %c0_136 = arith.constant 0 : index
    %172 = vector.load %arg7[%c3_134, %c0_135, %c0_136] : memref<9x32x64xf32, #tpu.memory_space<vmem>>, vector<1x32x64xf32>
    %173 = vector.shape_cast %172 : vector<1x32x64xf32> to vector<32x64xf32>
    %cst_137 = arith.constant dense<0.000000e+00> : vector<32x256xf32>
    %174 = tpu.matmul %173, %171, %cst_137 {dimension_numbers = #tpu.dot_dimension_numbers<[1], [0], [0], [1], [0, 0, 1, 1], [], []>} : vector<32x64xf32>, vector<64x256xf32>, vector<32x256xf32> -> vector<32x256xf32>
    %175 = arith.addf %167, %174 : vector<32x256xf32>
    %c4_138 = arith.constant 4 : index
    %c0_139 = arith.constant 0 : index
    %c0_140 = arith.constant 0 : index
    %176 = vector.load %arg7[%c4_138, %c0_139, %c0_140] : memref<9x32x64xf32, #tpu.memory_space<vmem>>, vector<1x32x64xf32>
    %177 = vector.shape_cast %176 : vector<1x32x64xf32> to vector<32x64xf32>
    %cst_141 = arith.constant dense<0.000000e+00> : vector<32x256xf32>
    %178 = tpu.matmul %177, %144, %cst_141 {dimension_numbers = #tpu.dot_dimension_numbers<[1], [0], [0], [1], [0, 0, 1, 1], [], []>} : vector<32x64xf32>, vector<64x256xf32>, vector<32x256xf32> -> vector<32x256xf32>
    %179 = arith.addf %175, %178 : vector<32x256xf32>
    %c255_i32_142 = arith.constant 255 : i32
    %180 = tpu.dynamic_rotate %144 by %c255_i32_142 dim 1 : vector<64x256xf32>, i32 -> vector<64x256xf32>
    %c5_143 = arith.constant 5 : index
    %c0_144 = arith.constant 0 : index
    %181 = vector.load %arg2[%c5_143, %c0_144] : memref<9x256xf32, #tpu.memory_space<vmem>>, vector<1x256xf32>
    %182 = vector.broadcast %181 : vector<1x256xf32> to vector<64x256xf32>
    %183 = arith.mulf %180, %182 : vector<64x256xf32>
    %c5_145 = arith.constant 5 : index
    %c0_146 = arith.constant 0 : index
    %c0_147 = arith.constant 0 : index
    %184 = vector.load %arg7[%c5_145, %c0_146, %c0_147] : memref<9x32x64xf32, #tpu.memory_space<vmem>>, vector<1x32x64xf32>
    %185 = vector.shape_cast %184 : vector<1x32x64xf32> to vector<32x64xf32>
    %cst_148 = arith.constant dense<0.000000e+00> : vector<32x256xf32>
    %186 = tpu.matmul %185, %183, %cst_148 {dimension_numbers = #tpu.dot_dimension_numbers<[1], [0], [0], [1], [0, 0, 1, 1], [], []>} : vector<32x64xf32>, vector<64x256xf32>, vector<32x256xf32> -> vector<32x256xf32>
    %187 = arith.addf %179, %186 : vector<32x256xf32>
    %c241_i32_149 = arith.constant 241 : i32
    %188 = tpu.dynamic_rotate %144 by %c241_i32_149 dim 1 : vector<64x256xf32>, i32 -> vector<64x256xf32>
    %c6_150 = arith.constant 6 : index
    %c0_151 = arith.constant 0 : index
    %189 = vector.load %arg2[%c6_150, %c0_151] : memref<9x256xf32, #tpu.memory_space<vmem>>, vector<1x256xf32>
    %190 = vector.broadcast %189 : vector<1x256xf32> to vector<64x256xf32>
    %191 = arith.mulf %188, %190 : vector<64x256xf32>
    %c6_152 = arith.constant 6 : index
    %c0_153 = arith.constant 0 : index
    %c0_154 = arith.constant 0 : index
    %192 = vector.load %arg7[%c6_152, %c0_153, %c0_154] : memref<9x32x64xf32, #tpu.memory_space<vmem>>, vector<1x32x64xf32>
    %193 = vector.shape_cast %192 : vector<1x32x64xf32> to vector<32x64xf32>
    %cst_155 = arith.constant dense<0.000000e+00> : vector<32x256xf32>
    %194 = tpu.matmul %193, %191, %cst_155 {dimension_numbers = #tpu.dot_dimension_numbers<[1], [0], [0], [1], [0, 0, 1, 1], [], []>} : vector<32x64xf32>, vector<64x256xf32>, vector<32x256xf32> -> vector<32x256xf32>
    %195 = arith.addf %187, %194 : vector<32x256xf32>
    %c240_i32_156 = arith.constant 240 : i32
    %196 = tpu.dynamic_rotate %144 by %c240_i32_156 dim 1 : vector<64x256xf32>, i32 -> vector<64x256xf32>
    %c7_157 = arith.constant 7 : index
    %c0_158 = arith.constant 0 : index
    %197 = vector.load %arg2[%c7_157, %c0_158] : memref<9x256xf32, #tpu.memory_space<vmem>>, vector<1x256xf32>
    %198 = vector.broadcast %197 : vector<1x256xf32> to vector<64x256xf32>
    %199 = arith.mulf %196, %198 : vector<64x256xf32>
    %c7_159 = arith.constant 7 : index
    %c0_160 = arith.constant 0 : index
    %c0_161 = arith.constant 0 : index
    %200 = vector.load %arg7[%c7_159, %c0_160, %c0_161] : memref<9x32x64xf32, #tpu.memory_space<vmem>>, vector<1x32x64xf32>
    %201 = vector.shape_cast %200 : vector<1x32x64xf32> to vector<32x64xf32>
    %cst_162 = arith.constant dense<0.000000e+00> : vector<32x256xf32>
    %202 = tpu.matmul %201, %199, %cst_162 {dimension_numbers = #tpu.dot_dimension_numbers<[1], [0], [0], [1], [0, 0, 1, 1], [], []>} : vector<32x64xf32>, vector<64x256xf32>, vector<32x256xf32> -> vector<32x256xf32>
    %203 = arith.addf %195, %202 : vector<32x256xf32>
    %c239_i32_163 = arith.constant 239 : i32
    %204 = tpu.dynamic_rotate %144 by %c239_i32_163 dim 1 : vector<64x256xf32>, i32 -> vector<64x256xf32>
    %c8_164 = arith.constant 8 : index
    %c0_165 = arith.constant 0 : index
    %205 = vector.load %arg2[%c8_164, %c0_165] : memref<9x256xf32, #tpu.memory_space<vmem>>, vector<1x256xf32>
    %206 = vector.broadcast %205 : vector<1x256xf32> to vector<64x256xf32>
    %207 = arith.mulf %204, %206 : vector<64x256xf32>
    %c8_166 = arith.constant 8 : index
    %c0_167 = arith.constant 0 : index
    %c0_168 = arith.constant 0 : index
    %208 = vector.load %arg7[%c8_166, %c0_167, %c0_168] : memref<9x32x64xf32, #tpu.memory_space<vmem>>, vector<1x32x64xf32>
    %209 = vector.shape_cast %208 : vector<1x32x64xf32> to vector<32x64xf32>
    %cst_169 = arith.constant dense<0.000000e+00> : vector<32x256xf32>
    %210 = tpu.matmul %209, %207, %cst_169 {dimension_numbers = #tpu.dot_dimension_numbers<[1], [0], [0], [1], [0, 0, 1, 1], [], []>} : vector<32x64xf32>, vector<64x256xf32>, vector<32x256xf32> -> vector<32x256xf32>
    %211 = arith.addf %203, %210 : vector<32x256xf32>
    %c0_170 = arith.constant 0 : index
    %c0_171 = arith.constant 0 : index
    %212 = vector.load %arg8[%c0_170, %c0_171] : memref<32x1xf32, #tpu.memory_space<vmem>>, vector<32x1xf32>
    %213 = vector.broadcast %212 : vector<32x1xf32> to vector<32x256xf32>
    %214 = arith.addf %211, %213 : vector<32x256xf32>
    %cst_172 = arith.constant 0.000000e+00 : f32
    %215 = vector.broadcast %cst_172 : f32 to vector<32x256xf32>
    %216 = arith.maximumf %214, %215 : vector<32x256xf32>
    %c0_173 = arith.constant 0 : index
    %c0_174 = arith.constant 0 : index
    %217 = vector.load %arg9[%c0_173, %c0_174] : memref<32x1xf32, #tpu.memory_space<vmem>>, vector<32x1xf32>
    %218 = vector.broadcast %217 : vector<32x1xf32> to vector<32x256xf32>
    %219 = arith.mulf %216, %218 : vector<32x256xf32>
    %cst_175 = arith.constant dense<0.000000e+00> : vector<256xf32>
    %220 = vector.multi_reduction <add>, %219, %cst_175 [0] : vector<32x256xf32> to vector<256xf32>
    %221 = vector.shape_cast %220 : vector<256xf32> to vector<1x256xf32>
    %c0_176 = arith.constant 0 : index
    %c0_177 = arith.constant 0 : index
    %222 = vector.load %arg10[%c0_176, %c0_177] : memref<1x1xf32, #tpu.memory_space<vmem>>, vector<1x1xf32>
    %223 = vector.broadcast %222 : vector<1x1xf32> to vector<1x256xf32>
    %224 = arith.addf %221, %223 : vector<1x256xf32>
    %c0_178 = arith.constant 0 : index
    %c0_179 = arith.constant 0 : index
    %225 = vector.load %arg11[%c0_178, %c0_179] : memref<1x256xf32, #tpu.memory_space<vmem>>, vector<1x256xf32>
    tpu.vector_store %arg11[%c0_178, %c0_179], %224 {strides = array<i32>} : memref<1x256xf32, #tpu.memory_space<vmem>>, vector<1x256xf32>,
    return
  }
  func.func @transform_0(%arg0: i32) -> (i32, i32) {
    %c0_i32 = arith.constant 0 : i32
    %c0_i32_0 = arith.constant 0 : i32
    return %c0_i32, %arg0 : i32, i32
  }
  func.func @transform_1(%arg0: i32) -> (i32, i32) {
    %c0_i32 = arith.constant 0 : i32
    %c0_i32_0 = arith.constant 0 : i32
    %c0_i32_1 = arith.constant 0 : i32
    return %c0_i32, %c0_i32_0 : i32, i32
  }
  func.func @transform_2(%arg0: i32) -> (i32, i32, i32) {
    %c0_i32 = arith.constant 0 : i32
    %c0_i32_0 = arith.constant 0 : i32
    %c0_i32_1 = arith.constant 0 : i32
    %c0_i32_2 = arith.constant 0 : i32
    return %c0_i32, %c0_i32_0, %c0_i32_1 : i32, i32, i32
  }
  func.func @transform_3(%arg0: i32) -> (i32, i32) {
    %c0_i32 = arith.constant 0 : i32
    %c0_i32_0 = arith.constant 0 : i32
    %c0_i32_1 = arith.constant 0 : i32
    return %c0_i32, %c0_i32_0 : i32, i32
  }
  func.func @transform_4(%arg0: i32) -> (i32, i32, i32) {
    %c0_i32 = arith.constant 0 : i32
    %c0_i32_0 = arith.constant 0 : i32
    %c0_i32_1 = arith.constant 0 : i32
    %c0_i32_2 = arith.constant 0 : i32
    return %c0_i32, %c0_i32_0, %c0_i32_1 : i32, i32, i32
  }
  func.func @transform_5(%arg0: i32) -> (i32, i32) {
    %c0_i32 = arith.constant 0 : i32
    %c0_i32_0 = arith.constant 0 : i32
    %c0_i32_1 = arith.constant 0 : i32
    return %c0_i32, %c0_i32_0 : i32, i32
  }
  func.func @transform_6(%arg0: i32) -> (i32, i32, i32) {
    %c0_i32 = arith.constant 0 : i32
    %c0_i32_0 = arith.constant 0 : i32
    %c0_i32_1 = arith.constant 0 : i32
    %c0_i32_2 = arith.constant 0 : i32
    return %c0_i32, %c0_i32_0, %c0_i32_1 : i32, i32, i32
  }
  func.func @transform_7(%arg0: i32) -> (i32, i32) {
    %c0_i32 = arith.constant 0 : i32
    %c0_i32_0 = arith.constant 0 : i32
    %c0_i32_1 = arith.constant 0 : i32
    return %c0_i32, %c0_i32_0 : i32, i32
  }
  func.func @transform_8(%arg0: i32) -> (i32, i32) {
    %c0_i32 = arith.constant 0 : i32
    %c0_i32_0 = arith.constant 0 : i32
    %c0_i32_1 = arith.constant 0 : i32
    return %c0_i32, %c0_i32_0 : i32, i32
  }
  func.func @transform_9(%arg0: i32) -> (i32, i32) {
    %c0_i32 = arith.constant 0 : i32
    %c0_i32_0 = arith.constant 0 : i32
    %c0_i32_1 = arith.constant 0 : i32
    return %c0_i32, %c0_i32_0 : i32, i32
  }
  func.func @transform_10(%arg0: i32) -> (i32, i32) {
    %c0_i32 = arith.constant 0 : i32
    %c0_i32_0 = arith.constant 0 : i32
    return %c0_i32, %arg0 : i32, i32
  }
}

</mosaic_0001>

<llo_original>
// kernel: mini_unet_forward.1
$region0: #{mini_unet_forward.1}
  #allocation0 [shape = 'u32[]', space=smem, size = 0x4, offset = 0x4, fixed_abs, tag = 'smem constant byte address 0x4 - core index']
  #allocation1 [shape = 'u32[144,128]{1,0:T(1,128)}', space=vmem, size = 0x12000, scoped, tag = 'internal scratch']
  #allocation2 [shape = 'f32[1,1]{1,0:T(1,128)S(1)}', space=vmem, size = 0x200, scoped, tag = 'scoped memory for mini_unet_forward.1']
  %s0 = inlined_call_operand.vmem [shape: f32[8,512], index: 0, kind: input, shape index: {}]
  %s1 = inlined_call_operand.vmem [shape: f32[9,256], index: 1, kind: input, shape index: {}]
  %s2 = inlined_call_operand.vmem [shape: f32[9,32,8], index: 2, kind: input, shape index: {}]
  %s3 = inlined_call_operand.vmem [shape: f32[32,1], index: 3, kind: input, shape index: {}]
  %s4 = inlined_call_operand.vmem [shape: f32[9,64,32], index: 4, kind: input, shape index: {}]
  %s5 = inlined_call_operand.vmem [shape: f32[64,1], index: 5, kind: input, shape index: {}]
  %s6 = inlined_call_operand.vmem [shape: f32[9,32,64], index: 6, kind: input, shape index: {}]
  %s7 = inlined_call_operand.vmem [shape: f32[32,1], index: 7, kind: input, shape index: {}]
  %s8 = inlined_call_operand.vmem [shape: f32[32,1], index: 8, kind: input, shape index: {}]
  %s9 = inlined_call_operand.<no memory space> [shape: f32[1,1], index: 9, kind: input, shape index: {}]
  %s10 = inlined_call_operand.vmem [shape: f32[1,512], index: 10, kind: output, shape index: {}]
  %s11 = sld [smem:[#allocation0]]
  $region73: #{mini_unet_forward.1} parent=0
    _
  %s13 = ssub.s32 1, %s11
  %s14 = scalar_select 0, %s13, %s11
  %v15 = vstv %s9
  %16 = vst [vmem:[#allocation2] sm:$0x1] %v15
  loop: start=0, step=1, limit=4
  $region2: #{mini_unet_forward.1} parent=0 // loop_pre_header
    _
  $region3: #{mini_unet_forward.1} parent=0 // loop_header
    %s18 = sphi 0, %s22
    %p19 = scmp.ge.s32.totalorder %s18, 4
    %s28 = sphi 0, %s30
    %s31 = sphi 0, %s28
    %s32 = sphi 0, %s31
    %s48 = sphi 0, %s32
    %s52 = sphi 0, %s52
    %s54 = sphi 0, %s52
    %s55 = sphi 0, %s54
    %s69 = sphi 0, %s55
    %s73 = sphi 0, %s73
    %s75 = sphi 0, %s73
    %s76 = sphi 0, %s75
    %s90 = sphi 0, %s76
    %s94 = sphi 0, %s94
    %s96 = sphi 0, %s94
    %s97 = sphi 0, %s96
    %s111 = sphi 0, %s97
    %s115 = sphi 0, %s115
    %s117 = sphi 0, %s115
    %s118 = sphi 0, %s117
    %s132 = sphi 0, %s118
    %s136 = sphi 0, %s136
    %s138 = sphi 0, %s136
    %s139 = sphi 0, %s138
    %s153 = sphi 0, %s139
    %s157 = sphi 0, %s157
    %s159 = sphi 0, %s157
    %s160 = sphi 0, %s159
    %s174 = sphi 0, %s160
    %s178 = sphi 0, %s178
    %s180 = sphi 0, %s178
    %s181 = sphi 0, %s180
    %s195 = sphi 0, %s181
    %s199 = sphi 0, %s199
    %s201 = sphi 0, %s199
    %s202 = sphi 0, %s201
    %s216 = sphi 0, %s202
    %s220 = sphi 0, %s220
    %s222 = sphi 0, %s220
    %s223 = sphi 0, %s222
    %s237 = sphi 0, %s223
    %s243 = sphi 0, %s245
    %s246 = sphi 0, %s243
    %s247 = sphi 0, %s246
    %s263 = sphi 0, %s247
  $region4: #{mini_unet_forward.1} parent=0 // loop_header_branch
    %21 = sbr.rel (%p19) target = $region8
  $region5: #{mini_unet_forward.1} parent=0 // loop_body
    %s23 = ssub.s32 %s18, 1
    %s24 = ssub.s32 %s18, 2
    %s25 = sadd.s32 %s18, 1
    %s26 = ssub.s32 %s18, %s25
    %p27 = scmp.eq.s32.totalorder %s26, 0
    %s29 = sadd.s32 %s28, 1
    %s30 = scalar_select %p27, %s28, %s29
    %p33 = pneg %p27
    %p34 = scmp.eq.s32.totalorder %s18, 1
    %p35 = por %p33, %p34
    %p36 = scmp.ne.s32.totalorder %s28, %s31
    %p37 = scmp.eq.s32.totalorder %s18, 0
    %p38 = por %p36, %p37
    %p39 = scmp.ne.s32.totalorder %s28, %s31
    %p40 = scmp.eq.s32.totalorder %s23, 1
    %p41 = por %p39, %p40
    %p42 = scmp.ne.s32.totalorder %s31, %s32
    %p43 = scmp.eq.s32.totalorder %s23, 0
    %p44 = por %p42, %p43
    %p45 = scmp.ne.s32.totalorder %s31, %s32
    %p46 = scmp.eq.s32.totalorder %s24, 1
    %p47 = por %p45, %p46
    %p49 = scmp.ne.s32.totalorder %s32, %s48
    %p50 = scmp.eq.s32.totalorder %s24, 0
    %p51 = por %p49, %p50
    %s53 = sadd.s32 %s52, 1
    %p56 = scmp.eq.s32.totalorder %s18, 1
    %p57 = scmp.ne.s32.totalorder %s52, %s54
    %p58 = scmp.eq.s32.totalorder %s18, 0
    %p59 = por %p57, %p58
    %p60 = scmp.ne.s32.totalorder %s52, %s54
    %p61 = scmp.eq.s32.totalorder %s23, 1
    %p62 = por %p60, %p61
    %p63 = scmp.ne.s32.totalorder %s54, %s55
    %p64 = scmp.eq.s32.totalorder %s23, 0
    %p65 = por %p63, %p64
    %p66 = scmp.ne.s32.totalorder %s54, %s55
    %p67 = scmp.eq.s32.totalorder %s24, 1
    %p68 = por %p66, %p67
    %p70 = scmp.ne.s32.totalorder %s55, %s69
    %p71 = scmp.eq.s32.totalorder %s24, 0
    %p72 = por %p70, %p71
    %s74 = sadd.s32 %s73, 1
    %p77 = scmp.eq.s32.totalorder %s18, 1
    %p78 = scmp.ne.s32.totalorder %s73, %s75
    %p79 = scmp.eq.s32.totalorder %s18, 0
    %p80 = por %p78, %p79
    %p81 = scmp.ne.s32.totalorder %s73, %s75
    %p82 = scmp.eq.s32.totalorder %s23, 1
    %p83 = por %p81, %p82
    %p84 = scmp.ne.s32.totalorder %s75, %s76
    %p85 = scmp.eq.s32.totalorder %s23, 0
    %p86 = por %p84, %p85
    %p87 = scmp.ne.s32.totalorder %s75, %s76
    %p88 = scmp.eq.s32.totalorder %s24, 1
    %p89 = por %p87, %p88
    %p91 = scmp.ne.s32.totalorder %s76, %s90
    %p92 = scmp.eq.s32.totalorder %s24, 0
    %p93 = por %p91, %p92
    %s95 = sadd.s32 %s94, 1
    %p98 = scmp.eq.s32.totalorder %s18, 1
    %p99 = scmp.ne.s32.totalorder %s94, %s96
    %p100 = scmp.eq.s32.totalorder %s18, 0
    %p101 = por %p99, %p100
    %p102 = scmp.ne.s32.totalorder %s94, %s96
    %p103 = scmp.eq.s32.totalorder %s23, 1
    %p104 = por %p102, %p103
    %p105 = scmp.ne.s32.totalorder %s96, %s97
    %p106 = scmp.eq.s32.totalorder %s23, 0
    %p107 = por %p105, %p106
    %p108 = scmp.ne.s32.totalorder %s96, %s97
    %p109 = scmp.eq.s32.totalorder %s24, 1
    %p110 = por %p108, %p109
    %p112 = scmp.ne.s32.totalorder %s97, %s111
    %p113 = scmp.eq.s32.totalorder %s24, 0
    %p114 = por %p112, %p113
    %s116 = sadd.s32 %s115, 1
    %p119 = scmp.eq.s32.totalorder %s18, 1
    %p120 = scmp.ne.s32.totalorder %s115, %s117
    %p121 = scmp.eq.s32.totalorder %s18, 0
    %p122 = por %p120, %p121
    %p123 = scmp.ne.s32.totalorder %s115, %s117
    %p124 = scmp.eq.s32.totalorder %s23, 1
    %p125 = por %p123, %p124
    %p126 = scmp.ne.s32.totalorder %s117, %s118
    %p127 = scmp.eq.s32.totalorder %s23, 0
    %p128 = por %p126, %p127
    %p129 = scmp.ne.s32.totalorder %s117, %s118
    %p130 = scmp.eq.s32.totalorder %s24, 1
    %p131 = por %p129, %p130
    %p133 = scmp.ne.s32.totalorder %s118, %s132
    %p134 = scmp.eq.s32.totalorder %s24, 0
    %p135 = por %p133, %p134
    %s137 = sadd.s32 %s136, 1
    %p140 = scmp.eq.s32.totalorder %s18, 1
    %p141 = scmp.ne.s32.totalorder %s136, %s138
    %p142 = scmp.eq.s32.totalorder %s18, 0
    %p143 = por %p141, %p142
    %p144 = scmp.ne.s32.totalorder %s136, %s138
    %p145 = scmp.eq.s32.totalorder %s23, 1
    %p146 = por %p144, %p145
    %p147 = scmp.ne.s32.totalorder %s138, %s139
    %p148 = scmp.eq.s32.totalorder %s23, 0
    %p149 = por %p147, %p148
    %p150 = scmp.ne.s32.totalorder %s138, %s139
    %p151 = scmp.eq.s32.totalorder %s24, 1
    %p152 = por %p150, %p151
    %p154 = scmp.ne.s32.totalorder %s139, %s153
    %p155 = scmp.eq.s32.totalorder %s24, 0
    %p156 = por %p154, %p155
    %s158 = sadd.s32 %s157, 1
    %p161 = scmp.eq.s32.totalorder %s18, 1
    %p162 = scmp.ne.s32.totalorder %s157, %s159
    %p163 = scmp.eq.s32.totalorder %s18, 0
    %p164 = por %p162, %p163
    %p165 = scmp.ne.s32.totalorder %s157, %s159
    %p166 = scmp.eq.s32.totalorder %s23, 1
    %p167 = por %p165, %p166
    %p168 = scmp.ne.s32.totalorder %s159, %s160
    %p169 = scmp.eq.s32.totalorder %s23, 0
    %p170 = por %p168, %p169
    %p171 = scmp.ne.s32.totalorder %s159, %s160
    %p172 = scmp.eq.s32.totalorder %s24, 1
    %p173 = por %p171, %p172
    %p175 = scmp.ne.s32.totalorder %s160, %s174
    %p176 = scmp.eq.s32.totalorder %s24, 0
    %p177 = por %p175, %p176
    %s179 = sadd.s32 %s178, 1
    %p182 = scmp.eq.s32.totalorder %s18, 1
    %p183 = scmp.ne.s32.totalorder %s178, %s180
    %p184 = scmp.eq.s32.totalorder %s18, 0
    %p185 = por %p183, %p184
    %p186 = scmp.ne.s32.totalorder %s178, %s180
    %p187 = scmp.eq.s32.totalorder %s23, 1
    %p188 = por %p186, %p187
    %p189 = scmp.ne.s32.totalorder %s180, %s181
    %p190 = scmp.eq.s32.totalorder %s23, 0
    %p191 = por %p189, %p190
    %p192 = scmp.ne.s32.totalorder %s180, %s181
    %p193 = scmp.eq.s32.totalorder %s24, 1
    %p194 = por %p192, %p193
    %p196 = scmp.ne.s32.totalorder %s181, %s195
    %p197 = scmp.eq.s32.totalorder %s24, 0
    %p198 = por %p196, %p197
    %s200 = sadd.s32 %s199, 1
    %p203 = scmp.eq.s32.totalorder %s18, 1
    %p204 = scmp.ne.s32.totalorder %s199, %s201
    %p205 = scmp.eq.s32.totalorder %s18, 0
    %p206 = por %p204, %p205
    %p207 = scmp.ne.s32.totalorder %s199, %s201
    %p208 = scmp.eq.s32.totalorder %s23, 1
    %p209 = por %p207, %p208
    %p210 = scmp.ne.s32.totalorder %s201, %s202
    %p211 = scmp.eq.s32.totalorder %s23, 0
    %p212 = por %p210, %p211
    %p213 = scmp.ne.s32.totalorder %s201, %s202
    %p214 = scmp.eq.s32.totalorder %s24, 1
    %p215 = por %p213, %p214
    %p217 = scmp.ne.s32.totalorder %s202, %s216
    %p218 = scmp.eq.s32.totalorder %s24, 0
    %p219 = por %p217, %p218
    %s221 = sadd.s32 %s220, 1
    %p224 = scmp.eq.s32.totalorder %s18, 1
    %p225 = scmp.ne.s32.totalorder %s220, %s222
    %p226 = scmp.eq.s32.totalorder %s18, 0
    %p227 = por %p225, %p226
    %p228 = scmp.ne.s32.totalorder %s220, %s222
    %p229 = scmp.eq.s32.totalorder %s23, 1
    %p230 = por %p228, %p229
    %p231 = scmp.ne.s32.totalorder %s222, %s223
    %p232 = scmp.eq.s32.totalorder %s23, 0
    %p233 = por %p231, %p232
    %p234 = scmp.ne.s32.totalorder %s222, %s223
    %p235 = scmp.eq.s32.totalorder %s24, 1
    %p236 = por %p234, %p235
    %p238 = scmp.ne.s32.totalorder %s223, %s237
    %p239 = scmp.eq.s32.totalorder %s24, 0
    %p240 = por %p238, %p239
    %s241 = ssub.s32 %s18, %s25
    %p242 = scmp.eq.s32.totalorder %s241, 0
    %s244 = sadd.s32 %s243, 1
    %s245 = scalar_select %p242, %s243, %s244
    %p248 = pneg %p242
    %p249 = scmp.eq.s32.totalorder %s18, 1
    %p250 = por %p248, %p249
    %p251 = scmp.ne.s32.totalorder %s243, %s246
    %p252 = scmp.eq.s32.totalorder %s18, 0
    %p253 = por %p251, %p252
    %p254 = scmp.ne.s32.totalorder %s243, %s246
    %p255 = scmp.eq.s32.totalorder %s23, 1
    %p256 = por %p254, %p255
    %p257 = scmp.ne.s32.totalorder %s246, %s247
    %p258 = scmp.eq.s32.totalorder %s23, 0
    %p259 = por %p257, %p258
    %p260 = scmp.ne.s32.totalorder %s246, %s247
    %p261 = scmp.eq.s32.totalorder %s24, 1
    %p262 = por %p260, %p261
    %p264 = scmp.ne.s32.totalorder %s247, %s263
    %p265 = scmp.eq.s32.totalorder %s24, 0
    %p266 = por %p264, %p265
    %p267 = scmp.le.s32.totalorder 1, %s18
    %p268 = scmp.lt.s32.totalorder %s18, 3
    %p269 = pnand %p267, %p268
    %p270 = pneg %p269
    // Predicated region
    $region9: #{mini_unet_forward.1} parent=5 // pred_check
      _
    $region10: #{mini_unet_forward.1} parent=5 // pred_check_branch
      %272 = sbr.rel (%p269) target = $region12
    $region11: #{mini_unet_forward.1} parent=5 // pred_region
      %s273 = ssub.s32 %s18, 1
      // Predicated region
      $region13: #{mini_unet_forward.1} parent=11 // pred_check
        %p274 = pneg %p65
      $region14: #{mini_unet_forward.1} parent=11 // pred_check_branch
        %276 = sbr.rel (%p274) target = $region16
      $region15: #{mini_unet_forward.1} parent=11 // pred_region
        _
      $region16: #{mini_unet_forward.1} parent=11 // pred_fallthru
        _
      // Predicated region
      $region17: #{mini_unet_forward.1} parent=11 // pred_check
        %p277 = pneg %p86
      $region18: #{mini_unet_forward.1} parent=11 // pred_check_branch
        %279 = sbr.rel (%p277) target = $region20
      $region19: #{mini_unet_forward.1} parent=11 // pred_region
        _
      $region20: #{mini_unet_forward.1} parent=11 // pred_fallthru
        _
      // Predicated region
      $region21: #{mini_unet_forward.1} parent=11 // pred_check
        %p280 = pneg %p107
      $region22: #{mini_unet_forward.1} parent=11 // pred_check_branch
        %282 = sbr.rel (%p280) target = $region24
      $region23: #{mini_unet_forward.1} parent=11 // pred_region
        _
      $region24: #{mini_unet_forward.1} parent=11 // pred_fallthru
        _
      // Predicated region
      $region25: #{mini_unet_forward.1} parent=11 // pred_check
        %p283 = pneg %p128
      $region26: #{mini_unet_forward.1} parent=11 // pred_check_branch
        %285 = sbr.rel (%p283) target = $region28
      $region27: #{mini_unet_forward.1} parent=11 // pred_region
        _
      $region28: #{mini_unet_forward.1} parent=11 // pred_fallthru
        _
      // Predicated region
      $region29: #{mini_unet_forward.1} parent=11 // pred_check
        %p286 = pneg %p149
      $region30: #{mini_unet_forward.1} parent=11 // pred_check_branch
        %288 = sbr.rel (%p286) target = $region32
      $region31: #{mini_unet_forward.1} parent=11 // pred_region
        _
      $region32: #{mini_unet_forward.1} parent=11 // pred_fallthru
        _
      // Predicated region
      $region33: #{mini_unet_forward.1} parent=11 // pred_check
        %p289 = pneg %p170
      $region34: #{mini_unet_forward.1} parent=11 // pred_check_branch
        %291 = sbr.rel (%p289) target = $region36
      $region35: #{mini_unet_forward.1} parent=11 // pred_region
        _
      $region36: #{mini_unet_forward.1} parent=11 // pred_fallthru
        _
      // Predicated region
      $region37: #{mini_unet_forward.1} parent=11 // pred_check
        %p292 = pneg %p191
      $region38: #{mini_unet_forward.1} parent=11 // pred_check_branch
        %294 = sbr.rel (%p292) target = $region40
      $region39: #{mini_unet_forward.1} parent=11 // pred_region
        _
      $region40: #{mini_unet_forward.1} parent=11 // pred_fallthru
        _
      // Predicated region
      $region41: #{mini_unet_forward.1} parent=11 // pred_check
        %p295 = pneg %p212
      $region42: #{mini_unet_forward.1} parent=11 // pred_check_branch
        %297 = sbr.rel (%p295) target = $region44
      $region43: #{mini_unet_forward.1} parent=11 // pred_region
        _
      $region44: #{mini_unet_forward.1} parent=11 // pred_fallthru
        _
      // Predicated region
      $region45: #{mini_unet_forward.1} parent=11 // pred_check
        %p298 = pneg %p233
      $region46: #{mini_unet_forward.1} parent=11 // pred_check_branch
        %300 = sbr.rel (%p298) target = $region48
      $region47: #{mini_unet_forward.1} parent=11 // pred_region
        _
      $region48: #{mini_unet_forward.1} parent=11 // pred_fallthru
        _
    $region12: #{mini_unet_forward.1} parent=5 // pred_fallthru
      _
    %p301 = scmp.lt.s32.totalorder %s18, 2
    // Predicated region
    $region49: #{mini_unet_forward.1} parent=5 // pred_check
      %p302 = pneg %p301
    $region50: #{mini_unet_forward.1} parent=5 // pred_check_branch
      %304 = sbr.rel (%p302) target = $region52
    $region51: #{mini_unet_forward.1} parent=5 // pred_region
      // Predicated region
      $region53: #{mini_unet_forward.1} parent=51 // pred_check
        %p305 = pneg %p38
      $region54: #{mini_unet_forward.1} parent=51 // pred_check_branch
        %307 = sbr.rel (%p305) target = $region56
      $region55: #{mini_unet_forward.1} parent=51 // pred_region
        %s308 = smul.u32 2, %s18
        %p309 = scmp.lt.s32.totalorder %s308, 3
        %s310 = scalar_select %p309, %s308, 3
        %s311 = smul.addr %s310, 8
        %s312 = scalar_lea.vmem %s0, %s311
        %s313 = smul.u32 2, %s18
      $region56: #{mini_unet_forward.1} parent=51 // pred_fallthru
        _
    $region52: #{mini_unet_forward.1} parent=5 // pred_fallthru
      _
    %p314 = scmp.le.s32.totalorder 1, %s18
    %p315 = scmp.lt.s32.totalorder %s18, 3
    %p316 = pnand %p314, %p315
    %p317 = pneg %p316
    // Predicated region
    $region57: #{mini_unet_forward.1} parent=5 // pred_check
      _
    $region58: #{mini_unet_forward.1} parent=5 // pred_check_branch
      %319 = sbr.rel (%p316) target = $region60
    $region59: #{mini_unet_forward.1} parent=5 // pred_region
      %s320 = ssub.s32 %s18, 1
      %s321 = smul.u32 2, %s23
      %p322 = scmp.lt.s32.totalorder %s321, 3
      %s323 = scalar_select %p322, %s321, 3
      %s324 = smul.addr %s323, 8
      %s325 = scalar_lea.vmem %s0, %s324
      %p326 = pneg %p44
      %p327 = pneg %p41
      %p328 = pneg %p65
      %p329 = pneg %p62
      %p330 = pneg %p86
      %p331 = pneg %p83
      %p332 = pneg %p107
      %p333 = pneg %p104
      %p334 = pneg %p128
      %p335 = pneg %p125
      %p336 = pneg %p149
      %p337 = pneg %p146
      %p338 = pneg %p170
      %p339 = pneg %p167
      %p340 = pneg %p191
      %p341 = pneg %p188
      %p342 = pneg %p212
      %p343 = pneg %p209
      %p344 = pneg %p233
      %p345 = pneg %p230
      %p346 = pneg %p259
      %p347 = pneg %p256
      %s348 = smul.u32 2, %s23
      %p349 = scmp.lt.s32.totalorder %s348, 3
      %s350 = scalar_select %p349, %s348, 3
      %s351 = scalar_lea.vmem %s10, %s350
      %s352 = smul.u32 2, %s23
      %p353 = scmp.lt.s32.totalorder %s352, 3
      %s354 = scalar_select %p353, %s352, 3
      %s355 = smul.addr %s354, 8
      %s356 = scalar_lea.vmem %s0, %s355
      %s357 = smul.u32 2, %s23
      %s358 = smul.u32 2, %s23
      %p359 = scmp.lt.s32.totalorder %s358, 3
      %s360 = scalar_select %p359, %s358, 3
      %s361 = scalar_lea.vmem %s10, %s360
      %s362 = smul.u32 2, %s23
      %v363 = vld [vmem:[%s356] sm:$0xff]
      %v364 = vld [vmem:[%s356 + $0x8] sm:$0xff]
      %365 = vrot.lane.b32.xlu0 %v363, 17
      %v366 = vpop.permute.xlu0 %365
      %367 = vrot.lane.b32.xlu0 %v364, 17
      %v368 = vpop.permute.xlu0 %367
      %v369 = vlaneseq
      %v370 = vand.u32 %v369, 127
      %vm371 = vcmp.lt.s32.totalorder %v370, 17
      %v372 = vsel %vm371, %v366, %v368
      %v373 = vsel %vm371, %v368, %v366
      %v374 = vld [vmem:[%s1] ss:$8 sm:$0x3]
      %v376 = vlaneseq
      %v377 = vshrl.u32 %v376, 7
      %v378 = vsub.s32 0, %v377
      %v379 = vrot.slane %v374, %v378
      %v380 = vlaneseq
      %v381 = vshrl.u32 %v380, 7
      %v382 = vsub.s32 1, %v381
      %v383 = vrot.slane %v374, %v382
      %v386 = vmul.f32 %v373, %v379
      %v387 = vmul.f32 %v372, %v383
      %v388 = vld [vmem:[%s2] sm:$0xff]
      %v389 = vld [vmem:[%s2 + $0x8] sm:$0xff]
      %v390 = vld [vmem:[%s2 + $0x10] sm:$0xff]
      %v391 = vld [vmem:[%s2 + $0x18] sm:$0xff]
      %392 = vrot.lane.b32.xlu0 %v363, 16
      %v393 = vpop.permute.xlu0 %392
      %394 = vrot.lane.b32.xlu0 %v364, 16
      %v395 = vpop.permute.xlu0 %394
      %vm396 = vcmp.lt.s32.totalorder %v370, 16
      %v397 = vsel %vm396, %v393, %v395
      %v398 = vsel %vm396, %v395, %v393
      %s399 = scalar_lea.vmem %s1, 1
      %v400 = vld [vmem:[%s399] ss:$8 sm:$0x3]
      %v402 = vlaneseq
      %v403 = vshrl.u32 %v402, 7
      %v404 = vsub.s32 0, %v403
      %v405 = vrot.slane %v400, %v404
      %v406 = vlaneseq
      %v407 = vshrl.u32 %v406, 7
      %v408 = vsub.s32 1, %v407
      %v409 = vrot.slane %v400, %v408
      %v412 = vmul.f32 %v398, %v405
      %v413 = vmul.f32 %v397, %v409
      %s414 = scalar_lea.vmem %s2, 32
      %v415 = vld [vmem:[%s414] sm:$0xff]
      %v416 = vld [vmem:[%s414 + $0x8] sm:$0xff]
      %v417 = vld [vmem:[%s414 + $0x10] sm:$0xff]
      %v418 = vld [vmem:[%s414 + $0x18] sm:$0xff]
      %vm419 = vcmask 64512
      %v421 = vsel %vm419, %v415, 0
      %v424 = vsel %vm419, %v416, 0
      %v427 = vsel %vm419, %v417, 0
      %v430 = vsel %vm419, %v418, 0
      %432 = vmatprep.subr.mxu0 %v413
      %433 = vmatpush1.msra.mxu0 %v412
      %434 = vmatprep.subr.mxu0 0.0
      %435 = vmatpush1.msra.mxu0 0.0
      %436 = vmatprep.subr.mxu0 0.0
      %437 = vmatpush1.msra.mxu0 0.0
      %438 = vmatprep.subr.mxu0 0.0
      %439 = vmatpush1.msra.mxu0 0.0
      %440 = vmatprep.subr.mxu0 0.0
      %441 = vmatpush1.msra.mxu0 0.0
      %442 = vmatprep.subr.mxu0 0.0
      %443 = vmatpush1.msra.mxu0 0.0
      %444 = vmatprep.subr.mxu0 0.0
      %445 = vmatpush1.msra.mxu0 0.0
      %446 = vmatprep.subr.mxu0 0.0
      %447 = vmatpush1.msra.mxu0 0.0
      %448 = vmatprep.subr.mxu0 0.0
      %449 = vmatpush1.msra.mxu0 0.0
      %450 = vmatprep.subr.mxu0 0.0
      %451 = vmatpush1.msra.mxu0 0.0
      %452 = vmatprep.subr.mxu0 0.0
      %453 = vmatpush1.msra.mxu0 0.0
      %454 = vmatprep.subr.mxu0 0.0
      %455 = vmatpush1.msra.mxu0 0.0
      %456 = vmatprep.subr.mxu0 0.0
      %457 = vmatpush1.msra.mxu0 0.0
      %458 = vmatprep.subr.mxu0 0.0
      %459 = vmatpush1.msra.mxu0 0.0
      %460 = vmatprep.subr.mxu0 0.0
      %461 = vmatpush1.msra.mxu0 0.0
      %462 = vmatprep.subr.mxu0 0.0
      %463 = vmatpush1.msra.mxu0 0.0
      %464 = vmatprep.subr.mxu0 0.0
      %465 = vmatpush1.msra.mxu0 0.0
      %466 = vmatprep.subr.mxu0 0.0
      %467 = vmatpush1.msra.mxu0 0.0
      %468 = vmatprep.subr.mxu0 0.0
      %469 = vmatpush1.msra.mxu0 0.0
      %470 = vmatprep.subr.mxu0 0.0
      %471 = vmatpush1.msra.mxu0 0.0
      %472 = vmatprep.subr.mxu0 0.0
      %473 = vmatpush1.msra.mxu0 0.0
      %474 = vmatprep.subr.mxu0 0.0
      %475 = vmatpush1.msra.mxu0 0.0
      %476 = vmatprep.subr.mxu0 0.0
      %477 = vmatpush1.msra.mxu0 0.0
      %478 = vmatprep.subr.mxu0 0.0
      %479 = vmatpush1.msra.mxu0 0.0
      %480 = vmatprep.subr.mxu0 0.0
      %481 = vmatpush1.msra.mxu0 0.0
      %482 = vmatprep.subr.mxu0 0.0
      %483 = vmatpush1.msra.mxu0 0.0
      %484 = vmatprep.subr.mxu0 0.0
      %485 = vmatpush1.msra.mxu0 0.0
      %486 = vmatprep.subr.mxu0 0.0
      %487 = vmatpush1.msra.mxu0 0.0
      %488 = vmatprep.subr.mxu0 0.0
      %489 = vmatpush1.msra.mxu0 0.0
      %490 = vmatprep.subr.mxu0 0.0
      %491 = vmatpush1.msra.mxu0 0.0
      %492 = vmatprep.subr.mxu0 0.0
      %493 = vmatpush1.msra.mxu0 0.0
      %494 = vmatprep.subr.mxu0 0.0
      %495 = vmatpush1.msra.mxu0 0.0
      %496 = vmatprep.mubr.f32.mxu0 0.0
      %497 = vmatmul.mubr.f32.gmra.mrb[0].mxu0 %v421
      %v498 = vpop.f32.mrb[0].mxu0
      %v499 = vadd.f32 0.0, %v498
      %v500 = vpop.f32.mrb[0].mxu0
      %v501 = vadd.f32 0.0, %v500
      %502 = vmatprep.mubr.f32.mxu0 0.0
      %503 = vmatmul.mubr.f32.gmra.mrb[0].mxu0 %v424
      %v504 = vpop.f32.mrb[0].mxu0
      %v505 = vadd.f32 0.0, %v504
      %v506 = vpop.f32.mrb[0].mxu0
      %v507 = vadd.f32 0.0, %v506
      %508 = vmatprep.mubr.f32.mxu0 0.0
      %509 = vmatmul.mubr.f32.gmra.mrb[0].mxu0 %v427
      %v510 = vpop.f32.mrb[0].mxu0
      %v511 = vadd.f32 0.0, %v510
      %v512 = vpop.f32.mrb[0].mxu0
      %v513 = vadd.f32 0.0, %v512
      %514 = vmatprep.mubr.f32.mxu0 0.0
      %515 = vmatmul.mubr.f32.gmra.mrb[0].mxu0 %v430
      %v516 = vpop.f32.mrb[0].mxu0
      %v517 = vadd.f32 0.0, %v516
      %v518 = vpop.f32.mrb[0].mxu0
      %v519 = vadd.f32 0.0, %v518
      %520 = vdwg.mxu0
      %v522 = vsel %vm419, %v388, 0
      %v525 = vsel %vm419, %v389, 0
      %v528 = vsel %vm419, %v390, 0
      %v531 = vsel %vm419, %v391, 0
      %533 = vmatprep.subr.mxu0 %v387
      %534 = vmatpush1.msra.mxu0 %v386
      %535 = vmatprep.subr.mxu0 0.0
      %536 = vmatpush1.msra.mxu0 0.0
      %537 = vmatprep.subr.mxu0 0.0
      %538 = vmatpush1.msra.mxu0 0.0
      %539 = vmatprep.subr.mxu0 0.0
      %540 = vmatpush1.msra.mxu0 0.0
      %541 = vmatprep.subr.mxu0 0.0
      %542 = vmatpush1.msra.mxu0 0.0
      %543 = vmatprep.subr.mxu0 0.0
      %544 = vmatpush1.msra.mxu0 0.0
      %545 = vmatprep.subr.mxu0 0.0
      %546 = vmatpush1.msra.mxu0 0.0
      %547 = vmatprep.subr.mxu0 0.0
      %548 = vmatpush1.msra.mxu0 0.0
      %549 = vmatprep.subr.mxu0 0.0
      %550 = vmatpush1.msra.mxu0 0.0
      %551 = vmatprep.subr.mxu0 0.0
      %552 = vmatpush1.msra.mxu0 0.0
      %553 = vmatprep.subr.mxu0 0.0
      %554 = vmatpush1.msra.mxu0 0.0
      %555 = vmatprep.subr.mxu0 0.0
      %556 = vmatpush1.msra.mxu0 0.0
      %557 = vmatprep.subr.mxu0 0.0
      %558 = vmatpush1.msra.mxu0 0.0
      %559 = vmatprep.subr.mxu0 0.0
      %560 = vmatpush1.msra.mxu0 0.0
      %561 = vmatprep.subr.mxu0 0.0
      %562 = vmatpush1.msra.mxu0 0.0
      %563 = vmatprep.subr.mxu0 0.0
      %564 = vmatpush1.msra.mxu0 0.0
      %565 = vmatprep.subr.mxu0 0.0
      %566 = vmatpush1.msra.mxu0 0.0
      %567 = vmatprep.subr.mxu0 0.0
      %568 = vmatpush1.msra.mxu0 0.0
      %569 = vmatprep.subr.mxu0 0.0
      %570 = vmatpush1.msra.mxu0 0.0
      %571 = vmatprep.subr.mxu0 0.0
      %572 = vmatpush1.msra.mxu0 0.0
      %573 = vmatprep.subr.mxu0 0.0
      %574 = vmatpush1.msra.mxu0 0.0
      %575 = vmatprep.subr.mxu0 0.0
      %576 = vmatpush1.msra.mxu0 0.0
      %577 = vmatprep.subr.mxu0 0.0
      %578 = vmatpush1.msra.mxu0 0.0
      %579 = vmatprep.subr.mxu0 0.0
      %580 = vmatpush1.msra.mxu0 0.0
      %581 = vmatprep.subr.mxu0 0.0
      %582 = vmatpush1.msra.mxu0 0.0
      %583 = vmatprep.subr.mxu0 0.0
      %584 = vmatpush1.msra.mxu0 0.0
      %585 = vmatprep.subr.mxu0 0.0
      %586 = vmatpush1.msra.mxu0 0.0
      %587 = vmatprep.subr.mxu0 0.0
      %588 = vmatpush1.msra.mxu0 0.0
      %589 = vmatprep.subr.mxu0 0.0
      %590 = vmatpush1.msra.mxu0 0.0
      %591 = vmatprep.subr.mxu0 0.0
      %592 = vmatpush1.msra.mxu0 0.0
      %593 = vmatprep.subr.mxu0 0.0
      %594 = vmatpush1.msra.mxu0 0.0
      %595 = vmatprep.subr.mxu0 0.0
      %596 = vmatpush1.msra.mxu0 0.0
      %597 = vmatprep.mubr.f32.mxu0 0.0
      %598 = vmatmul.mubr.f32.gmra.mrb[0].mxu0 %v522
      %v599 = vpop.f32.mrb[0].mxu0
      %v600 = vadd.f32 %v499, %v599
      %v601 = vpop.f32.mrb[0].mxu0
      %v602 = vadd.f32 %v501, %v601
      %603 = vmatprep.mubr.f32.mxu0 0.0
      %604 = vmatmul.mubr.f32.gmra.mrb[0].mxu0 %v525
      %v605 = vpop.f32.mrb[0].mxu0
      %v606 = vadd.f32 %v505, %v605
      %v607 = vpop.f32.mrb[0].mxu0
      %v608 = vadd.f32 %v507, %v607
      %609 = vmatprep.mubr.f32.mxu0 0.0
      %610 = vmatmul.mubr.f32.gmra.mrb[0].mxu0 %v528
      %v611 = vpop.f32.mrb[0].mxu0
      %v612 = vadd.f32 %v511, %v611
      %v613 = vpop.f32.mrb[0].mxu0
      %v614 = vadd.f32 %v513, %v613
      %615 = vmatprep.mubr.f32.mxu0 0.0
      %616 = vmatmul.mubr.f32.gmra.mrb[0].mxu0 %v531
      %v617 = vpop.f32.mrb[0].mxu0
      %v618 = vadd.f32 %v517, %v617
      %v619 = vpop.f32.mrb[0].mxu0
      %v620 = vadd.f32 %v519, %v619
      %621 = vdwg.mxu0
      %622 = vrot.lane.b32.xlu0 %v363, 15
      %v623 = vpop.permute.xlu0 %622
      %624 = vrot.lane.b32.xlu0 %v364, 15
      %v625 = vpop.permute.xlu0 %624
      %vm626 = vcmp.lt.s32.totalorder %v370, 15
      %v627 = vsel %vm626, %v623, %v625
      %v628 = vsel %vm626, %v625, %v623
      %s629 = scalar_lea.vmem %s1, 2
      %v630 = vld [vmem:[%s629] ss:$8 sm:$0x3]
      %v632 = vlaneseq
      %v633 = vshrl.u32 %v632, 7
      %v634 = vsub.s32 0, %v633
      %v635 = vrot.slane %v630, %v634
      %v636 = vlaneseq
      %v637 = vshrl.u32 %v636, 7
      %v638 = vsub.s32 1, %v637
      %v639 = vrot.slane %v630, %v638
      %v642 = vmul.f32 %v628, %v635
      %v643 = vmul.f32 %v627, %v639
      %s644 = scalar_lea.vmem %s2, 64
      %v645 = vld [vmem:[%s644] sm:$0xff]
      %v646 = vld [vmem:[%s644 + $0x8] sm:$0xff]
      %v647 = vld [vmem:[%s644 + $0x10] sm:$0xff]
      %v648 = vld [vmem:[%s644 + $0x18] sm:$0xff]
      %v650 = vsel %vm419, %v645, 0
      %v653 = vsel %vm419, %v646, 0
      %v656 = vsel %vm419, %v647, 0
      %v659 = vsel %vm419, %v648, 0
      %661 = vmatprep.subr.mxu0 %v643
      %662 = vmatpush1.msra.mxu0 %v642
      %663 = vmatprep.subr.mxu0 0.0
      %664 = vmatpush1.msra.mxu0 0.0
      %665 = vmatprep.subr.mxu0 0.0
      %666 = vmatpush1.msra.mxu0 0.0
      %667 = vmatprep.subr.mxu0 0.0
      %668 = vmatpush1.msra.mxu0 0.0
      %669 = vmatprep.subr.mxu0 0.0
      %670 = vmatpush1.msra.mxu0 0.0
      %671 = vmatprep.subr.mxu0 0.0
      %672 = vmatpush1.msra.mxu0 0.0
      %673 = vmatprep.subr.mxu0 0.0
      %674 = vmatpush1.msra.mxu0 0.0
      %675 = vmatprep.subr.mxu0 0.0
      %676 = vmatpush1.msra.mxu0 0.0
      %677 = vmatprep.subr.mxu0 0.0
      %678 = vmatpush1.msra.mxu0 0.0
      %679 = vmatprep.subr.mxu0 0.0
      %680 = vmatpush1.msra.mxu0 0.0
      %681 = vmatprep.subr.mxu0 0.0
      %682 = vmatpush1.msra.mxu0 0.0
      %683 = vmatprep.subr.mxu0 0.0
      %684 = vmatpush1.msra.mxu0 0.0
      %685 = vmatprep.subr.mxu0 0.0
      %686 = vmatpush1.msra.mxu0 0.0
      %687 = vmatprep.subr.mxu0 0.0
      %688 = vmatpush1.msra.mxu0 0.0
      %689 = vmatprep.subr.mxu0 0.0
      %690 = vmatpush1.msra.mxu0 0.0
      %691 = vmatprep.subr.mxu0 0.0
      %692 = vmatpush1.msra.mxu0 0.0
      %693 = vmatprep.subr.mxu0 0.0
      %694 = vmatpush1.msra.mxu0 0.0
      %695 = vmatprep.subr.mxu0 0.0
      %696 = vmatpush1.msra.mxu0 0.0
      %697 = vmatprep.subr.mxu0 0.0
      %698 = vmatpush1.msra.mxu0 0.0
      %699 = vmatprep.subr.mxu0 0.0
      %700 = vmatpush1.msra.mxu0 0.0
      %701 = vmatprep.subr.mxu0 0.0
      %702 = vmatpush1.msra.mxu0 0.0
      %703 = vmatprep.subr.mxu0 0.0
      %704 = vmatpush1.msra.mxu0 0.0
      %705 = vmatprep.subr.mxu0 0.0
      %706 = vmatpush1.msra.mxu0 0.0
      %707 = vmatprep.subr.mxu0 0.0
      %708 = vmatpush1.msra.mxu0 0.0
      %709 = vmatprep.subr.mxu0 0.0
      %710 = vmatpush1.msra.mxu0 0.0
      %711 = vmatprep.subr.mxu0 0.0
      %712 = vmatpush1.msra.mxu0 0.0
      %713 = vmatprep.subr.mxu0 0.0
      %714 = vmatpush1.msra.mxu0 0.0
      %715 = vmatprep.subr.mxu0 0.0
      %716 = vmatpush1.msra.mxu0 0.0
      %717 = vmatprep.subr.mxu0 0.0
      %718 = vmatpush1.msra.mxu0 0.0
      %719 = vmatprep.subr.mxu0 0.0
      %720 = vmatpush1.msra.mxu0 0.0
      %721 = vmatprep.subr.mxu0 0.0
      %722 = vmatpush1.msra.mxu0 0.0
      %723 = vmatprep.subr.mxu0 0.0
      %724 = vmatpush1.msra.mxu0 0.0
      %725 = vmatprep.mubr.f32.mxu0 0.0
      %726 = vmatmul.mubr.f32.gmra.mrb[0].mxu0 %v650
      %v727 = vpop.f32.mrb[0].mxu0
      %v728 = vadd.f32 0.0, %v727
      %v729 = vpop.f32.mrb[0].mxu0
      %v730 = vadd.f32 0.0, %v729
      %731 = vmatprep.mubr.f32.mxu0 0.0
      %732 = vmatmul.mubr.f32.gmra.mrb[0].mxu0 %v653
      %v733 = vpop.f32.mrb[0].mxu0
      %v734 = vadd.f32 0.0, %v733
      %v735 = vpop.f32.mrb[0].mxu0
      %v736 = vadd.f32 0.0, %v735
      %737 = vmatprep.mubr.f32.mxu0 0.0
      %738 = vmatmul.mubr.f32.gmra.mrb[0].mxu0 %v656
      %v739 = vpop.f32.mrb[0].mxu0
      %v740 = vadd.f32 0.0, %v739
      %v741 = vpop.f32.mrb[0].mxu0
      %v742 = vadd.f32 0.0, %v741
      %743 = vmatprep.mubr.f32.mxu0 0.0
      %744 = vmatmul.mubr.f32.gmra.mrb[0].mxu0 %v659
      %v745 = vpop.f32.mrb[0].mxu0
      %v746 = vadd.f32 0.0, %v745
      %v747 = vpop.f32.mrb[0].mxu0
      %v748 = vadd.f32 0.0, %v747
      %749 = vdwg.mxu0
      %v750 = vadd.f32 %v600, %v728
      %v751 = vadd.f32 %v602, %v730
      %v752 = vadd.f32 %v606, %v734
      %v753 = vadd.f32 %v608, %v736
      %v754 = vadd.f32 %v612, %v740
      %v755 = vadd.f32 %v614, %v742
      %v756 = vadd.f32 %v618, %v746
      %v757 = vadd.f32 %v620, %v748
      %758 = vrot.lane.b32.xlu0 %v363, 1
      %v759 = vpop.permute.xlu0 %758
      %760 = vrot.lane.b32.xlu0 %v364, 1
      %v761 = vpop.permute.xlu0 %760
      %vm762 = vcmp.lt.s32.totalorder %v370, 1
      %v763 = vsel %vm762, %v759, %v761
      %v764 = vsel %vm762, %v761, %v759
      %s765 = scalar_lea.vmem %s1, 3
      %v766 = vld [vmem:[%s765] ss:$8 sm:$0x3]
      %v768 = vlaneseq
      %v769 = vshrl.u32 %v768, 7
      %v770 = vsub.s32 0, %v769
      %v771 = vrot.slane %v766, %v770
      %v772 = vlaneseq
      %v773 = vshrl.u32 %v772, 7
      %v774 = vsub.s32 1, %v773
      %v775 = vrot.slane %v766, %v774
      %v778 = vmul.f32 %v764, %v771
      %v779 = vmul.f32 %v763, %v775
      %s780 = scalar_lea.vmem %s2, 96
      %v781 = vld [vmem:[%s780] sm:$0xff]
      %v782 = vld [vmem:[%s780 + $0x8] sm:$0xff]
      %v783 = vld [vmem:[%s780 + $0x10] sm:$0xff]
      %v784 = vld [vmem:[%s780 + $0x18] sm:$0xff]
      %v786 = vsel %vm419, %v781, 0
      %v789 = vsel %vm419, %v782, 0
      %v792 = vsel %vm419, %v783, 0
      %v795 = vsel %vm419, %v784, 0
      %797 = vmatprep.subr.mxu0 %v779
      %798 = vmatpush1.msra.mxu0 %v778
      %799 = vmatprep.subr.mxu0 0.0
      %800 = vmatpush1.msra.mxu0 0.0
      %801 = vmatprep.subr.mxu0 0.0
      %802 = vmatpush1.msra.mxu0 0.0
      %803 = vmatprep.subr.mxu0 0.0
      %804 = vmatpush1.msra.mxu0 0.0
      %805 = vmatprep.subr.mxu0 0.0
      %806 = vmatpush1.msra.mxu0 0.0
      %807 = vmatprep.subr.mxu0 0.0
      %808 = vmatpush1.msra.mxu0 0.0
      %809 = vmatprep.subr.mxu0 0.0
      %810 = vmatpush1.msra.mxu0 0.0
      %811 = vmatprep.subr.mxu0 0.0
      %812 = vmatpush1.msra.mxu0 0.0
      %813 = vmatprep.subr.mxu0 0.0
      %814 = vmatpush1.msra.mxu0 0.0
      %815 = vmatprep.subr.mxu0 0.0
      %816 = vmatpush1.msra.mxu0 0.0
      %817 = vmatprep.subr.mxu0 0.0
      %818 = vmatpush1.msra.mxu0 0.0
      %819 = vmatprep.subr.mxu0 0.0
      %820 = vmatpush1.msra.mxu0 0.0
      %821 = vmatprep.subr.mxu0 0.0
      %822 = vmatpush1.msra.mxu0 0.0
      %823 = vmatprep.subr.mxu0 0.0
      %824 = vmatpush1.msra.mxu0 0.0
      %825 = vmatprep.subr.mxu0 0.0
      %826 = vmatpush1.msra.mxu0 0.0
      %827 = vmatprep.subr.mxu0 0.0
      %828 = vmatpush1.msra.mxu0 0.0
      %829 = vmatprep.subr.mxu0 0.0
      %830 = vmatpush1.msra.mxu0 0.0
      %831 = vmatprep.subr.mxu0 0.0
      %832 = vmatpush1.msra.mxu0 0.0
      %833 = vmatprep.subr.mxu0 0.0
      %834 = vmatpush1.msra.mxu0 0.0
      %835 = vmatprep.subr.mxu0 0.0
      %836 = vmatpush1.msra.mxu0 0.0
      %837 = vmatprep.subr.mxu0 0.0
      %838 = vmatpush1.msra.mxu0 0.0
      %839 = vmatprep.subr.mxu0 0.0
      %840 = vmatpush1.msra.mxu0 0.0
      %841 = vmatprep.subr.mxu0 0.0
      %842 = vmatpush1.msra.mxu0 0.0
      %843 = vmatprep.subr.mxu0 0.0
      %844 = vmatpush1.msra.mxu0 0.0
      %845 = vmatprep.subr.mxu0 0.0
      %846 = vmatpush1.msra.mxu0 0.0
      %847 = vmatprep.subr.mxu0 0.0
      %848 = vmatpush1.msra.mxu0 0.0
      %849 = vmatprep.subr.mxu0 0.0
      %850 = vmatpush1.msra.mxu0 0.0
      %851 = vmatprep.subr.mxu0 0.0
      %852 = vmatpush1.msra.mxu0 0.0
      %853 = vmatprep.subr.mxu0 0.0
      %854 = vmatpush1.msra.mxu0 0.0
      %855 = vmatprep.subr.mxu0 0.0
      %856 = vmatpush1.msra.mxu0 0.0
      %857 = vmatprep.subr.mxu0 0.0
      %858 = vmatpush1.msra.mxu0 0.0
      %859 = vmatprep.subr.mxu0 0.0
      %860 = vmatpush1.msra.mxu0 0.0
      %861 = vmatprep.mubr.f32.mxu0 0.0
      %862 = vmatmul.mubr.f32.gmra.mrb[0].mxu0 %v786
      %v863 = vpop.f32.mrb[0].mxu0
      %v864 = vadd.f32 0.0, %v863
      %v865 = vpop.f32.mrb[0].mxu0
      %v866 = vadd.f32 0.0, %v865
      %867 = vmatprep.mubr.f32.mxu0 0.0
      %868 = vmatmul.mubr.f32.gmra.mrb[0].mxu0 %v789
      %v869 = vpop.f32.mrb[0].mxu0
      %v870 = vadd.f32 0.0, %v869
      %v871 = vpop.f32.mrb[0].mxu0
      %v872 = vadd.f32 0.0, %v871
      %873 = vmatprep.mubr.f32.mxu0 0.0
      %874 = vmatmul.mubr.f32.gmra.mrb[0].mxu0 %v792
      %v875 = vpop.f32.mrb[0].mxu0
      %v876 = vadd.f32 0.0, %v875
      %v877 = vpop.f32.mrb[0].mxu0
      %v878 = vadd.f32 0.0, %v877
      %879 = vmatprep.mubr.f32.mxu0 0.0
      %880 = vmatmul.mubr.f32.gmra.mrb[0].mxu0 %v795
      %v881 = vpop.f32.mrb[0].mxu0
      %v882 = vadd.f32 0.0, %v881
      %v883 = vpop.f32.mrb[0].mxu0
      %v884 = vadd.f32 0.0, %v883
      %885 = vdwg.mxu0
      %v886 = vadd.f32 %v750, %v864
      %v887 = vadd.f32 %v751, %v866
      %v888 = vadd.f32 %v752, %v870
      %v889 = vadd.f32 %v753, %v872
      %v890 = vadd.f32 %v754, %v876
      %v891 = vadd.f32 %v755, %v878
      %v892 = vadd.f32 %v756, %v882
      %v893 = vadd.f32 %v757, %v884
      %s894 = scalar_lea.vmem %s2, 128
      %v895 = vld [vmem:[%s894] sm:$0xff]
      %v896 = vld [vmem:[%s894 + $0x8] sm:$0xff]
      %v897 = vld [vmem:[%s894 + $0x10] sm:$0xff]
      %v898 = vld [vmem:[%s894 + $0x18] sm:$0xff]
      %v900 = vsel %vm419, %v895, 0
      %v903 = vsel %vm419, %v896, 0
      %v906 = vsel %vm419, %v897, 0
      %v909 = vsel %vm419, %v898, 0
      %911 = vmatprep.subr.mxu0 %v364
      %912 = vmatpush1.msra.mxu0 %v363
      %913 = vmatprep.subr.mxu0 0.0
      %914 = vmatpush1.msra.mxu0 0.0
      %915 = vmatprep.subr.mxu0 0.0
      %916 = vmatpush1.msra.mxu0 0.0
      %917 = vmatprep.subr.mxu0 0.0
      %918 = vmatpush1.msra.mxu0 0.0
      %919 = vmatprep.subr.mxu0 0.0
      %920 = vmatpush1.msra.mxu0 0.0
      %921 = vmatprep.subr.mxu0 0.0
      %922 = vmatpush1.msra.mxu0 0.0
      %923 = vmatprep.subr.mxu0 0.0
      %924 = vmatpush1.msra.mxu0 0.0
      %925 = vmatprep.subr.mxu0 0.0
      %926 = vmatpush1.msra.mxu0 0.0
      %927 = vmatprep.subr.mxu0 0.0
      %928 = vmatpush1.msra.mxu0 0.0
      %929 = vmatprep.subr.mxu0 0.0
      %930 = vmatpush1.msra.mxu0 0.0
      %931 = vmatprep.subr.mxu0 0.0
      %932 = vmatpush1.msra.mxu0 0.0
      %933 = vmatprep.subr.mxu0 0.0
      %934 = vmatpush1.msra.mxu0 0.0
      %935 = vmatprep.subr.mxu0 0.0
      %936 = vmatpush1.msra.mxu0 0.0
      %937 = vmatprep.subr.mxu0 0.0
      %938 = vmatpush1.msra.mxu0 0.0
      %939 = vmatprep.subr.mxu0 0.0
      %940 = vmatpush1.msra.mxu0 0.0
      %941 = vmatprep.subr.mxu0 0.0
      %942 = vmatpush1.msra.mxu0 0.0
      %943 = vmatprep.subr.mxu0 0.0
      %944 = vmatpush1.msra.mxu0 0.0
      %945 = vmatprep.subr.mxu0 0.0
      %946 = vmatpush1.msra.mxu0 0.0
      %947 = vmatprep.subr.mxu0 0.0
      %948 = vmatpush1.msra.mxu0 0.0
      %949 = vmatprep.subr.mxu0 0.0
      %950 = vmatpush1.msra.mxu0 0.0
      %951 = vmatprep.subr.mxu0 0.0
      %952 = vmatpush1.msra.mxu0 0.0
      %953 = vmatprep.subr.mxu0 0.0
      %954 = vmatpush1.msra.mxu0 0.0
      %955 = vmatprep.subr.mxu0 0.0
      %956 = vmatpush1.msra.mxu0 0.0
      %957 = vmatprep.subr.mxu0 0.0
      %958 = vmatpush1.msra.mxu0 0.0
      %959 = vmatprep.subr.mxu0 0.0
      %960 = vmatpush1.msra.mxu0 0.0
      %961 = vmatprep.subr.mxu0 0.0
      %962 = vmatpush1.msra.mxu0 0.0
      %963 = vmatprep.subr.mxu0 0.0
      %964 = vmatpush1.msra.mxu0 0.0
      %965 = vmatprep.subr.mxu0 0.0
      %966 = vmatpush1.msra.mxu0 0.0
      %967 = vmatprep.subr.mxu0 0.0
      %968 = vmatpush1.msra.mxu0 0.0
      %969 = vmatprep.subr.mxu0 0.0
      %970 = vmatpush1.msra.mxu0 0.0
      %971 = vmatprep.subr.mxu0 0.0
      %972 = vmatpush1.msra.mxu0 0.0
      %973 = vmatprep.subr.mxu0 0.0
      %974 = vmatpush1.msra.mxu0 0.0
      %975 = vmatprep.mubr.f32.mxu0 0.0
      %976 = vmatmul.mubr.f32.gmra.mrb[0].mxu0 %v900
      %v977 = vpop.f32.mrb[0].mxu0
      %v978 = vadd.f32 0.0, %v977
      %v979 = vpop.f32.mrb[0].mxu0
      %v980 = vadd.f32 0.0, %v979
      %981 = vmatprep.mubr.f32.mxu0 0.0
      %982 = vmatmul.mubr.f32.gmra.mrb[0].mxu0 %v903
      %v983 = vpop.f32.mrb[0].mxu0
      %v984 = vadd.f32 0.0, %v983
      %v985 = vpop.f32.mrb[0].mxu0
      %v986 = vadd.f32 0.0, %v985
      %987 = vmatprep.mubr.f32.mxu0 0.0
      %988 = vmatmul.mubr.f32.gmra.mrb[0].mxu0 %v906
      %v989 = vpop.f32.mrb[0].mxu0
      %v990 = vadd.f32 0.0, %v989
      %v991 = vpop.f32.mrb[0].mxu0
      %v992 = vadd.f32 0.0, %v991
      %993 = vmatprep.mubr.f32.mxu0 0.0
      %994 = vmatmul.mubr.f32.gmra.mrb[0].mxu0 %v909
      %v995 = vpop.f32.mrb[0].mxu0
      %v996 = vadd.f32 0.0, %v995
      %v997 = vpop.f32.mrb[0].mxu0
      %v998 = vadd.f32 0.0, %v997
      %999 = vdwg.mxu0
      %v1000 = vadd.f32 %v886, %v978
      %v1001 = vadd.f32 %v887, %v980
      %v1002 = vadd.f32 %v888, %v984
      %v1003 = vadd.f32 %v889, %v986
      %v1004 = vadd.f32 %v890, %v990
      %v1005 = vadd.f32 %v891, %v992
      %v1006 = vadd.f32 %v892, %v996
      %v1007 = vadd.f32 %v893, %v998
      %1008 = vrot.lane.b32.xlu0 %v363, 127
      %v1009 = vpop.permute.xlu0 %1008
      %1010 = vrot.lane.b32.xlu0 %v364, 127
      %v1011 = vpop.permute.xlu0 %1010
      %vm1012 = vcmp.lt.s32.totalorder %v370, 127
      %v1013 = vsel %vm1012, %v1009, %v1011
      %v1014 = vsel %vm1012, %v1011, %v1009
      %s1015 = scalar_lea.vmem %s1, 5
      %v1016 = vld [vmem:[%s1015] ss:$8 sm:$0x3]
      %v1018 = vlaneseq
      %v1019 = vshrl.u32 %v1018, 7
      %v1020 = vsub.s32 0, %v1019
      %v1021 = vrot.slane %v1016, %v1020
      %v1022 = vlaneseq
      %v1023 = vshrl.u32 %v1022, 7
      %v1024 = vsub.s32 1, %v1023
      %v1025 = vrot.slane %v1016, %v1024
      %v1028 = vmul.f32 %v1013, %v1021
      %v1029 = vmul.f32 %v1014, %v1025
      %s1030 = scalar_lea.vmem %s2, 160
      %v1031 = vld [vmem:[%s1030] sm:$0xff]
      %v1032 = vld [vmem:[%s1030 + $0x8] sm:$0xff]
      %v1033 = vld [vmem:[%s1030 + $0x10] sm:$0xff]
      %v1034 = vld [vmem:[%s1030 + $0x18] sm:$0xff]
      %v1036 = vsel %vm419, %v1031, 0
      %v1039 = vsel %vm419, %v1032, 0
      %v1042 = vsel %vm419, %v1033, 0
      %v1045 = vsel %vm419, %v1034, 0
      %1047 = vmatprep.subr.mxu0 %v1029
      %1048 = vmatpush1.msra.mxu0 %v1028
      %1049 = vmatprep.subr.mxu0 0.0
      %1050 = vmatpush1.msra.mxu0 0.0
      %1051 = vmatprep.subr.mxu0 0.0
      %1052 = vmatpush1.msra.mxu0 0.0
      %1053 = vmatprep.subr.mxu0 0.0
      %1054 = vmatpush1.msra.mxu0 0.0
      %1055 = vmatprep.subr.mxu0 0.0
      %1056 = vmatpush1.msra.mxu0 0.0
      %1057 = vmatprep.subr.mxu0 0.0
      %1058 = vmatpush1.msra.mxu0 0.0
      %1059 = vmatprep.subr.mxu0 0.0
      %1060 = vmatpush1.msra.mxu0 0.0
      %1061 = vmatprep.subr.mxu0 0.0
      %1062 = vmatpush1.msra.mxu0 0.0
      %1063 = vmatprep.subr.mxu0 0.0
      %1064 = vmatpush1.msra.mxu0 0.0
      %1065 = vmatprep.subr.mxu0 0.0
      %1066 = vmatpush1.msra.mxu0 0.0
      %1067 = vmatprep.subr.mxu0 0.0
      %1068 = vmatpush1.msra.mxu0 0.0
      %1069 = vmatprep.subr.mxu0 0.0
      %1070 = vmatpush1.msra.mxu0 0.0
      %1071 = vmatprep.subr.mxu0 0.0
      %1072 = vmatpush1.msra.mxu0 0.0
      %1073 = vmatprep.subr.mxu0 0.0
      %1074 = vmatpush1.msra.mxu0 0.0
      %1075 = vmatprep.subr.mxu0 0.0
      %1076 = vmatpush1.msra.mxu0 0.0
      %1077 = vmatprep.subr.mxu0 0.0
      %1078 = vmatpush1.msra.mxu0 0.0
      %1079 = vmatprep.subr.mxu0 0.0
      %1080 = vmatpush1.msra.mxu0 0.0
      %1081 = vmatprep.subr.mxu0 0.0
      %1082 = vmatpush1.msra.mxu0 0.0
      %1083 = vmatprep.subr.mxu0 0.0
      %1084 = vmatpush1.msra.mxu0 0.0
      %1085 = vmatprep.subr.mxu0 0.0
      %1086 = vmatpush1.msra.mxu0 0.0
      %1087 = vmatprep.subr.mxu0 0.0
      %1088 = vmatpush1.msra.mxu0 0.0
      %1089 = vmatprep.subr.mxu0 0.0
      %1090 = vmatpush1.msra.mxu0 0.0
      %1091 = vmatprep.subr.mxu0 0.0
      %1092 = vmatpush1.msra.mxu0 0.0
      %1093 = vmatprep.subr.mxu0 0.0
      %1094 = vmatpush1.msra.mxu0 0.0
      %1095 = vmatprep.subr.mxu0 0.0
      %1096 = vmatpush1.msra.mxu0 0.0
      %1097 = vmatprep.subr.mxu0 0.0
      %1098 = vmatpush1.msra.mxu0 0.0
      %1099 = vmatprep.subr.mxu0 0.0
      %1100 = vmatpush1.msra.mxu0 0.0
      %1101 = vmatprep.subr.mxu0 0.0
      %1102 = vmatpush1.msra.mxu0 0.0
      %1103 = vmatprep.subr.mxu0 0.0
      %1104 = vmatpush1.msra.mxu0 0.0
      %1105 = vmatprep.subr.mxu0 0.0
      %1106 = vmatpush1.msra.mxu0 0.0
      %1107 = vmatprep.subr.mxu0 0.0
      %1108 = vmatpush1.msra.mxu0 0.0
      %1109 = vmatprep.subr.mxu0 0.0
      %1110 = vmatpush1.msra.mxu0 0.0
      %1111 = vmatprep.mubr.f32.mxu0 0.0
      %1112 = vmatmul.mubr.f32.gmra.mrb[0].mxu0 %v1036
      %v1113 = vpop.f32.mrb[0].mxu0
      %v1114 = vadd.f32 0.0, %v1113
      %v1115 = vpop.f32.mrb[0].mxu0
      %v1116 = vadd.f32 0.0, %v1115
      %1117 = vmatprep.mubr.f32.mxu0 0.0
      %1118 = vmatmul.mubr.f32.gmra.mrb[0].mxu0 %v1039
      %v1119 = vpop.f32.mrb[0].mxu0
      %v1120 = vadd.f32 0.0, %v1119
      %v1121 = vpop.f32.mrb[0].mxu0
      %v1122 = vadd.f32 0.0, %v1121
      %1123 = vmatprep.mubr.f32.mxu0 0.0
      %1124 = vmatmul.mubr.f32.gmra.mrb[0].mxu0 %v1042
      %v1125 = vpop.f32.mrb[0].mxu0
      %v1126 = vadd.f32 0.0, %v1125
      %v1127 = vpop.f32.mrb[0].mxu0
      %v1128 = vadd.f32 0.0, %v1127
      %1129 = vmatprep.mubr.f32.mxu0 0.0
      %1130 = vmatmul.mubr.f32.gmra.mrb[0].mxu0 %v1045
      %v1131 = vpop.f32.mrb[0].mxu0
      %v1132 = vadd.f32 0.0, %v1131
      %v1133 = vpop.f32.mrb[0].mxu0
      %v1134 = vadd.f32 0.0, %v1133
      %1135 = vdwg.mxu0
      %v1136 = vadd.f32 %v1000, %v1114
      %v1137 = vadd.f32 %v1001, %v1116
      %v1138 = vadd.f32 %v1002, %v1120
      %v1139 = vadd.f32 %v1003, %v1122
      %v1140 = vadd.f32 %v1004, %v1126
      %v1141 = vadd.f32 %v1005, %v1128
      %v1142 = vadd.f32 %v1006, %v1132
      %v1143 = vadd.f32 %v1007, %v1134
      %1144 = vrot.lane.b32.xlu0 %v363, 113
      %v1145 = vpop.permute.xlu0 %1144
      %1146 = vrot.lane.b32.xlu0 %v364, 113
      %v1147 = vpop.permute.xlu0 %1146
      %vm1148 = vcmp.lt.s32.totalorder %v370, 113
      %v1149 = vsel %vm1148, %v1145, %v1147
      %v1150 = vsel %vm1148, %v1147, %v1145
      %s1151 = scalar_lea.vmem %s1, 6
      %v1152 = vld [vmem:[%s1151] ss:$8 sm:$0x3]
      %v1154 = vlaneseq
      %v1155 = vshrl.u32 %v1154, 7
      %v1156 = vsub.s32 0, %v1155
      %v1157 = vrot.slane %v1152, %v1156
      %v1158 = vlaneseq
      %v1159 = vshrl.u32 %v1158, 7
      %v1160 = vsub.s32 1, %v1159
      %v1161 = vrot.slane %v1152, %v1160
      %v1164 = vmul.f32 %v1149, %v1157
      %v1165 = vmul.f32 %v1150, %v1161
      %s1166 = scalar_lea.vmem %s2, 192
      %v1167 = vld [vmem:[%s1166] sm:$0xff]
      %v1168 = vld [vmem:[%s1166 + $0x8] sm:$0xff]
      %v1169 = vld [vmem:[%s1166 + $0x10] sm:$0xff]
      %v1170 = vld [vmem:[%s1166 + $0x18] sm:$0xff]
      %v1172 = vsel %vm419, %v1167, 0
      %v1175 = vsel %vm419, %v1168, 0
      %v1178 = vsel %vm419, %v1169, 0
      %v1181 = vsel %vm419, %v1170, 0
      %1183 = vmatprep.subr.mxu0 %v1165
      %1184 = vmatpush1.msra.mxu0 %v1164
      %1185 = vmatprep.subr.mxu0 0.0
      %1186 = vmatpush1.msra.mxu0 0.0
      %1187 = vmatprep.subr.mxu0 0.0
      %1188 = vmatpush1.msra.mxu0 0.0
      %1189 = vmatprep.subr.mxu0 0.0
      %1190 = vmatpush1.msra.mxu0 0.0
      %1191 = vmatprep.subr.mxu0 0.0
      %1192 = vmatpush1.msra.mxu0 0.0
      %1193 = vmatprep.subr.mxu0 0.0
      %1194 = vmatpush1.msra.mxu0 0.0
      %1195 = vmatprep.subr.mxu0 0.0
      %1196 = vmatpush1.msra.mxu0 0.0
      %1197 = vmatprep.subr.mxu0 0.0
      %1198 = vmatpush1.msra.mxu0 0.0
      %1199 = vmatprep.subr.mxu0 0.0
      %1200 = vmatpush1.msra.mxu0 0.0
      %1201 = vmatprep.subr.mxu0 0.0
      %1202 = vmatpush1.msra.mxu0 0.0
      %1203 = vmatprep.subr.mxu0 0.0
      %1204 = vmatpush1.msra.mxu0 0.0
      %1205 = vmatprep.subr.mxu0 0.0
      %1206 = vmatpush1.msra.mxu0 0.0
      %1207 = vmatprep.subr.mxu0 0.0
      %1208 = vmatpush1.msra.mxu0 0.0
      %1209 = vmatprep.subr.mxu0 0.0
      %1210 = vmatpush1.msra.mxu0 0.0
      %1211 = vmatprep.subr.mxu0 0.0
      %1212 = vmatpush1.msra.mxu0 0.0
      %1213 = vmatprep.subr.mxu0 0.0
      %1214 = vmatpush1.msra.mxu0 0.0
      %1215 = vmatprep.subr.mxu0 0.0
      %1216 = vmatpush1.msra.mxu0 0.0
      %1217 = vmatprep.subr.mxu0 0.0
      %1218 = vmatpush1.msra.mxu0 0.0
      %1219 = vmatprep.subr.mxu0 0.0
      %1220 = vmatpush1.msra.mxu0 0.0
      %1221 = vmatprep.subr.mxu0 0.0
      %1222 = vmatpush1.msra.mxu0 0.0
      %1223 = vmatprep.subr.mxu0 0.0
      %1224 = vmatpush1.msra.mxu0 0.0
      %1225 = vmatprep.subr.mxu0 0.0
      %1226 = vmatpush1.msra.mxu0 0.0
      %1227 = vmatprep.subr.mxu0 0.0
      %1228 = vmatpush1.msra.mxu0 0.0
      %1229 = vmatprep.subr.mxu0 0.0
      %1230 = vmatpush1.msra.mxu0 0.0
      %1231 = vmatprep.subr.mxu0 0.0
      %1232 = vmatpush1.msra.mxu0 0.0
      %1233 = vmatprep.subr.mxu0 0.0
      %1234 = vmatpush1.msra.mxu0 0.0
      %1235 = vmatprep.subr.mxu0 0.0
      %1236 = vmatpush1.msra.mxu0 0.0
      %1237 = vmatprep.subr.mxu0 0.0
      %1238 = vmatpush1.msra.mxu0 0.0
      %1239 = vmatprep.subr.mxu0 0.0
      %1240 = vmatpush1.msra.mxu0 0.0
      %1241 = vmatprep.subr.mxu0 0.0
      %1242 = vmatpush1.msra.mxu0 0.0
      %1243 = vmatprep.subr.mxu0 0.0
      %1244 = vmatpush1.msra.mxu0 0.0
      %1245 = vmatprep.subr.mxu0 0.0
      %1246 = vmatpush1.msra.mxu0 0.0
      %1247 = vmatprep.mubr.f32.mxu0 0.0
      %1248 = vmatmul.mubr.f32.gmra.mrb[0].mxu0 %v1172
      %v1249 = vpop.f32.mrb[0].mxu0
      %v1250 = vadd.f32 0.0, %v1249
      %v1251 = vpop.f32.mrb[0].mxu0
      %v1252 = vadd.f32 0.0, %v1251
      %1253 = vmatprep.mubr.f32.mxu0 0.0
      %1254 = vmatmul.mubr.f32.gmra.mrb[0].mxu0 %v1175
      %v1255 = vpop.f32.mrb[0].mxu0
      %v1256 = vadd.f32 0.0, %v1255
      %v1257 = vpop.f32.mrb[0].mxu0
      %v1258 = vadd.f32 0.0, %v1257
      %1259 = vmatprep.mubr.f32.mxu0 0.0
      %1260 = vmatmul.mubr.f32.gmra.mrb[0].mxu0 %v1178
      %v1261 = vpop.f32.mrb[0].mxu0
      %v1262 = vadd.f32 0.0, %v1261
      %v1263 = vpop.f32.mrb[0].mxu0
      %v1264 = vadd.f32 0.0, %v1263
      %1265 = vmatprep.mubr.f32.mxu0 0.0
      %1266 = vmatmul.mubr.f32.gmra.mrb[0].mxu0 %v1181
      %v1267 = vpop.f32.mrb[0].mxu0
      %v1268 = vadd.f32 0.0, %v1267
      %v1269 = vpop.f32.mrb[0].mxu0
      %v1270 = vadd.f32 0.0, %v1269
      %1271 = vdwg.mxu0
      %v1272 = vadd.f32 %v1136, %v1250
      %v1273 = vadd.f32 %v1137, %v1252
      %v1274 = vadd.f32 %v1138, %v1256
      %v1275 = vadd.f32 %v1139, %v1258
      %v1276 = vadd.f32 %v1140, %v1262
      %v1277 = vadd.f32 %v1141, %v1264
      %v1278 = vadd.f32 %v1142, %v1268
      %v1279 = vadd.f32 %v1143, %v1270
      %1280 = vrot.lane.b32.xlu0 %v363, 112
      %v1281 = vpop.permute.xlu0 %1280
      %1282 = vrot.lane.b32.xlu0 %v364, 112
      %v1283 = vpop.permute.xlu0 %1282
      %vm1284 = vcmp.lt.s32.totalorder %v370, 112
      %v1285 = vsel %vm1284, %v1281, %v1283
      %v1286 = vsel %vm1284, %v1283, %v1281
      %s1287 = scalar_lea.vmem %s1, 7
      %v1288 = vld [vmem:[%s1287] ss:$8 sm:$0x3]
      %v1290 = vlaneseq
      %v1291 = vshrl.u32 %v1290, 7
      %v1292 = vsub.s32 0, %v1291
      %v1293 = vrot.slane %v1288, %v1292
      %v1294 = vlaneseq
      %v1295 = vshrl.u32 %v1294, 7
      %v1296 = vsub.s32 1, %v1295
      %v1297 = vrot.slane %v1288, %v1296
      %v1300 = vmul.f32 %v1285, %v1293
      %v1301 = vmul.f32 %v1286, %v1297
      %s1302 = scalar_lea.vmem %s2, 224
      %v1303 = vld [vmem:[%s1302] sm:$0xff]
      %v1304 = vld [vmem:[%s1302 + $0x8] sm:$0xff]
      %v1305 = vld [vmem:[%s1302 + $0x10] sm:$0xff]
      %v1306 = vld [vmem:[%s1302 + $0x18] sm:$0xff]
      %v1308 = vsel %vm419, %v1303, 0
      %v1311 = vsel %vm419, %v1304, 0
      %v1314 = vsel %vm419, %v1305, 0
      %v1317 = vsel %vm419, %v1306, 0
      %1319 = vmatprep.subr.mxu0 %v1301
      %1320 = vmatpush1.msra.mxu0 %v1300
      %1321 = vmatprep.subr.mxu0 0.0
      %1322 = vmatpush1.msra.mxu0 0.0
      %1323 = vmatprep.subr.mxu0 0.0
      %1324 = vmatpush1.msra.mxu0 0.0
      %1325 = vmatprep.subr.mxu0 0.0
      %1326 = vmatpush1.msra.mxu0 0.0
      %1327 = vmatprep.subr.mxu0 0.0
      %1328 = vmatpush1.msra.mxu0 0.0
      %1329 = vmatprep.subr.mxu0 0.0
      %1330 = vmatpush1.msra.mxu0 0.0
      %1331 = vmatprep.subr.mxu0 0.0
      %1332 = vmatpush1.msra.mxu0 0.0
      %1333 = vmatprep.subr.mxu0 0.0
      %1334 = vmatpush1.msra.mxu0 0.0
      %1335 = vmatprep.subr.mxu0 0.0
      %1336 = vmatpush1.msra.mxu0 0.0
      %1337 = vmatprep.subr.mxu0 0.0
      %1338 = vmatpush1.msra.mxu0 0.0
      %1339 = vmatprep.subr.mxu0 0.0
      %1340 = vmatpush1.msra.mxu0 0.0
      %1341 = vmatprep.subr.mxu0 0.0
      %1342 = vmatpush1.msra.mxu0 0.0
      %1343 = vmatprep.subr.mxu0 0.0
      %1344 = vmatpush1.msra.mxu0 0.0
      %1345 = vmatprep.subr.mxu0 0.0
      %1346 = vmatpush1.msra.mxu0 0.0
      %1347 = vmatprep.subr.mxu0 0.0
      %1348 = vmatpush1.msra.mxu0 0.0
      %1349 = vmatprep.subr.mxu0 0.0
      %1350 = vmatpush1.msra.mxu0 0.0
      %1351 = vmatprep.subr.mxu0 0.0
      %1352 = vmatpush1.msra.mxu0 0.0
      %1353 = vmatprep.subr.mxu0 0.0
      %1354 = vmatpush1.msra.mxu0 0.0
      %1355 = vmatprep.subr.mxu0 0.0
      %1356 = vmatpush1.msra.mxu0 0.0
      %1357 = vmatprep.subr.mxu0 0.0
      %1358 = vmatpush1.msra.mxu0 0.0
      %1359 = vmatprep.subr.mxu0 0.0
      %1360 = vmatpush1.msra.mxu0 0.0
      %1361 = vmatprep.subr.mxu0 0.0
      %1362 = vmatpush1.msra.mxu0 0.0
      %1363 = vmatprep.subr.mxu0 0.0
      %1364 = vmatpush1.msra.mxu0 0.0
      %1365 = vmatprep.subr.mxu0 0.0
      %1366 = vmatpush1.msra.mxu0 0.0
      %1367 = vmatprep.subr.mxu0 0.0
      %1368 = vmatpush1.msra.mxu0 0.0
      %1369 = vmatprep.subr.mxu0 0.0
      %1370 = vmatpush1.msra.mxu0 0.0
      %1371 = vmatprep.subr.mxu0 0.0
      %1372 = vmatpush1.msra.mxu0 0.0
      %1373 = vmatprep.subr.mxu0 0.0
      %1374 = vmatpush1.msra.mxu0 0.0
      %1375 = vmatprep.subr.mxu0 0.0
      %1376 = vmatpush1.msra.mxu0 0.0
      %1377 = vmatprep.subr.mxu0 0.0
      %1378 = vmatpush1.msra.mxu0 0.0
      %1379 = vmatprep.subr.mxu0 0.0
      %1380 = vmatpush1.msra.mxu0 0.0
      %1381 = vmatprep.subr.mxu0 0.0
      %1382 = vmatpush1.msra.mxu0 0.0
      %1383 = vmatprep.mubr.f32.mxu0 0.0
      %1384 = vmatmul.mubr.f32.gmra.mrb[0].mxu0 %v1308
      %v1385 = vpop.f32.mrb[0].mxu0
      %v1386 = vadd.f32 0.0, %v1385
      %v1387 = vpop.f32.mrb[0].mxu0
      %v1388 = vadd.f32 0.0, %v1387
      %1389 = vmatprep.mubr.f32.mxu0 0.0
      %1390 = vmatmul.mubr.f32.gmra.mrb[0].mxu0 %v1311
      %v1391 = vpop.f32.mrb[0].mxu0
      %v1392 = vadd.f32 0.0, %v1391
      %v1393 = vpop.f32.mrb[0].mxu0
      %v1394 = vadd.f32 0.0, %v1393
      %1395 = vmatprep.mubr.f32.mxu0 0.0
      %1396 = vmatmul.mubr.f32.gmra.mrb[0].mxu0 %v1314
      %v1397 = vpop.f32.mrb[0].mxu0
      %v1398 = vadd.f32 0.0, %v1397
      %v1399 = vpop.f32.mrb[0].mxu0
      %v1400 = vadd.f32 0.0, %v1399
      %1401 = vmatprep.mubr.f32.mxu0 0.0
      %1402 = vmatmul.mubr.f32.gmra.mrb[0].mxu0 %v1317
      %v1403 = vpop.f32.mrb[0].mxu0
      %v1404 = vadd.f32 0.0, %v1403
      %v1405 = vpop.f32.mrb[0].mxu0
      %v1406 = vadd.f32 0.0, %v1405
      %1407 = vdwg.mxu0
      %v1408 = vadd.f32 %v1272, %v1386
      %v1409 = vadd.f32 %v1273, %v1388
      %v1410 = vadd.f32 %v1274, %v1392
      %v1411 = vadd.f32 %v1275, %v1394
      %v1412 = vadd.f32 %v1276, %v1398
      %v1413 = vadd.f32 %v1277, %v1400
      %v1414 = vadd.f32 %v1278, %v1404
      %v1415 = vadd.f32 %v1279, %v1406
      %1416 = vrot.lane.b32.xlu0 %v363, 111
      %v1417 = vpop.permute.xlu0 %1416
      %1418 = vrot.lane.b32.xlu0 %v364, 111
      %v1419 = vpop.permute.xlu0 %1418
      %vm1420 = vcmp.lt.s32.totalorder %v370, 111
      %v1421 = vsel %vm1420, %v1417, %v1419
      %v1422 = vsel %vm1420, %v1419, %v1417
      %s1423 = scalar_lea.vmem %s1, 16
      %v1424 = vld [vmem:[%s1423] ss:$8 sm:$0x3]
      %v1426 = vlaneseq
      %v1427 = vshrl.u32 %v1426, 7
      %v1428 = vsub.s32 0, %v1427
      %v1429 = vrot.slane %v1424, %v1428
      %v1430 = vlaneseq
      %v1431 = vshrl.u32 %v1430, 7
      %v1432 = vsub.s32 1, %v1431
      %v1433 = vrot.slane %v1424, %v1432
      %v1436 = vmul.f32 %v1421, %v1429
      %v1437 = vmul.f32 %v1422, %v1433
      %s1438 = scalar_lea.vmem %s2, 256
      %v1439 = vld [vmem:[%s1438] sm:$0xff]
      %v1440 = vld [vmem:[%s1438 + $0x8] sm:$0xff]
      %v1441 = vld [vmem:[%s1438 + $0x10] sm:$0xff]
      %v1442 = vld [vmem:[%s1438 + $0x18] sm:$0xff]
      %v1444 = vsel %vm419, %v1439, 0
      %v1447 = vsel %vm419, %v1440, 0
      %v1450 = vsel %vm419, %v1441, 0
      %v1453 = vsel %vm419, %v1442, 0
      %1455 = vmatprep.subr.mxu0 %v1437
      %1456 = vmatpush1.msra.mxu0 %v1436
      %1457 = vmatprep.subr.mxu0 0.0
      %1458 = vmatpush1.msra.mxu0 0.0
      %1459 = vmatprep.subr.mxu0 0.0
      %1460 = vmatpush1.msra.mxu0 0.0
      %1461 = vmatprep.subr.mxu0 0.0
      %1462 = vmatpush1.msra.mxu0 0.0
      %1463 = vmatprep.subr.mxu0 0.0
      %1464 = vmatpush1.msra.mxu0 0.0
      %1465 = vmatprep.subr.mxu0 0.0
      %1466 = vmatpush1.msra.mxu0 0.0
      %1467 = vmatprep.subr.mxu0 0.0
      %1468 = vmatpush1.msra.mxu0 0.0
      %1469 = vmatprep.subr.mxu0 0.0
      %1470 = vmatpush1.msra.mxu0 0.0
      %1471 = vmatprep.subr.mxu0 0.0
      %1472 = vmatpush1.msra.mxu0 0.0
      %1473 = vmatprep.subr.mxu0 0.0
      %1474 = vmatpush1.msra.mxu0 0.0
      %1475 = vmatprep.subr.mxu0 0.0
      %1476 = vmatpush1.msra.mxu0 0.0
      %1477 = vmatprep.subr.mxu0 0.0
      %1478 = vmatpush1.msra.mxu0 0.0
      %1479 = vmatprep.subr.mxu0 0.0
      %1480 = vmatpush1.msra.mxu0 0.0
      %1481 = vmatprep.subr.mxu0 0.0
      %1482 = vmatpush1.msra.mxu0 0.0
      %1483 = vmatprep.subr.mxu0 0.0
      %1484 = vmatpush1.msra.mxu0 0.0
      %1485 = vmatprep.subr.mxu0 0.0
      %1486 = vmatpush1.msra.mxu0 0.0
      %1487 = vmatprep.subr.mxu0 0.0
      %1488 = vmatpush1.msra.mxu0 0.0
      %1489 = vmatprep.subr.mxu0 0.0
      %1490 = vmatpush1.msra.mxu0 0.0
      %1491 = vmatprep.subr.mxu0 0.0
      %1492 = vmatpush1.msra.mxu0 0.0
      %1493 = vmatprep.subr.mxu0 0.0
      %1494 = vmatpush1.msra.mxu0 0.0
      %1495 = vmatprep.subr.mxu0 0.0
      %1496 = vmatpush1.msra.mxu0 0.0
      %1497 = vmatprep.subr.mxu0 0.0
      %1498 = vmatpush1.msra.mxu0 0.0
      %1499 = vmatprep.subr.mxu0 0.0
      %1500 = vmatpush1.msra.mxu0 0.0
      %1501 = vmatprep.subr.mxu0 0.0
      %1502 = vmatpush1.msra.mxu0 0.0
      %1503 = vmatprep.subr.mxu0 0.0
      %1504 = vmatpush1.msra.mxu0 0.0
      %1505 = vmatprep.subr.mxu0 0.0
      %1506 = vmatpush1.msra.mxu0 0.0
      %1507 = vmatprep.subr.mxu0 0.0
      %1508 = vmatpush1.msra.mxu0 0.0
      %1509 = vmatprep.subr.mxu0 0.0
      %1510 = vmatpush1.msra.mxu0 0.0
      %1511 = vmatprep.subr.mxu0 0.0
      %1512 = vmatpush1.msra.mxu0 0.0
      %1513 = vmatprep.subr.mxu0 0.0
      %1514 = vmatpush1.msra.mxu0 0.0
      %1515 = vmatprep.subr.mxu0 0.0
      %1516 = vmatpush1.msra.mxu0 0.0
      %1517 = vmatprep.subr.mxu0 0.0
      %1518 = vmatpush1.msra.mxu0 0.0
      %1519 = vmatprep.mubr.f32.mxu0 0.0
      %1520 = vmatmul.mubr.f32.gmra.mrb[0].mxu0 %v1444
      %v1521 = vpop.f32.mrb[0].mxu0
      %v1522 = vadd.f32 0.0, %v1521
      %v1523 = vpop.f32.mrb[0].mxu0
      %v1524 = vadd.f32 0.0, %v1523
      %1525 = vmatprep.mubr.f32.mxu0 0.0
      %1526 = vmatmul.mubr.f32.gmra.mrb[0].mxu0 %v1447
      %v1527 = vpop.f32.mrb[0].mxu0
      %v1528 = vadd.f32 0.0, %v1527
      %v1529 = vpop.f32.mrb[0].mxu0
      %v1530 = vadd.f32 0.0, %v1529
      %1531 = vmatprep.mubr.f32.mxu0 0.0
      %1532 = vmatmul.mubr.f32.gmra.mrb[0].mxu0 %v1450
      %v1533 = vpop.f32.mrb[0].mxu0
      %v1534 = vadd.f32 0.0, %v1533
      %v1535 = vpop.f32.mrb[0].mxu0
      %v1536 = vadd.f32 0.0, %v1535
      %1537 = vmatprep.mubr.f32.mxu0 0.0
      %1538 = vmatmul.mubr.f32.gmra.mrb[0].mxu0 %v1453
      %v1539 = vpop.f32.mrb[0].mxu0
      %v1540 = vadd.f32 0.0, %v1539
      %v1541 = vpop.f32.mrb[0].mxu0
      %v1542 = vadd.f32 0.0, %v1541
      %1543 = vdwg.mxu0
      %v1544 = vadd.f32 %v1408, %v1522
      %v1545 = vadd.f32 %v1409, %v1524
      %v1546 = vadd.f32 %v1410, %v1528
      %v1547 = vadd.f32 %v1411, %v1530
      %v1548 = vadd.f32 %v1412, %v1534
      %v1549 = vadd.f32 %v1413, %v1536
      %v1550 = vadd.f32 %v1414, %v1540
      %v1551 = vadd.f32 %v1415, %v1542
      %v1552 = vld [vmem:[%s3] sm:$0xff]
      %v1553 = vld [vmem:[%s3 + $0x8] sm:$0xff]
      %v1554 = vld [vmem:[%s3 + $0x10] sm:$0xff]
      %v1555 = vld [vmem:[%s3 + $0x18] sm:$0xff]
      %1557 = vset.pattern.permute.xlu0 0
      %1558 = vperm.xlu0 %1557, %v1552
      %v1559 = vpop.permute.xlu0 %1558
      %1562 = vset.pattern.permute.xlu0 0
      %1563 = vperm.xlu0 %1562, %v1553
      %v1564 = vpop.permute.xlu0 %1563
      %1567 = vset.pattern.permute.xlu0 0
      %1568 = vperm.xlu0 %1567, %v1554
      %v1569 = vpop.permute.xlu0 %1568
      %1572 = vset.pattern.permute.xlu0 0
      %1573 = vperm.xlu0 %1572, %v1555
      %v1574 = vpop.permute.xlu0 %1573
      %v1576 = vadd.f32 %v1544, %v1559
      %v1577 = vadd.f32 %v1545, %v1559
      %v1578 = vadd.f32 %v1546, %v1564
      %v1579 = vadd.f32 %v1547, %v1564
      %v1580 = vadd.f32 %v1548, %v1569
      %v1581 = vadd.f32 %v1549, %v1569
      %v1582 = vadd.f32 %v1550, %v1574
      %v1583 = vadd.f32 %v1551, %v1574
      %v1584 = vmax.f32 %v1576, 0.0
      %v1585 = vmax.f32 %v1577, 0.0
      %v1586 = vmax.f32 %v1578, 0.0
      %v1587 = vmax.f32 %v1579, 0.0
      %v1588 = vmax.f32 %v1580, 0.0
      %v1589 = vmax.f32 %v1581, 0.0
      %v1590 = vmax.f32 %v1582, 0.0
      %v1591 = vmax.f32 %v1583, 0.0
      %1592 = vrot.lane.b32.xlu0 %v1584, 17
      %v1593 = vpop.permute.xlu0 %1592
      %1594 = vrot.lane.b32.xlu0 %v1586, 17
      %v1595 = vpop.permute.xlu0 %1594
      %1596 = vrot.lane.b32.xlu0 %v1588, 17
      %v1597 = vpop.permute.xlu0 %1596
      %1598 = vrot.lane.b32.xlu0 %v1590, 17
      %v1599 = vpop.permute.xlu0 %1598
      %1600 = vrot.lane.b32.xlu0 %v1585, 17
      %v1601 = vpop.permute.xlu0 %1600
      %1602 = vrot.lane.b32.xlu0 %v1587, 17
      %v1603 = vpop.permute.xlu0 %1602
      %1604 = vrot.lane.b32.xlu0 %v1589, 17
      %v1605 = vpop.permute.xlu0 %1604
      %1606 = vrot.lane.b32.xlu0 %v1591, 17
      %v1607 = vpop.permute.xlu0 %1606
      %v1608 = vsel %vm371, %v1593, %v1601
      %v1609 = vsel %vm371, %v1595, %v1603
      %v1610 = vsel %vm371, %v1597, %v1605
      %v1611 = vsel %vm371, %v1599, %v1607
      %v1612 = vsel %vm371, %v1601, %v1593
      %v1613 = vsel %vm371, %v1603, %v1595
      %v1614 = vsel %vm371, %v1605, %v1597
      %v1615 = vsel %vm371, %v1607, %v1599
      %v1616 = vmul.f32 %v1612, %v379
      %v1617 = vmul.f32 %v1608, %v383
      %v1618 = vmul.f32 %v1613, %v379
      %v1619 = vmul.f32 %v1609, %v383
      %v1620 = vmul.f32 %v1614, %v379
      %v1621 = vmul.f32 %v1610, %v383
      %v1622 = vmul.f32 %v1615, %v379
      %v1623 = vmul.f32 %v1611, %v383
      %v1624 = vld [vmem:[%s4] sm:$0xff]
      %v1625 = vld [vmem:[%s4 + $0x8] sm:$0xff]
      %v1626 = vld [vmem:[%s4 + $0x10] sm:$0xff]
      %v1627 = vld [vmem:[%s4 + $0x18] sm:$0xff]
      %v1628 = vld [vmem:[%s4 + $0x20] sm:$0xff]
      %v1629 = vld [vmem:[%s4 + $0x28] sm:$0xff]
      %v1630 = vld [vmem:[%s4 + $0x30] sm:$0xff]
      %v1631 = vld [vmem:[%s4 + $0x38] sm:$0xff]
      %1632 = vrot.lane.b32.xlu0 %v1584, 16
      %v1633 = vpop.permute.xlu0 %1632
      %1634 = vrot.lane.b32.xlu0 %v1586, 16
      %v1635 = vpop.permute.xlu0 %1634
      %1636 = vrot.lane.b32.xlu0 %v1588, 16
      %v1637 = vpop.permute.xlu0 %1636
      %1638 = vrot.lane.b32.xlu0 %v1590, 16
      %v1639 = vpop.permute.xlu0 %1638
      %1640 = vrot.lane.b32.xlu0 %v1585, 16
      %v1641 = vpop.permute.xlu0 %1640
      %1642 = vrot.lane.b32.xlu0 %v1587, 16
      %v1643 = vpop.permute.xlu0 %1642
      %1644 = vrot.lane.b32.xlu0 %v1589, 16
      %v1645 = vpop.permute.xlu0 %1644
      %1646 = vrot.lane.b32.xlu0 %v1591, 16
      %v1647 = vpop.permute.xlu0 %1646
      %v1648 = vsel %vm396, %v1633, %v1641
      %v1649 = vsel %vm396, %v1635, %v1643
      %v1650 = vsel %vm396, %v1637, %v1645
      %v1651 = vsel %vm396, %v1639, %v1647
      %v1652 = vsel %vm396, %v1641, %v1633
      %v1653 = vsel %vm396, %v1643, %v1635
      %v1654 = vsel %vm396, %v1645, %v1637
      %v1655 = vsel %vm396, %v1647, %v1639
      %v1656 = vmul.f32 %v1652, %v405
      %v1657 = vmul.f32 %v1648, %v409
      %v1658 = vmul.f32 %v1653, %v405
      %v1659 = vmul.f32 %v1649, %v409
      %v1660 = vmul.f32 %v1654, %v405
      %v1661 = vmul.f32 %v1650, %v409
      %v1662 = vmul.f32 %v1655, %v405
      %v1663 = vmul.f32 %v1651, %v409
      %s1664 = scalar_lea.vmem %s4, 64
      %v1665 = vld [vmem:[%s1664] sm:$0xff]
      %v1666 = vld [vmem:[%s1664 + $0x8] sm:$0xff]
      %v1667 = vld [vmem:[%s1664 + $0x10] sm:$0xff]
      %v1668 = vld [vmem:[%s1664 + $0x18] sm:$0xff]
      %v1669 = vld [vmem:[%s1664 + $0x20] sm:$0xff]
      %v1670 = vld [vmem:[%s1664 + $0x28] sm:$0xff]
      %v1671 = vld [vmem:[%s1664 + $0x30] sm:$0xff]
      %v1672 = vld [vmem:[%s1664 + $0x38] sm:$0xff]
      %vm1673 = vcmask 261120
      %v1675 = vsel %vm1673, %v1665, 0
      %v1678 = vsel %vm1673, %v1666, 0
      %v1681 = vsel %vm1673, %v1667, 0
      %v1684 = vsel %vm1673, %v1668, 0
      %v1687 = vsel %vm1673, %v1669, 0
      %v1690 = vsel %vm1673, %v1670, 0
      %v1693 = vsel %vm1673, %v1671, 0
      %v1696 = vsel %vm1673, %v1672, 0
      %1698 = vmatprep.subr.mxu0 %v1657
      %1699 = vmatpush1.msra.mxu0 %v1656
      %1700 = vmatprep.subr.mxu0 %v1659
      %1701 = vmatpush1.msra.mxu0 %v1658
      %1702 = vmatprep.subr.mxu0 %v1661
      %1703 = vmatpush1.msra.mxu0 %v1660
      %1704 = vmatprep.subr.mxu0 %v1663
      %1705 = vmatpush1.msra.mxu0 %v1662
      %1706 = vmatprep.subr.mxu0 0.0
      %1707 = vmatpush1.msra.mxu0 0.0
      %1708 = vmatprep.subr.mxu0 0.0
      %1709 = vmatpush1.msra.mxu0 0.0
      %1710 = vmatprep.subr.mxu0 0.0
      %1711 = vmatpush1.msra.mxu0 0.0
      %1712 = vmatprep.subr.mxu0 0.0
      %1713 = vmatpush1.msra.mxu0 0.0
      %1714 = vmatprep.subr.mxu0 0.0
      %1715 = vmatpush1.msra.mxu0 0.0
      %1716 = vmatprep.subr.mxu0 0.0
      %1717 = vmatpush1.msra.mxu0 0.0
      %1718 = vmatprep.subr.mxu0 0.0
      %1719 = vmatpush1.msra.mxu0 0.0
      %1720 = vmatprep.subr.mxu0 0.0
      %1721 = vmatpush1.msra.mxu0 0.0
      %1722 = vmatprep.subr.mxu0 0.0
      %1723 = vmatpush1.msra.mxu0 0.0
      %1724 = vmatprep.subr.mxu0 0.0
      %1725 = vmatpush1.msra.mxu0 0.0
      %1726 = vmatprep.subr.mxu0 0.0
      %1727 = vmatpush1.msra.mxu0 0.0
      %1728 = vmatprep.subr.mxu0 0.0
      %1729 = vmatpush1.msra.mxu0 0.0
      %1730 = vmatprep.subr.mxu0 0.0
      %1731 = vmatpush1.msra.mxu0 0.0
      %1732 = vmatprep.subr.mxu0 0.0
      %1733 = vmatpush1.msra.mxu0 0.0
      %1734 = vmatprep.subr.mxu0 0.0
      %1735 = vmatpush1.msra.mxu0 0.0
      %1736 = vmatprep.subr.mxu0 0.0
      %1737 = vmatpush1.msra.mxu0 0.0
      %1738 = vmatprep.subr.mxu0 0.0
      %1739 = vmatpush1.msra.mxu0 0.0
      %1740 = vmatprep.subr.mxu0 0.0
      %1741 = vmatpush1.msra.mxu0 0.0
      %1742 = vmatprep.subr.mxu0 0.0
      %1743 = vmatpush1.msra.mxu0 0.0
      %1744 = vmatprep.subr.mxu0 0.0
      %1745 = vmatpush1.msra.mxu0 0.0
      %1746 = vmatprep.subr.mxu0 0.0
      %1747 = vmatpush1.msra.mxu0 0.0
      %1748 = vmatprep.subr.mxu0 0.0
      %1749 = vmatpush1.msra.mxu0 0.0
      %1750 = vmatprep.subr.mxu0 0.0
      %1751 = vmatpush1.msra.mxu0 0.0
      %1752 = vmatprep.subr.mxu0 0.0
      %1753 = vmatpush1.msra.mxu0 0.0
      %1754 = vmatprep.subr.mxu0 0.0
      %1755 = vmatpush1.msra.mxu0 0.0
      %1756 = vmatprep.subr.mxu0 0.0
      %1757 = vmatpush1.msra.mxu0 0.0
      %1758 = vmatprep.subr.mxu0 0.0
      %1759 = vmatpush1.msra.mxu0 0.0
      %1760 = vmatprep.subr.mxu0 0.0
      %1761 = vmatpush1.msra.mxu0 0.0
      %1762 = vmatprep.mubr.f32.mxu0 0.0
      %1763 = vmatmul.mubr.f32.gmra.mrb[0].mxu0 %v1675
      %v1764 = vpop.f32.mrb[0].mxu0
      %v1765 = vadd.f32 0.0, %v1764
      %v1766 = vpop.f32.mrb[0].mxu0
      %v1767 = vadd.f32 0.0, %v1766
      %1768 = vmatprep.mubr.f32.mxu0 0.0
      %1769 = vmatmul.mubr.f32.gmra.mrb[0].mxu0 %v1678
      %v1770 = vpop.f32.mrb[0].mxu0
      %v1771 = vadd.f32 0.0, %v1770
      %v1772 = vpop.f32.mrb[0].mxu0
      %v1773 = vadd.f32 0.0, %v1772
      %1774 = vmatprep.mubr.f32.mxu0 0.0
      %1775 = vmatmul.mubr.f32.gmra.mrb[0].mxu0 %v1681
      %v1776 = vpop.f32.mrb[0].mxu0
      %v1777 = vadd.f32 0.0, %v1776
      %v1778 = vpop.f32.mrb[0].mxu0
      %v1779 = vadd.f32 0.0, %v1778
      %1780 = vmatprep.mubr.f32.mxu0 0.0
      %1781 = vmatmul.mubr.f32.gmra.mrb[0].mxu0 %v1684
      %v1782 = vpop.f32.mrb[0].mxu0
      %v1783 = vadd.f32 0.0, %v1782
      %v1784 = vpop.f32.mrb[0].mxu0
      %v1785 = vadd.f32 0.0, %v1784
      %1786 = vmatprep.mubr.f32.mxu0 0.0
      %1787 = vmatmul.mubr.f32.gmra.mrb[0].mxu0 %v1687
      %v1788 = vpop.f32.mrb[0].mxu0
      %v1789 = vadd.f32 0.0, %v1788
      %v1790 = vpop.f32.mrb[0].mxu0
      %v1791 = vadd.f32 0.0, %v1790
      %1792 = vmatprep.mubr.f32.mxu0 0.0
      %1793 = vmatmul.mubr.f32.gmra.mrb[0].mxu0 %v1690
      %v1794 = vpop.f32.mrb[0].mxu0
      %v1795 = vadd.f32 0.0, %v1794
      %v1796 = vpop.f32.mrb[0].mxu0
      %v1797 = vadd.f32 0.0, %v1796
      %1798 = vmatprep.mubr.f32.mxu0 0.0
      %1799 = vmatmul.mubr.f32.gmra.mrb[0].mxu0 %v1693
      %v1800 = vpop.f32.mrb[0].mxu0
      %v1801 = vadd.f32 0.0, %v1800
      %v1802 = vpop.f32.mrb[0].mxu0
      %v1803 = vadd.f32 0.0, %v1802
      %1804 = vmatprep.mubr.f32.mxu0 0.0
      %1805 = vmatmul.mubr.f32.gmra.mrb[0].mxu0 %v1696
      %v1806 = vpop.f32.mrb[0].mxu0
      %v1807 = vadd.f32 0.0, %v1806
      %v1808 = vpop.f32.mrb[0].mxu0
      %v1809 = vadd.f32 0.0, %v1808
      %1810 = vdwg.mxu0
      %v1812 = vsel %vm1673, %v1624, 0
      %v1815 = vsel %vm1673, %v1625, 0
      %v1818 = vsel %vm1673, %v1626, 0
      %v1821 = vsel %vm1673, %v1627, 0
      %v1824 = vsel %vm1673, %v1628, 0
      %v1827 = vsel %vm1673, %v1629, 0
      %v1830 = vsel %vm1673, %v1630, 0
      %v1833 = vsel %vm1673, %v1631, 0
      %1835 = vmatprep.subr.mxu0 %v1617
      %1836 = vmatpush1.msra.mxu0 %v1616
      %1837 = vmatprep.subr.mxu0 %v1619
      %1838 = vmatpush1.msra.mxu0 %v1618
      %1839 = vmatprep.subr.mxu0 %v1621
      %1840 = vmatpush1.msra.mxu0 %v1620
      %1841 = vmatprep.subr.mxu0 %v1623
      %1842 = vmatpush1.msra.mxu0 %v1622
      %1843 = vmatprep.subr.mxu0 0.0
      %1844 = vmatpush1.msra.mxu0 0.0
      %1845 = vmatprep.subr.mxu0 0.0
      %1846 = vmatpush1.msra.mxu0 0.0
      %1847 = vmatprep.subr.mxu0 0.0
      %1848 = vmatpush1.msra.mxu0 0.0
      %1849 = vmatprep.subr.mxu0 0.0
      %1850 = vmatpush1.msra.mxu0 0.0
      %1851 = vmatprep.subr.mxu0 0.0
      %1852 = vmatpush1.msra.mxu0 0.0
      %1853 = vmatprep.subr.mxu0 0.0
      %1854 = vmatpush1.msra.mxu0 0.0
      %1855 = vmatprep.subr.mxu0 0.0
      %1856 = vmatpush1.msra.mxu0 0.0
      %1857 = vmatprep.subr.mxu0 0.0
      %1858 = vmatpush1.msra.mxu0 0.0
      %1859 = vmatprep.subr.mxu0 0.0
      %1860 = vmatpush1.msra.mxu0 0.0
      %1861 = vmatprep.subr.mxu0 0.0
      %1862 = vmatpush1.msra.mxu0 0.0
      %1863 = vmatprep.subr.mxu0 0.0
      %1864 = vmatpush1.msra.mxu0 0.0
      %1865 = vmatprep.subr.mxu0 0.0
      %1866 = vmatpush1.msra.mxu0 0.0
      %1867 = vmatprep.subr.mxu0 0.0
      %1868 = vmatpush1.msra.mxu0 0.0
      %1869 = vmatprep.subr.mxu0 0.0
      %1870 = vmatpush1.msra.mxu0 0.0
      %1871 = vmatprep.subr.mxu0 0.0
      %1872 = vmatpush1.msra.mxu0 0.0
      %1873 = vmatprep.subr.mxu0 0.0
      %1874 = vmatpush1.msra.mxu0 0.0
      %1875 = vmatprep.subr.mxu0 0.0
      %1876 = vmatpush1.msra.mxu0 0.0
      %1877 = vmatprep.subr.mxu0 0.0
      %1878 = vmatpush1.msra.mxu0 0.0
      %1879 = vmatprep.subr.mxu0 0.0
      %1880 = vmatpush1.msra.mxu0 0.0
      %1881 = vmatprep.subr.mxu0 0.0
      %1882 = vmatpush1.msra.mxu0 0.0
      %1883 = vmatprep.subr.mxu0 0.0
      %1884 = vmatpush1.msra.mxu0 0.0
      %1885 = vmatprep.subr.mxu0 0.0
      %1886 = vmatpush1.msra.mxu0 0.0
      %1887 = vmatprep.subr.mxu0 0.0
      %1888 = vmatpush1.msra.mxu0 0.0
      %1889 = vmatprep.subr.mxu0 0.0
      %1890 = vmatpush1.msra.mxu0 0.0
      %1891 = vmatprep.subr.mxu0 0.0
      %1892 = vmatpush1.msra.mxu0 0.0
      %1893 = vmatprep.subr.mxu0 0.0
      %1894 = vmatpush1.msra.mxu0 0.0
      %1895 = vmatprep.subr.mxu0 0.0
      %1896 = vmatpush1.msra.mxu0 0.0
      %1897 = vmatprep.subr.mxu0 0.0
      %1898 = vmatpush1.msra.mxu0 0.0
      %1899 = vmatprep.mubr.f32.mxu0 0.0
      %1900 = vmatmul.mubr.f32.gmra.mrb[0].mxu0 %v1812
      %v1901 = vpop.f32.mrb[0].mxu0
      %v1902 = vadd.f32 %v1765, %v1901
      %v1903 = vpop.f32.mrb[0].mxu0
      %v1904 = vadd.f32 %v1767, %v1903
      %1905 = vmatprep.mubr.f32.mxu0 0.0
      %1906 = vmatmul.mubr.f32.gmra.mrb[0].mxu0 %v1815
      %v1907 = vpop.f32.mrb[0].mxu0
      %v1908 = vadd.f32 %v1771, %v1907
      %v1909 = vpop.f32.mrb[0].mxu0
      %v1910 = vadd.f32 %v1773, %v1909
      %1911 = vmatprep.mubr.f32.mxu0 0.0
      %1912 = vmatmul.mubr.f32.gmra.mrb[0].mxu0 %v1818
      %v1913 = vpop.f32.mrb[0].mxu0
      %v1914 = vadd.f32 %v1777, %v1913
      %v1915 = vpop.f32.mrb[0].mxu0
      %v1916 = vadd.f32 %v1779, %v1915
      %1917 = vmatprep.mubr.f32.mxu0 0.0
      %1918 = vmatmul.mubr.f32.gmra.mrb[0].mxu0 %v1821
      %v1919 = vpop.f32.mrb[0].mxu0
      %v1920 = vadd.f32 %v1783, %v1919
      %v1921 = vpop.f32.mrb[0].mxu0
      %v1922 = vadd.f32 %v1785, %v1921
      %1923 = vmatprep.mubr.f32.mxu0 0.0
      %1924 = vmatmul.mubr.f32.gmra.mrb[0].mxu0 %v1824
      %v1925 = vpop.f32.mrb[0].mxu0
      %v1926 = vadd.f32 %v1789, %v1925
      %v1927 = vpop.f32.mrb[0].mxu0
      %v1928 = vadd.f32 %v1791, %v1927
      %1929 = vmatprep.mubr.f32.mxu0 0.0
      %1930 = vmatmul.mubr.f32.gmra.mrb[0].mxu0 %v1827
      %v1931 = vpop.f32.mrb[0].mxu0
      %v1932 = vadd.f32 %v1795, %v1931
      %v1933 = vpop.f32.mrb[0].mxu0
      %v1934 = vadd.f32 %v1797, %v1933
      %1935 = vmatprep.mubr.f32.mxu0 0.0
      %1936 = vmatmul.mubr.f32.gmra.mrb[0].mxu0 %v1830
      %v1937 = vpop.f32.mrb[0].mxu0
      %v1938 = vadd.f32 %v1801, %v1937
      %v1939 = vpop.f32.mrb[0].mxu0
      %v1940 = vadd.f32 %v1803, %v1939
      %1941 = vmatprep.mubr.f32.mxu0 0.0
      %1942 = vmatmul.mubr.f32.gmra.mrb[0].mxu0 %v1833
      %v1943 = vpop.f32.mrb[0].mxu0
      %v1944 = vadd.f32 %v1807, %v1943
      %v1945 = vpop.f32.mrb[0].mxu0
      %v1946 = vadd.f32 %v1809, %v1945
      %1947 = vdwg.mxu0
      %1948 = vrot.lane.b32.xlu0 %v1584, 15
      %v1949 = vpop.permute.xlu0 %1948
      %1950 = vrot.lane.b32.xlu0 %v1586, 15
      %v1951 = vpop.permute.xlu0 %1950
      %1952 = vrot.lane.b32.xlu0 %v1588, 15
      %v1953 = vpop.permute.xlu0 %1952
      %1954 = vrot.lane.b32.xlu0 %v1590, 15
      %v1955 = vpop.permute.xlu0 %1954
      %1956 = vrot.lane.b32.xlu0 %v1585, 15
      %v1957 = vpop.permute.xlu0 %1956
      %1958 = vrot.lane.b32.xlu0 %v1587, 15
      %v1959 = vpop.permute.xlu0 %1958
      %1960 = vrot.lane.b32.xlu0 %v1589, 15
      %v1961 = vpop.permute.xlu0 %1960
      %1962 = vrot.lane.b32.xlu0 %v1591, 15
      %v1963 = vpop.permute.xlu0 %1962
      %v1964 = vsel %vm626, %v1949, %v1957
      %v1965 = vsel %vm626, %v1951, %v1959
      %v1966 = vsel %vm626, %v1953, %v1961
      %v1967 = vsel %vm626, %v1955, %v1963
      %v1968 = vsel %vm626, %v1957, %v1949
      %v1969 = vsel %vm626, %v1959, %v1951
      %v1970 = vsel %vm626, %v1961, %v1953
      %v1971 = vsel %vm626, %v1963, %v1955
      %v1972 = vmul.f32 %v1968, %v635
      %v1973 = vmul.f32 %v1964, %v639
      %v1974 = vmul.f32 %v1969, %v635
      %v1975 = vmul.f32 %v1965, %v639
      %v1976 = vmul.f32 %v1970, %v635
      %v1977 = vmul.f32 %v1966, %v639
      %v1978 = vmul.f32 %v1971, %v635
      %v1979 = vmul.f32 %v1967, %v639
      %s1980 = scalar_lea.vmem %s4, 128
      %v1981 = vld [vmem:[%s1980] sm:$0xff]
      %v1982 = vld [vmem:[%s1980 + $0x8] sm:$0xff]
      %v1983 = vld [vmem:[%s1980 + $0x10] sm:$0xff]
      %v1984 = vld [vmem:[%s1980 + $0x18] sm:$0xff]
      %v1985 = vld [vmem:[%s1980 + $0x20] sm:$0xff]
      %v1986 = vld [vmem:[%s1980 + $0x28] sm:$0xff]
      %v1987 = vld [vmem:[%s1980 + $0x30] sm:$0xff]
      %v1988 = vld [vmem:[%s1980 + $0x38] sm:$0xff]
      %v1990 = vsel %vm1673, %v1981, 0
      %v1993 = vsel %vm1673, %v1982, 0
      %v1996 = vsel %vm1673, %v1983, 0
      %v1999 = vsel %vm1673, %v1984, 0
      %v2002 = vsel %vm1673, %v1985, 0
      %v2005 = vsel %vm1673, %v1986, 0
      %v2008 = vsel %vm1673, %v1987, 0
      %v2011 = vsel %vm1673, %v1988, 0
      %2013 = vmatprep.subr.mxu0 %v1973
      %2014 = vmatpush1.msra.mxu0 %v1972
      %2015 = vmatprep.subr.mxu0 %v1975
      %2016 = vmatpush1.msra.mxu0 %v1974
      %2017 = vmatprep.subr.mxu0 %v1977
      %2018 = vmatpush1.msra.mxu0 %v1976
      %2019 = vmatprep.subr.mxu0 %v1979
      %2020 = vmatpush1.msra.mxu0 %v1978
      %2021 = vmatprep.subr.mxu0 0.0
      %2022 = vmatpush1.msra.mxu0 0.0
      %2023 = vmatprep.subr.mxu0 0.0
      %2024 = vmatpush1.msra.mxu0 0.0
      %2025 = vmatprep.subr.mxu0 0.0
      %2026 = vmatpush1.msra.mxu0 0.0
      %2027 = vmatprep.subr.mxu0 0.0
      %2028 = vmatpush1.msra.mxu0 0.0
      %2029 = vmatprep.subr.mxu0 0.0
      %2030 = vmatpush1.msra.mxu0 0.0
      %2031 = vmatprep.subr.mxu0 0.0
      %2032 = vmatpush1.msra.mxu0 0.0
      %2033 = vmatprep.subr.mxu0 0.0
      %2034 = vmatpush1.msra.mxu0 0.0
      %2035 = vmatprep.subr.mxu0 0.0
      %2036 = vmatpush1.msra.mxu0 0.0
      %2037 = vmatprep.subr.mxu0 0.0
      %2038 = vmatpush1.msra.mxu0 0.0
      %2039 = vmatprep.subr.mxu0 0.0
      %2040 = vmatpush1.msra.mxu0 0.0
      %2041 = vmatprep.subr.mxu0 0.0
      %2042 = vmatpush1.msra.mxu0 0.0
      %2043 = vmatprep.subr.mxu0 0.0
      %2044 = vmatpush1.msra.mxu0 0.0
      %2045 = vmatprep.subr.mxu0 0.0
      %2046 = vmatpush1.msra.mxu0 0.0
      %2047 = vmatprep.subr.mxu0 0.0
      %2048 = vmatpush1.msra.mxu0 0.0
      %2049 = vmatprep.subr.mxu0 0.0
      %2050 = vmatpush1.msra.mxu0 0.0
      %2051 = vmatprep.subr.mxu0 0.0
      %2052 = vmatpush1.msra.mxu0 0.0
      %2053 = vmatprep.subr.mxu0 0.0
      %2054 = vmatpush1.msra.mxu0 0.0
      %2055 = vmatprep.subr.mxu0 0.0
      %2056 = vmatpush1.msra.mxu0 0.0
      %2057 = vmatprep.subr.mxu0 0.0
      %2058 = vmatpush1.msra.mxu0 0.0
      %2059 = vmatprep.subr.mxu0 0.0
      %2060 = vmatpush1.msra.mxu0 0.0
      %2061 = vmatprep.subr.mxu0 0.0
      %2062 = vmatpush1.msra.mxu0 0.0
      %2063 = vmatprep.subr.mxu0 0.0
      %2064 = vmatpush1.msra.mxu0 0.0
      %2065 = vmatprep.subr.mxu0 0.0
      %2066 = vmatpush1.msra.mxu0 0.0
      %2067 = vmatprep.subr.mxu0 0.0
      %2068 = vmatpush1.msra.mxu0 0.0
      %2069 = vmatprep.subr.mxu0 0.0
      %2070 = vmatpush1.msra.mxu0 0.0
      %2071 = vmatprep.subr.mxu0 0.0
      %2072 = vmatpush1.msra.mxu0 0.0
      %2073 = vmatprep.subr.mxu0 0.0
      %2074 = vmatpush1.msra.mxu0 0.0
      %2075 = vmatprep.subr.mxu0 0.0
      %2076 = vmatpush1.msra.mxu0 0.0
      %2077 = vmatprep.mubr.f32.mxu0 0.0
      %2078 = vmatmul.mubr.f32.gmra.mrb[0].mxu0 %v1990
      %v2079 = vpop.f32.mrb[0].mxu0
      %v2080 = vadd.f32 0.0, %v2079
      %v2081 = vpop.f32.mrb[0].mxu0
      %v2082 = vadd.f32 0.0, %v2081
      %2083 = vmatprep.mubr.f32.mxu0 0.0
      %2084 = vmatmul.mubr.f32.gmra.mrb[0].mxu0 %v1993
      %v2085 = vpop.f32.mrb[0].mxu0
      %v2086 = vadd.f32 0.0, %v2085
      %v2087 = vpop.f32.mrb[0].mxu0
      %v2088 = vadd.f32 0.0, %v2087
      %2089 = vmatprep.mubr.f32.mxu0 0.0
      %2090 = vmatmul.mubr.f32.gmra.mrb[0].mxu0 %v1996
      %v2091 = vpop.f32.mrb[0].mxu0
      %v2092 = vadd.f32 0.0, %v2091
      %v2093 = vpop.f32.mrb[0].mxu0
      %v2094 = vadd.f32 0.0, %v2093
      %2095 = vmatprep.mubr.f32.mxu0 0.0
      %2096 = vmatmul.mubr.f32.gmra.mrb[0].mxu0 %v1999
      %v2097 = vpop.f32.mrb[0].mxu0
      %v2098 = vadd.f32 0.0, %v2097
      %v2099 = vpop.f32.mrb[0].mxu0
      %v2100 = vadd.f32 0.0, %v2099
      %2101 = vmatprep.mubr.f32.mxu0 0.0
      %2102 = vmatmul.mubr.f32.gmra.mrb[0].mxu0 %v2002
      %v2103 = vpop.f32.mrb[0].mxu0
      %v2104 = vadd.f32 0.0, %v2103
      %v2105 = vpop.f32.mrb[0].mxu0
      %v2106 = vadd.f32 0.0, %v2105
      %2107 = vmatprep.mubr.f32.mxu0 0.0
      %2108 = vmatmul.mubr.f32.gmra.mrb[0].mxu0 %v2005
      %v2109 = vpop.f32.mrb[0].mxu0
      %v2110 = vadd.f32 0.0, %v2109
      %v2111 = vpop.f32.mrb[0].mxu0
      %v2112 = vadd.f32 0.0, %v2111
      %2113 = vmatprep.mubr.f32.mxu0 0.0
      %2114 = vmatmul.mubr.f32.gmra.mrb[0].mxu0 %v2008
      %v2115 = vpop.f32.mrb[0].mxu0
      %v2116 = vadd.f32 0.0, %v2115
      %v2117 = vpop.f32.mrb[0].mxu0
      %v2118 = vadd.f32 0.0, %v2117
      %2119 = vmatprep.mubr.f32.mxu0 0.0
      %2120 = vmatmul.mubr.f32.gmra.mrb[0].mxu0 %v2011
      %v2121 = vpop.f32.mrb[0].mxu0
      %v2122 = vadd.f32 0.0, %v2121
      %v2123 = vpop.f32.mrb[0].mxu0
      %v2124 = vadd.f32 0.0, %v2123
      %2125 = vdwg.mxu0
      %v2126 = vadd.f32 %v1902, %v2080
      %v2127 = vadd.f32 %v1904, %v2082
      %v2128 = vadd.f32 %v1908, %v2086
      %v2129 = vadd.f32 %v1910, %v2088
      %v2130 = vadd.f32 %v1914, %v2092
      %v2131 = vadd.f32 %v1916, %v2094
      %v2132 = vadd.f32 %v1920, %v2098
      %v2133 = vadd.f32 %v1922, %v2100
      %v2134 = vadd.f32 %v1926, %v2104
      %v2135 = vadd.f32 %v1928, %v2106
      %v2136 = vadd.f32 %v1932, %v2110
      %v2137 = vadd.f32 %v1934, %v2112
      %v2138 = vadd.f32 %v1938, %v2116
      %v2139 = vadd.f32 %v1940, %v2118
      %v2140 = vadd.f32 %v1944, %v2122
      %v2141 = vadd.f32 %v1946, %v2124
      %2142 = vrot.lane.b32.xlu0 %v1584, 1
      %v2143 = vpop.permute.xlu0 %2142
      %2144 = vrot.lane.b32.xlu0 %v1586, 1
      %v2145 = vpop.permute.xlu0 %2144
      %2146 = vrot.lane.b32.xlu0 %v1588, 1
      %v2147 = vpop.permute.xlu0 %2146
      %2148 = vrot.lane.b32.xlu0 %v1590, 1
      %v2149 = vpop.permute.xlu0 %2148
      %2150 = vrot.lane.b32.xlu0 %v1585, 1
      %v2151 = vpop.permute.xlu0 %2150
      %2152 = vrot.lane.b32.xlu0 %v1587, 1
      %v2153 = vpop.permute.xlu0 %2152
      %2154 = vrot.lane.b32.xlu0 %v1589, 1
      %v2155 = vpop.permute.xlu0 %2154
      %2156 = vrot.lane.b32.xlu0 %v1591, 1
      %v2157 = vpop.permute.xlu0 %2156
      %v2158 = vsel %vm762, %v2143, %v2151
      %v2159 = vsel %vm762, %v2145, %v2153
      %v2160 = vsel %vm762, %v2147, %v2155
      %v2161 = vsel %vm762, %v2149, %v2157
      %v2162 = vsel %vm762, %v2151, %v2143
      %v2163 = vsel %vm762, %v2153, %v2145
      %v2164 = vsel %vm762, %v2155, %v2147
      %v2165 = vsel %vm762, %v2157, %v2149
      %v2166 = vmul.f32 %v2162, %v771
      %v2167 = vmul.f32 %v2158, %v775
      %v2168 = vmul.f32 %v2163, %v771
      %v2169 = vmul.f32 %v2159, %v775
      %v2170 = vmul.f32 %v2164, %v771
      %v2171 = vmul.f32 %v2160, %v775
      %v2172 = vmul.f32 %v2165, %v771
      %v2173 = vmul.f32 %v2161, %v775
      %s2174 = scalar_lea.vmem %s4, 192
      %v2175 = vld [vmem:[%s2174] sm:$0xff]
      %v2176 = vld [vmem:[%s2174 + $0x8] sm:$0xff]
      %v2177 = vld [vmem:[%s2174 + $0x10] sm:$0xff]
      %v2178 = vld [vmem:[%s2174 + $0x18] sm:$0xff]
      %v2179 = vld [vmem:[%s2174 + $0x20] sm:$0xff]
      %v2180 = vld [vmem:[%s2174 + $0x28] sm:$0xff]
      %v2181 = vld [vmem:[%s2174 + $0x30] sm:$0xff]
      %v2182 = vld [vmem:[%s2174 + $0x38] sm:$0xff]
      %v2184 = vsel %vm1673, %v2175, 0
      %v2187 = vsel %vm1673, %v2176, 0
      %v2190 = vsel %vm1673, %v2177, 0
      %v2193 = vsel %vm1673, %v2178, 0
      %v2196 = vsel %vm1673, %v2179, 0
      %v2199 = vsel %vm1673, %v2180, 0
      %v2202 = vsel %vm1673, %v2181, 0
      %v2205 = vsel %vm1673, %v2182, 0
      %2207 = vmatprep.subr.mxu0 %v2167
      %2208 = vmatpush1.msra.mxu0 %v2166
      %2209 = vmatprep.subr.mxu0 %v2169
      %2210 = vmatpush1.msra.mxu0 %v2168
      %2211 = vmatprep.subr.mxu0 %v2171
      %2212 = vmatpush1.msra.mxu0 %v2170
      %2213 = vmatprep.subr.mxu0 %v2173
      %2214 = vmatpush1.msra.mxu0 %v2172
      %2215 = vmatprep.subr.mxu0 0.0
      %2216 = vmatpush1.msra.mxu0 0.0
      %2217 = vmatprep.subr.mxu0 0.0
      %2218 = vmatpush1.msra.mxu0 0.0
      %2219 = vmatprep.subr.mxu0 0.0
      %2220 = vmatpush1.msra.mxu0 0.0
      %2221 = vmatprep.subr.mxu0 0.0
      %2222 = vmatpush1.msra.mxu0 0.0
      %2223 = vmatprep.subr.mxu0 0.0
      %2224 = vmatpush1.msra.mxu0 0.0
      %2225 = vmatprep.subr.mxu0 0.0
      %2226 = vmatpush1.msra.mxu0 0.0
      %2227 = vmatprep.subr.mxu0 0.0
      %2228 = vmatpush1.msra.mxu0 0.0
      %2229 = vmatprep.subr.mxu0 0.0
      %2230 = vmatpush1.msra.mxu0 0.0
      %2231 = vmatprep.subr.mxu0 0.0
      %2232 = vmatpush1.msra.mxu0 0.0
      %2233 = vmatprep.subr.mxu0 0.0
      %2234 = vmatpush1.msra.mxu0 0.0
      %2235 = vmatprep.subr.mxu0 0.0
      %2236 = vmatpush1.msra.mxu0 0.0
      %2237 = vmatprep.subr.mxu0 0.0
      %2238 = vmatpush1.msra.mxu0 0.0
      %2239 = vmatprep.subr.mxu0 0.0
      %2240 = vmatpush1.msra.mxu0 0.0
      %2241 = vmatprep.subr.mxu0 0.0
      %2242 = vmatpush1.msra.mxu0 0.0
      %2243 = vmatprep.subr.mxu0 0.0
      %2244 = vmatpush1.msra.mxu0 0.0
      %2245 = vmatprep.subr.mxu0 0.0
      %2246 = vmatpush1.msra.mxu0 0.0
      %2247 = vmatprep.subr.mxu0 0.0
      %2248 = vmatpush1.msra.mxu0 0.0
      %2249 = vmatprep.subr.mxu0 0.0
      %2250 = vmatpush1.msra.mxu0 0.0
      %2251 = vmatprep.subr.mxu0 0.0
      %2252 = vmatpush1.msra.mxu0 0.0
      %2253 = vmatprep.subr.mxu0 0.0
      %2254 = vmatpush1.msra.mxu0 0.0
      %2255 = vmatprep.subr.mxu0 0.0
      %2256 = vmatpush1.msra.mxu0 0.0
      %2257 = vmatprep.subr.mxu0 0.0
      %2258 = vmatpush1.msra.mxu0 0.0
      %2259 = vmatprep.subr.mxu0 0.0
      %2260 = vmatpush1.msra.mxu0 0.0
      %2261 = vmatprep.subr.mxu0 0.0
      %2262 = vmatpush1.msra.mxu0 0.0
      %2263 = vmatprep.subr.mxu0 0.0
      %2264 = vmatpush1.msra.mxu0 0.0
      %2265 = vmatprep.subr.mxu0 0.0
      %2266 = vmatpush1.msra.mxu0 0.0
      %2267 = vmatprep.subr.mxu0 0.0
      %2268 = vmatpush1.msra.mxu0 0.0
      %2269 = vmatprep.subr.mxu0 0.0
      %2270 = vmatpush1.msra.mxu0 0.0
      %2271 = vmatprep.mubr.f32.mxu0 0.0
      %2272 = vmatmul.mubr.f32.gmra.mrb[0].mxu0 %v2184
      %v2273 = vpop.f32.mrb[0].mxu0
      %v2274 = vadd.f32 0.0, %v2273
      %v2275 = vpop.f32.mrb[0].mxu0
      %v2276 = vadd.f32 0.0, %v2275
      %2277 = vmatprep.mubr.f32.mxu0 0.0
      %2278 = vmatmul.mubr.f32.gmra.mrb[0].mxu0 %v2187
      %v2279 = vpop.f32.mrb[0].mxu0
      %v2280 = vadd.f32 0.0, %v2279
      %v2281 = vpop.f32.mrb[0].mxu0
      %v2282 = vadd.f32 0.0, %v2281
      %2283 = vmatprep.mubr.f32.mxu0 0.0
      %2284 = vmatmul.mubr.f32.gmra.mrb[0].mxu0 %v2190
      %v2285 = vpop.f32.mrb[0].mxu0
      %v2286 = vadd.f32 0.0, %v2285
      %v2287 = vpop.f32.mrb[0].mxu0
      %v2288 = vadd.f32 0.0, %v2287
      %2289 = vmatprep.mubr.f32.mxu0 0.0
      %2290 = vmatmul.mubr.f32.gmra.mrb[0].mxu0 %v2193
      %v2291 = vpop.f32.mrb[0].mxu0
      %v2292 = vadd.f32 0.0, %v2291
      %v2293 = vpop.f32.mrb[0].mxu0
      %v2294 = vadd.f32 0.0, %v2293
      %2295 = vmatprep.mubr.f32.mxu0 0.0
      %2296 = vmatmul.mubr.f32.gmra.mrb[0].mxu0 %v2196
      %v2297 = vpop.f32.mrb[0].mxu0
      %v2298 = vadd.f32 0.0, %v2297
      %v2299 = vpop.f32.mrb[0].mxu0
      %v2300 = vadd.f32 0.0, %v2299
      %2301 = vmatprep.mubr.f32.mxu0 0.0
      %2302 = vmatmul.mubr.f32.gmra.mrb[0].mxu0 %v2199
      %v2303 = vpop.f32.mrb[0].mxu0
      %v2304 = vadd.f32 0.0, %v2303
      %v2305 = vpop.f32.mrb[0].mxu0
      %v2306 = vadd.f32 0.0, %v2305
      %2307 = vmatprep.mubr.f32.mxu0 0.0
      %2308 = vmatmul.mubr.f32.gmra.mrb[0].mxu0 %v2202
      %v2309 = vpop.f32.mrb[0].mxu0
      %v2310 = vadd.f32 0.0, %v2309
      %v2311 = vpop.f32.mrb[0].mxu0
      %v2312 = vadd.f32 0.0, %v2311
      %2313 = vmatprep.mubr.f32.mxu0 0.0
      %2314 = vmatmul.mubr.f32.gmra.mrb[0].mxu0 %v2205
      %v2315 = vpop.f32.mrb[0].mxu0
      %v2316 = vadd.f32 0.0, %v2315
      %v2317 = vpop.f32.mrb[0].mxu0
      %v2318 = vadd.f32 0.0, %v2317
      %2319 = vdwg.mxu0
      %v2320 = vadd.f32 %v2126, %v2274
      %v2321 = vadd.f32 %v2127, %v2276
      %v2322 = vadd.f32 %v2128, %v2280
      %v2323 = vadd.f32 %v2129, %v2282
      %v2324 = vadd.f32 %v2130, %v2286
      %v2325 = vadd.f32 %v2131, %v2288
      %v2326 = vadd.f32 %v2132, %v2292
      %v2327 = vadd.f32 %v2133, %v2294
      %v2328 = vadd.f32 %v2134, %v2298
      %v2329 = vadd.f32 %v2135, %v2300
      %v2330 = vadd.f32 %v2136, %v2304
      %v2331 = vadd.f32 %v2137, %v2306
      %v2332 = vadd.f32 %v2138, %v2310
      %v2333 = vadd.f32 %v2139, %v2312
      %v2334 = vadd.f32 %v2140, %v2316
      %v2335 = vadd.f32 %v2141, %v2318
      %s2336 = scalar_lea.vmem %s4, 256
      %v2337 = vld [vmem:[%s2336] sm:$0xff]
      %v2338 = vld [vmem:[%s2336 + $0x8] sm:$0xff]
      %v2339 = vld [vmem:[%s2336 + $0x10] sm:$0xff]
      %v2340 = vld [vmem:[%s2336 + $0x18] sm:$0xff]
      %v2341 = vld [vmem:[%s2336 + $0x20] sm:$0xff]
      %v2342 = vld [vmem:[%s2336 + $0x28] sm:$0xff]
      %v2343 = vld [vmem:[%s2336 + $0x30] sm:$0xff]
      %v2344 = vld [vmem:[%s2336 + $0x38] sm:$0xff]
      %v2346 = vsel %vm1673, %v2337, 0
      %v2349 = vsel %vm1673, %v2338, 0
      %v2352 = vsel %vm1673, %v2339, 0
      %v2355 = vsel %vm1673, %v2340, 0
      %v2358 = vsel %vm1673, %v2341, 0
      %v2361 = vsel %vm1673, %v2342, 0
      %v2364 = vsel %vm1673, %v2343, 0
      %v2367 = vsel %vm1673, %v2344, 0
      %2369 = vmatprep.subr.mxu0 %v1585
      %2370 = vmatpush1.msra.mxu0 %v1584
      %2371 = vmatprep.subr.mxu0 %v1587
      %2372 = vmatpush1.msra.mxu0 %v1586
      %2373 = vmatprep.subr.mxu0 %v1589
      %2374 = vmatpush1.msra.mxu0 %v1588
      %2375 = vmatprep.subr.mxu0 %v1591
      %2376 = vmatpush1.msra.mxu0 %v1590
      %2377 = vmatprep.subr.mxu0 0.0
      %2378 = vmatpush1.msra.mxu0 0.0
      %2379 = vmatprep.subr.mxu0 0.0
      %2380 = vmatpush1.msra.mxu0 0.0
      %2381 = vmatprep.subr.mxu0 0.0
      %2382 = vmatpush1.msra.mxu0 0.0
      %2383 = vmatprep.subr.mxu0 0.0
      %2384 = vmatpush1.msra.mxu0 0.0
      %2385 = vmatprep.subr.mxu0 0.0
      %2386 = vmatpush1.msra.mxu0 0.0
      %2387 = vmatprep.subr.mxu0 0.0
      %2388 = vmatpush1.msra.mxu0 0.0
      %2389 = vmatprep.subr.mxu0 0.0
      %2390 = vmatpush1.msra.mxu0 0.0
      %2391 = vmatprep.subr.mxu0 0.0
      %2392 = vmatpush1.msra.mxu0 0.0
      %2393 = vmatprep.subr.mxu0 0.0
      %2394 = vmatpush1.msra.mxu0 0.0
      %2395 = vmatprep.subr.mxu0 0.0
      %2396 = vmatpush1.msra.mxu0 0.0
      %2397 = vmatprep.subr.mxu0 0.0
      %2398 = vmatpush1.msra.mxu0 0.0
      %2399 = vmatprep.subr.mxu0 0.0
      %2400 = vmatpush1.msra.mxu0 0.0
      %2401 = vmatprep.subr.mxu0 0.0
      %2402 = vmatpush1.msra.mxu0 0.0
      %2403 = vmatprep.subr.mxu0 0.0
      %2404 = vmatpush1.msra.mxu0 0.0
      %2405 = vmatprep.subr.mxu0 0.0
      %2406 = vmatpush1.msra.mxu0 0.0
      %2407 = vmatprep.subr.mxu0 0.0
      %2408 = vmatpush1.msra.mxu0 0.0
      %2409 = vmatprep.subr.mxu0 0.0
      %2410 = vmatpush1.msra.mxu0 0.0
      %2411 = vmatprep.subr.mxu0 0.0
      %2412 = vmatpush1.msra.mxu0 0.0
      %2413 = vmatprep.subr.mxu0 0.0
      %2414 = vmatpush1.msra.mxu0 0.0
      %2415 = vmatprep.subr.mxu0 0.0
      %2416 = vmatpush1.msra.mxu0 0.0
      %2417 = vmatprep.subr.mxu0 0.0
      %2418 = vmatpush1.msra.mxu0 0.0
      %2419 = vmatprep.subr.mxu0 0.0
      %2420 = vmatpush1.msra.mxu0 0.0
      %2421 = vmatprep.subr.mxu0 0.0
      %2422 = vmatpush1.msra.mxu0 0.0
      %2423 = vmatprep.subr.mxu0 0.0
      %2424 = vmatpush1.msra.mxu0 0.0
      %2425 = vmatprep.subr.mxu0 0.0
      %2426 = vmatpush1.msra.mxu0 0.0
      %2427 = vmatprep.subr.mxu0 0.0
      %2428 = vmatpush1.msra.mxu0 0.0
      %2429 = vmatprep.subr.mxu0 0.0
      %2430 = vmatpush1.msra.mxu0 0.0
      %2431 = vmatprep.subr.mxu0 0.0
      %2432 = vmatpush1.msra.mxu0 0.0
      %2433 = vmatprep.mubr.f32.mxu0 0.0
      %2434 = vmatmul.mubr.f32.gmra.mrb[0].mxu0 %v2346
      %v2435 = vpop.f32.mrb[0].mxu0
      %v2436 = vadd.f32 0.0, %v2435
      %v2437 = vpop.f32.mrb[0].mxu0
      %v2438 = vadd.f32 0.0, %v2437
      %2439 = vmatprep.mubr.f32.mxu0 0.0
      %2440 = vmatmul.mubr.f32.gmra.mrb[0].mxu0 %v2349
      %v2441 = vpop.f32.mrb[0].mxu0
      %v2442 = vadd.f32 0.0, %v2441
      %v2443 = vpop.f32.mrb[0].mxu0
      %v2444 = vadd.f32 0.0, %v2443
      %2445 = vmatprep.mubr.f32.mxu0 0.0
      %2446 = vmatmul.mubr.f32.gmra.mrb[0].mxu0 %v2352
      %v2447 = vpop.f32.mrb[0].mxu0
      %v2448 = vadd.f32 0.0, %v2447
      %v2449 = vpop.f32.mrb[0].mxu0
      %v2450 = vadd.f32 0.0, %v2449
      %2451 = vmatprep.mubr.f32.mxu0 0.0
      %2452 = vmatmul.mubr.f32.gmra.mrb[0].mxu0 %v2355
      %v2453 = vpop.f32.mrb[0].mxu0
      %v2454 = vadd.f32 0.0, %v2453
      %v2455 = vpop.f32.mrb[0].mxu0
      %v2456 = vadd.f32 0.0, %v2455
      %2457 = vmatprep.mubr.f32.mxu0 0.0
      %2458 = vmatmul.mubr.f32.gmra.mrb[0].mxu0 %v2358
      %v2459 = vpop.f32.mrb[0].mxu0
      %v2460 = vadd.f32 0.0, %v2459
      %v2461 = vpop.f32.mrb[0].mxu0
      %v2462 = vadd.f32 0.0, %v2461
      %2463 = vmatprep.mubr.f32.mxu0 0.0
      %2464 = vmatmul.mubr.f32.gmra.mrb[0].mxu0 %v2361
      %v2465 = vpop.f32.mrb[0].mxu0
      %v2466 = vadd.f32 0.0, %v2465
      %v2467 = vpop.f32.mrb[0].mxu0
      %v2468 = vadd.f32 0.0, %v2467
      %2469 = vmatprep.mubr.f32.mxu0 0.0
      %2470 = vmatmul.mubr.f32.gmra.mrb[0].mxu0 %v2364
      %v2471 = vpop.f32.mrb[0].mxu0
      %v2472 = vadd.f32 0.0, %v2471
      %v2473 = vpop.f32.mrb[0].mxu0
      %v2474 = vadd.f32 0.0, %v2473
      %2475 = vmatprep.mubr.f32.mxu0 0.0
      %2476 = vmatmul.mubr.f32.gmra.mrb[0].mxu0 %v2367
      %v2477 = vpop.f32.mrb[0].mxu0
      %v2478 = vadd.f32 0.0, %v2477
      %v2479 = vpop.f32.mrb[0].mxu0
      %v2480 = vadd.f32 0.0, %v2479
      %2481 = vdwg.mxu0
      %v2482 = vadd.f32 %v2320, %v2436
      %v2483 = vadd.f32 %v2321, %v2438
      %v2484 = vadd.f32 %v2322, %v2442
      %v2485 = vadd.f32 %v2323, %v2444
      %v2486 = vadd.f32 %v2324, %v2448
      %v2487 = vadd.f32 %v2325, %v2450
      %v2488 = vadd.f32 %v2326, %v2454
      %v2489 = vadd.f32 %v2327, %v2456
      %v2490 = vadd.f32 %v2328, %v2460
      %v2491 = vadd.f32 %v2329, %v2462
      %v2492 = vadd.f32 %v2330, %v2466
      %v2493 = vadd.f32 %v2331, %v2468
      %v2494 = vadd.f32 %v2332, %v2472
      %v2495 = vadd.f32 %v2333, %v2474
      %v2496 = vadd.f32 %v2334, %v2478
      %v2497 = vadd.f32 %v2335, %v2480
      %2498 = vrot.lane.b32.xlu0 %v1584, 127
      %v2499 = vpop.permute.xlu0 %2498
      %2500 = vrot.lane.b32.xlu0 %v1586, 127
      %v2501 = vpop.permute.xlu0 %2500
      %2502 = vrot.lane.b32.xlu0 %v1588, 127
      %v2503 = vpop.permute.xlu0 %2502
      %2504 = vrot.lane.b32.xlu0 %v1590, 127
      %v2505 = vpop.permute.xlu0 %2504
      %2506 = vrot.lane.b32.xlu0 %v1585, 127
      %v2507 = vpop.permute.xlu0 %2506
      %2508 = vrot.lane.b32.xlu0 %v1587, 127
      %v2509 = vpop.permute.xlu0 %2508
      %2510 = vrot.lane.b32.xlu0 %v1589, 127
      %v2511 = vpop.permute.xlu0 %2510
      %2512 = vrot.lane.b32.xlu0 %v1591, 127
      %v2513 = vpop.permute.xlu0 %2512
      %v2514 = vsel %vm1012, %v2499, %v2507
      %v2515 = vsel %vm1012, %v2501, %v2509
      %v2516 = vsel %vm1012, %v2503, %v2511
      %v2517 = vsel %vm1012, %v2505, %v2513
      %v2518 = vsel %vm1012, %v2507, %v2499
      %v2519 = vsel %vm1012, %v2509, %v2501
      %v2520 = vsel %vm1012, %v2511, %v2503
      %v2521 = vsel %vm1012, %v2513, %v2505
      %v2522 = vmul.f32 %v2514, %v1021
      %v2523 = vmul.f32 %v2518, %v1025
      %v2524 = vmul.f32 %v2515, %v1021
      %v2525 = vmul.f32 %v2519, %v1025
      %v2526 = vmul.f32 %v2516, %v1021
      %v2527 = vmul.f32 %v2520, %v1025
      %v2528 = vmul.f32 %v2517, %v1021
      %v2529 = vmul.f32 %v2521, %v1025
      %s2530 = scalar_lea.vmem %s4, 320
      %v2531 = vld [vmem:[%s2530] sm:$0xff]
      %v2532 = vld [vmem:[%s2530 + $0x8] sm:$0xff]
      %v2533 = vld [vmem:[%s2530 + $0x10] sm:$0xff]
      %v2534 = vld [vmem:[%s2530 + $0x18] sm:$0xff]
      %v2535 = vld [vmem:[%s2530 + $0x20] sm:$0xff]
      %v2536 = vld [vmem:[%s2530 + $0x28] sm:$0xff]
      %v2537 = vld [vmem:[%s2530 + $0x30] sm:$0xff]
      %v2538 = vld [vmem:[%s2530 + $0x38] sm:$0xff]
      %v2540 = vsel %vm1673, %v2531, 0
      %v2543 = vsel %vm1673, %v2532, 0
      %v2546 = vsel %vm1673, %v2533, 0
      %v2549 = vsel %vm1673, %v2534, 0
      %v2552 = vsel %vm1673, %v2535, 0
      %v2555 = vsel %vm1673, %v2536, 0
      %v2558 = vsel %vm1673, %v2537, 0
      %v2561 = vsel %vm1673, %v2538, 0
      %2563 = vmatprep.subr.mxu0 %v2523
      %2564 = vmatpush1.msra.mxu0 %v2522
      %2565 = vmatprep.subr.mxu0 %v2525
      %2566 = vmatpush1.msra.mxu0 %v2524
      %2567 = vmatprep.subr.mxu0 %v2527
      %2568 = vmatpush1.msra.mxu0 %v2526
      %2569 = vmatprep.subr.mxu0 %v2529
      %2570 = vmatpush1.msra.mxu0 %v2528
      %2571 = vmatprep.subr.mxu0 0.0
      %2572 = vmatpush1.msra.mxu0 0.0
      %2573 = vmatprep.subr.mxu0 0.0
      %2574 = vmatpush1.msra.mxu0 0.0
      %2575 = vmatprep.subr.mxu0 0.0
      %2576 = vmatpush1.msra.mxu0 0.0
      %2577 = vmatprep.subr.mxu0 0.0
      %2578 = vmatpush1.msra.mxu0 0.0
      %2579 = vmatprep.subr.mxu0 0.0
      %2580 = vmatpush1.msra.mxu0 0.0
      %2581 = vmatprep.subr.mxu0 0.0
      %2582 = vmatpush1.msra.mxu0 0.0
      %2583 = vmatprep.subr.mxu0 0.0
      %2584 = vmatpush1.msra.mxu0 0.0
      %2585 = vmatprep.subr.mxu0 0.0
      %2586 = vmatpush1.msra.mxu0 0.0
      %2587 = vmatprep.subr.mxu0 0.0
      %2588 = vmatpush1.msra.mxu0 0.0
      %2589 = vmatprep.subr.mxu0 0.0
      %2590 = vmatpush1.msra.mxu0 0.0
      %2591 = vmatprep.subr.mxu0 0.0
      %2592 = vmatpush1.msra.mxu0 0.0
      %2593 = vmatprep.subr.mxu0 0.0
      %2594 = vmatpush1.msra.mxu0 0.0
      %2595 = vmatprep.subr.mxu0 0.0
      %2596 = vmatpush1.msra.mxu0 0.0
      %2597 = vmatprep.subr.mxu0 0.0
      %2598 = vmatpush1.msra.mxu0 0.0
      %2599 = vmatprep.subr.mxu0 0.0
      %2600 = vmatpush1.msra.mxu0 0.0
      %2601 = vmatprep.subr.mxu0 0.0
      %2602 = vmatpush1.msra.mxu0 0.0
      %2603 = vmatprep.subr.mxu0 0.0
      %2604 = vmatpush1.msra.mxu0 0.0
      %2605 = vmatprep.subr.mxu0 0.0
      %2606 = vmatpush1.msra.mxu0 0.0
      %2607 = vmatprep.subr.mxu0 0.0
      %2608 = vmatpush1.msra.mxu0 0.0
      %2609 = vmatprep.subr.mxu0 0.0
      %2610 = vmatpush1.msra.mxu0 0.0
      %2611 = vmatprep.subr.mxu0 0.0
      %2612 = vmatpush1.msra.mxu0 0.0
      %2613 = vmatprep.subr.mxu0 0.0
      %2614 = vmatpush1.msra.mxu0 0.0
      %2615 = vmatprep.subr.mxu0 0.0
      %2616 = vmatpush1.msra.mxu0 0.0
      %2617 = vmatprep.subr.mxu0 0.0
      %2618 = vmatpush1.msra.mxu0 0.0
      %2619 = vmatprep.subr.mxu0 0.0
      %2620 = vmatpush1.msra.mxu0 0.0
      %2621 = vmatprep.subr.mxu0 0.0
      %2622 = vmatpush1.msra.mxu0 0.0
      %2623 = vmatprep.subr.mxu0 0.0
      %2624 = vmatpush1.msra.mxu0 0.0
      %2625 = vmatprep.subr.mxu0 0.0
      %2626 = vmatpush1.msra.mxu0 0.0
      %2627 = vmatprep.mubr.f32.mxu0 0.0
      %2628 = vmatmul.mubr.f32.gmra.mrb[0].mxu0 %v2540
      %v2629 = vpop.f32.mrb[0].mxu0
      %v2630 = vadd.f32 0.0, %v2629
      %v2631 = vpop.f32.mrb[0].mxu0
      %v2632 = vadd.f32 0.0, %v2631
      %2633 = vmatprep.mubr.f32.mxu0 0.0
      %2634 = vmatmul.mubr.f32.gmra.mrb[0].mxu0 %v2543
      %v2635 = vpop.f32.mrb[0].mxu0
      %v2636 = vadd.f32 0.0, %v2635
      %v2637 = vpop.f32.mrb[0].mxu0
      %v2638 = vadd.f32 0.0, %v2637
      %2639 = vmatprep.mubr.f32.mxu0 0.0
      %2640 = vmatmul.mubr.f32.gmra.mrb[0].mxu0 %v2546
      %v2641 = vpop.f32.mrb[0].mxu0
      %v2642 = vadd.f32 0.0, %v2641
      %v2643 = vpop.f32.mrb[0].mxu0
      %v2644 = vadd.f32 0.0, %v2643
      %2645 = vmatprep.mubr.f32.mxu0 0.0
      %2646 = vmatmul.mubr.f32.gmra.mrb[0].mxu0 %v2549
      %v2647 = vpop.f32.mrb[0].mxu0
      %v2648 = vadd.f32 0.0, %v2647
      %v2649 = vpop.f32.mrb[0].mxu0
      %v2650 = vadd.f32 0.0, %v2649
      %2651 = vmatprep.mubr.f32.mxu0 0.0
      %2652 = vmatmul.mubr.f32.gmra.mrb[0].mxu0 %v2552
      %v2653 = vpop.f32.mrb[0].mxu0
      %v2654 = vadd.f32 0.0, %v2653
      %v2655 = vpop.f32.mrb[0].mxu0
      %v2656 = vadd.f32 0.0, %v2655
      %2657 = vmatprep.mubr.f32.mxu0 0.0
      %2658 = vmatmul.mubr.f32.gmra.mrb[0].mxu0 %v2555
      %v2659 = vpop.f32.mrb[0].mxu0
      %v2660 = vadd.f32 0.0, %v2659
      %v2661 = vpop.f32.mrb[0].mxu0
      %v2662 = vadd.f32 0.0, %v2661
      %2663 = vmatprep.mubr.f32.mxu0 0.0
      %2664 = vmatmul.mubr.f32.gmra.mrb[0].mxu0 %v2558
      %v2665 = vpop.f32.mrb[0].mxu0
      %v2666 = vadd.f32 0.0, %v2665
      %v2667 = vpop.f32.mrb[0].mxu0
      %v2668 = vadd.f32 0.0, %v2667
      %2669 = vmatprep.mubr.f32.mxu0 0.0
      %2670 = vmatmul.mubr.f32.gmra.mrb[0].mxu0 %v2561
      %v2671 = vpop.f32.mrb[0].mxu0
      %v2672 = vadd.f32 0.0, %v2671
      %v2673 = vpop.f32.mrb[0].mxu0
      %v2674 = vadd.f32 0.0, %v2673
      %2675 = vdwg.mxu0
      %v2676 = vadd.f32 %v2482, %v2630
      %v2677 = vadd.f32 %v2483, %v2632
      %v2678 = vadd.f32 %v2484, %v2636
      %v2679 = vadd.f32 %v2485, %v2638
      %v2680 = vadd.f32 %v2486, %v2642
      %v2681 = vadd.f32 %v2487, %v2644
      %v2682 = vadd.f32 %v2488, %v2648
      %v2683 = vadd.f32 %v2489, %v2650
      %v2684 = vadd.f32 %v2490, %v2654
      %v2685 = vadd.f32 %v2491, %v2656
      %v2686 = vadd.f32 %v2492, %v2660
      %v2687 = vadd.f32 %v2493, %v2662
      %v2688 = vadd.f32 %v2494, %v2666
      %v2689 = vadd.f32 %v2495, %v2668
      %v2690 = vadd.f32 %v2496, %v2672
      %v2691 = vadd.f32 %v2497, %v2674
      %2692 = vrot.lane.b32.xlu0 %v1584, 113
      %v2693 = vpop.permute.xlu0 %2692
      %2694 = vrot.lane.b32.xlu0 %v1586, 113
      %v2695 = vpop.permute.xlu0 %2694
      %2696 = vrot.lane.b32.xlu0 %v1588, 113
      %v2697 = vpop.permute.xlu0 %2696
      %2698 = vrot.lane.b32.xlu0 %v1590, 113
      %v2699 = vpop.permute.xlu0 %2698
      %2700 = vrot.lane.b32.xlu0 %v1585, 113
      %v2701 = vpop.permute.xlu0 %2700
      %2702 = vrot.lane.b32.xlu0 %v1587, 113
      %v2703 = vpop.permute.xlu0 %2702
      %2704 = vrot.lane.b32.xlu0 %v1589, 113
      %v2705 = vpop.permute.xlu0 %2704
      %2706 = vrot.lane.b32.xlu0 %v1591, 113
      %v2707 = vpop.permute.xlu0 %2706
      %v2708 = vsel %vm1148, %v2693, %v2701
      %v2709 = vsel %vm1148, %v2695, %v2703
      %v2710 = vsel %vm1148, %v2697, %v2705
      %v2711 = vsel %vm1148, %v2699, %v2707
      %v2712 = vsel %vm1148, %v2701, %v2693
      %v2713 = vsel %vm1148, %v2703, %v2695
      %v2714 = vsel %vm1148, %v2705, %v2697
      %v2715 = vsel %vm1148, %v2707, %v2699
      %v2716 = vmul.f32 %v2708, %v1157
      %v2717 = vmul.f32 %v2712, %v1161
      %v2718 = vmul.f32 %v2709, %v1157
      %v2719 = vmul.f32 %v2713, %v1161
      %v2720 = vmul.f32 %v2710, %v1157
      %v2721 = vmul.f32 %v2714, %v1161
      %v2722 = vmul.f32 %v2711, %v1157
      %v2723 = vmul.f32 %v2715, %v1161
      %s2724 = scalar_lea.vmem %s4, 384
      %v2725 = vld [vmem:[%s2724] sm:$0xff]
      %v2726 = vld [vmem:[%s2724 + $0x8] sm:$0xff]
      %v2727 = vld [vmem:[%s2724 + $0x10] sm:$0xff]
      %v2728 = vld [vmem:[%s2724 + $0x18] sm:$0xff]
      %v2729 = vld [vmem:[%s2724 + $0x20] sm:$0xff]
      %v2730 = vld [vmem:[%s2724 + $0x28] sm:$0xff]
      %v2731 = vld [vmem:[%s2724 + $0x30] sm:$0xff]
      %v2732 = vld [vmem:[%s2724 + $0x38] sm:$0xff]
      %v2734 = vsel %vm1673, %v2725, 0
      %v2737 = vsel %vm1673, %v2726, 0
      %v2740 = vsel %vm1673, %v2727, 0
      %v2743 = vsel %vm1673, %v2728, 0
      %v2746 = vsel %vm1673, %v2729, 0
      %v2749 = vsel %vm1673, %v2730, 0
      %v2752 = vsel %vm1673, %v2731, 0
      %v2755 = vsel %vm1673, %v2732, 0
      %2757 = vmatprep.subr.mxu0 %v2717
      %2758 = vmatpush1.msra.mxu0 %v2716
      %2759 = vmatprep.subr.mxu0 %v2719
      %2760 = vmatpush1.msra.mxu0 %v2718
      %2761 = vmatprep.subr.mxu0 %v2721
      %2762 = vmatpush1.msra.mxu0 %v2720
      %2763 = vmatprep.subr.mxu0 %v2723
      %2764 = vmatpush1.msra.mxu0 %v2722
      %2765 = vmatprep.subr.mxu0 0.0
      %2766 = vmatpush1.msra.mxu0 0.0
      %2767 = vmatprep.subr.mxu0 0.0
      %2768 = vmatpush1.msra.mxu0 0.0
      %2769 = vmatprep.subr.mxu0 0.0
      %2770 = vmatpush1.msra.mxu0 0.0
      %2771 = vmatprep.subr.mxu0 0.0
      %2772 = vmatpush1.msra.mxu0 0.0
      %2773 = vmatprep.subr.mxu0 0.0
      %2774 = vmatpush1.msra.mxu0 0.0
      %2775 = vmatprep.subr.mxu0 0.0
      %2776 = vmatpush1.msra.mxu0 0.0
      %2777 = vmatprep.subr.mxu0 0.0
      %2778 = vmatpush1.msra.mxu0 0.0
      %2779 = vmatprep.subr.mxu0 0.0
      %2780 = vmatpush1.msra.mxu0 0.0
      %2781 = vmatprep.subr.mxu0 0.0
      %2782 = vmatpush1.msra.mxu0 0.0
      %2783 = vmatprep.subr.mxu0 0.0
      %2784 = vmatpush1.msra.mxu0 0.0
      %2785 = vmatprep.subr.mxu0 0.0
      %2786 = vmatpush1.msra.mxu0 0.0
      %2787 = vmatprep.subr.mxu0 0.0
      %2788 = vmatpush1.msra.mxu0 0.0
      %2789 = vmatprep.subr.mxu0 0.0
      %2790 = vmatpush1.msra.mxu0 0.0
      %2791 = vmatprep.subr.mxu0 0.0
      %2792 = vmatpush1.msra.mxu0 0.0
      %2793 = vmatprep.subr.mxu0 0.0
      %2794 = vmatpush1.msra.mxu0 0.0
      %2795 = vmatprep.subr.mxu0 0.0
      %2796 = vmatpush1.msra.mxu0 0.0
      %2797 = vmatprep.subr.mxu0 0.0
      %2798 = vmatpush1.msra.mxu0 0.0
      %2799 = vmatprep.subr.mxu0 0.0
      %2800 = vmatpush1.msra.mxu0 0.0
      %2801 = vmatprep.subr.mxu0 0.0
      %2802 = vmatpush1.msra.mxu0 0.0
      %2803 = vmatprep.subr.mxu0 0.0
      %2804 = vmatpush1.msra.mxu0 0.0
      %2805 = vmatprep.subr.mxu0 0.0
      %2806 = vmatpush1.msra.mxu0 0.0
      %2807 = vmatprep.subr.mxu0 0.0
      %2808 = vmatpush1.msra.mxu0 0.0
      %2809 = vmatprep.subr.mxu0 0.0
      %2810 = vmatpush1.msra.mxu0 0.0
      %2811 = vmatprep.subr.mxu0 0.0
      %2812 = vmatpush1.msra.mxu0 0.0
      %2813 = vmatprep.subr.mxu0 0.0
      %2814 = vmatpush1.msra.mxu0 0.0
      %2815 = vmatprep.subr.mxu0 0.0
      %2816 = vmatpush1.msra.mxu0 0.0
      %2817 = vmatprep.subr.mxu0 0.0
      %2818 = vmatpush1.msra.mxu0 0.0
      %2819 = vmatprep.subr.mxu0 0.0
      %2820 = vmatpush1.msra.mxu0 0.0
      %2821 = vmatprep.mubr.f32.mxu0 0.0
      %2822 = vmatmul.mubr.f32.gmra.mrb[0].mxu0 %v2734
      %v2823 = vpop.f32.mrb[0].mxu0
      %v2824 = vadd.f32 0.0, %v2823
      %v2825 = vpop.f32.mrb[0].mxu0
      %v2826 = vadd.f32 0.0, %v2825
      %2827 = vmatprep.mubr.f32.mxu0 0.0
      %2828 = vmatmul.mubr.f32.gmra.mrb[0].mxu0 %v2737
      %v2829 = vpop.f32.mrb[0].mxu0
      %v2830 = vadd.f32 0.0, %v2829
      %v2831 = vpop.f32.mrb[0].mxu0
      %v2832 = vadd.f32 0.0, %v2831
      %2833 = vmatprep.mubr.f32.mxu0 0.0
      %2834 = vmatmul.mubr.f32.gmra.mrb[0].mxu0 %v2740
      %v2835 = vpop.f32.mrb[0].mxu0
      %v2836 = vadd.f32 0.0, %v2835
      %v2837 = vpop.f32.mrb[0].mxu0
      %v2838 = vadd.f32 0.0, %v2837
      %2839 = vmatprep.mubr.f32.mxu0 0.0
      %2840 = vmatmul.mubr.f32.gmra.mrb[0].mxu0 %v2743
      %v2841 = vpop.f32.mrb[0].mxu0
      %v2842 = vadd.f32 0.0, %v2841
      %v2843 = vpop.f32.mrb[0].mxu0
      %v2844 = vadd.f32 0.0, %v2843
      %2845 = vmatprep.mubr.f32.mxu0 0.0
      %2846 = vmatmul.mubr.f32.gmra.mrb[0].mxu0 %v2746
      %v2847 = vpop.f32.mrb[0].mxu0
      %v2848 = vadd.f32 0.0, %v2847
      %v2849 = vpop.f32.mrb[0].mxu0
      %v2850 = vadd.f32 0.0, %v2849
      %2851 = vmatprep.mubr.f32.mxu0 0.0
      %2852 = vmatmul.mubr.f32.gmra.mrb[0].mxu0 %v2749
      %v2853 = vpop.f32.mrb[0].mxu0
      %v2854 = vadd.f32 0.0, %v2853
      %v2855 = vpop.f32.mrb[0].mxu0
      %v2856 = vadd.f32 0.0, %v2855
      %2857 = vmatprep.mubr.f32.mxu0 0.0
      %2858 = vmatmul.mubr.f32.gmra.mrb[0].mxu0 %v2752
      %v2859 = vpop.f32.mrb[0].mxu0
      %v2860 = vadd.f32 0.0, %v2859
      %v2861 = vpop.f32.mrb[0].mxu0
      %v2862 = vadd.f32 0.0, %v2861
      %2863 = vmatprep.mubr.f32.mxu0 0.0
      %2864 = vmatmul.mubr.f32.gmra.mrb[0].mxu0 %v2755
      %v2865 = vpop.f32.mrb[0].mxu0
      %v2866 = vadd.f32 0.0, %v2865
      %v2867 = vpop.f32.mrb[0].mxu0
      %v2868 = vadd.f32 0.0, %v2867
      %2869 = vdwg.mxu0
      %v2870 = vadd.f32 %v2676, %v2824
      %v2871 = vadd.f32 %v2677, %v2826
      %v2872 = vadd.f32 %v2678, %v2830
      %v2873 = vadd.f32 %v2679, %v2832
      %v2874 = vadd.f32 %v2680, %v2836
      %v2875 = vadd.f32 %v2681, %v2838
      %v2876 = vadd.f32 %v2682, %v2842
      %v2877 = vadd.f32 %v2683, %v2844
      %v2878 = vadd.f32 %v2684, %v2848
      %v2879 = vadd.f32 %v2685, %v2850
      %v2880 = vadd.f32 %v2686, %v2854
      %v2881 = vadd.f32 %v2687, %v2856
      %v2882 = vadd.f32 %v2688, %v2860
      %v2883 = vadd.f32 %v2689, %v2862
      %v2884 = vadd.f32 %v2690, %v2866
      %v2885 = vadd.f32 %v2691, %v2868
      %2886 = vrot.lane.b32.xlu0 %v1584, 112
      %v2887 = vpop.permute.xlu0 %2886
      %2888 = vrot.lane.b32.xlu0 %v1586, 112
      %v2889 = vpop.permute.xlu0 %2888
      %2890 = vrot.lane.b32.xlu0 %v1588, 112
      %v2891 = vpop.permute.xlu0 %2890
      %2892 = vrot.lane.b32.xlu0 %v1590, 112
      %v2893 = vpop.permute.xlu0 %2892
      %2894 = vrot.lane.b32.xlu0 %v1585, 112
      %v2895 = vpop.permute.xlu0 %2894
      %2896 = vrot.lane.b32.xlu0 %v1587, 112
      %v2897 = vpop.permute.xlu0 %2896
      %2898 = vrot.lane.b32.xlu0 %v1589, 112
      %v2899 = vpop.permute.xlu0 %2898
      %2900 = vrot.lane.b32.xlu0 %v1591, 112
      %v2901 = vpop.permute.xlu0 %2900
      %v2902 = vsel %vm1284, %v2887, %v2895
      %v2903 = vsel %vm1284, %v2889, %v2897
      %v2904 = vsel %vm1284, %v2891, %v2899
      %v2905 = vsel %vm1284, %v2893, %v2901
      %v2906 = vsel %vm1284, %v2895, %v2887
      %v2907 = vsel %vm1284, %v2897, %v2889
      %v2908 = vsel %vm1284, %v2899, %v2891
      %v2909 = vsel %vm1284, %v2901, %v2893
      %v2910 = vmul.f32 %v2902, %v1293
      %v2911 = vmul.f32 %v2906, %v1297
      %v2912 = vmul.f32 %v2903, %v1293
      %v2913 = vmul.f32 %v2907, %v1297
      %v2914 = vmul.f32 %v2904, %v1293
      %v2915 = vmul.f32 %v2908, %v1297
      %v2916 = vmul.f32 %v2905, %v1293
      %v2917 = vmul.f32 %v2909, %v1297
      %s2918 = scalar_lea.vmem %s4, 448
      %v2919 = vld [vmem:[%s2918] sm:$0xff]
      %v2920 = vld [vmem:[%s2918 + $0x8] sm:$0xff]
      %v2921 = vld [vmem:[%s2918 + $0x10] sm:$0xff]
      %v2922 = vld [vmem:[%s2918 + $0x18] sm:$0xff]
      %v2923 = vld [vmem:[%s2918 + $0x20] sm:$0xff]
      %v2924 = vld [vmem:[%s2918 + $0x28] sm:$0xff]
      %v2925 = vld [vmem:[%s2918 + $0x30] sm:$0xff]
      %v2926 = vld [vmem:[%s2918 + $0x38] sm:$0xff]
      %v2928 = vsel %vm1673, %v2919, 0
      %v2931 = vsel %vm1673, %v2920, 0
      %v2934 = vsel %vm1673, %v2921, 0
      %v2937 = vsel %vm1673, %v2922, 0
      %v2940 = vsel %vm1673, %v2923, 0
      %v2943 = vsel %vm1673, %v2924, 0
      %v2946 = vsel %vm1673, %v2925, 0
      %v2949 = vsel %vm1673, %v2926, 0
      %2951 = vmatprep.subr.mxu0 %v2911
      %2952 = vmatpush1.msra.mxu0 %v2910
      %2953 = vmatprep.subr.mxu0 %v2913
      %2954 = vmatpush1.msra.mxu0 %v2912
      %2955 = vmatprep.subr.mxu0 %v2915
      %2956 = vmatpush1.msra.mxu0 %v2914
      %2957 = vmatprep.subr.mxu0 %v2917
      %2958 = vmatpush1.msra.mxu0 %v2916
      %2959 = vmatprep.subr.mxu0 0.0
      %2960 = vmatpush1.msra.mxu0 0.0
      %2961 = vmatprep.subr.mxu0 0.0
      %2962 = vmatpush1.msra.mxu0 0.0
      %2963 = vmatprep.subr.mxu0 0.0
      %2964 = vmatpush1.msra.mxu0 0.0
      %2965 = vmatprep.subr.mxu0 0.0
      %2966 = vmatpush1.msra.mxu0 0.0
      %2967 = vmatprep.subr.mxu0 0.0
      %2968 = vmatpush1.msra.mxu0 0.0
      %2969 = vmatprep.subr.mxu0 0.0
      %2970 = vmatpush1.msra.mxu0 0.0
      %2971 = vmatprep.subr.mxu0 0.0
      %2972 = vmatpush1.msra.mxu0 0.0
      %2973 = vmatprep.subr.mxu0 0.0
      %2974 = vmatpush1.msra.mxu0 0.0
      %2975 = vmatprep.subr.mxu0 0.0
      %2976 = vmatpush1.msra.mxu0 0.0
      %2977 = vmatprep.subr.mxu0 0.0
      %2978 = vmatpush1.msra.mxu0 0.0
      %2979 = vmatprep.subr.mxu0 0.0
      %2980 = vmatpush1.msra.mxu0 0.0
      %2981 = vmatprep.subr.mxu0 0.0
      %2982 = vmatpush1.msra.mxu0 0.0
      %2983 = vmatprep.subr.mxu0 0.0
      %2984 = vmatpush1.msra.mxu0 0.0
      %2985 = vmatprep.subr.mxu0 0.0
      %2986 = vmatpush1.msra.mxu0 0.0
      %2987 = vmatprep.subr.mxu0 0.0
      %2988 = vmatpush1.msra.mxu0 0.0
      %2989 = vmatprep.subr.mxu0 0.0
      %2990 = vmatpush1.msra.mxu0 0.0
      %2991 = vmatprep.subr.mxu0 0.0
      %2992 = vmatpush1.msra.mxu0 0.0
      %2993 = vmatprep.subr.mxu0 0.0
      %2994 = vmatpush1.msra.mxu0 0.0
      %2995 = vmatprep.subr.mxu0 0.0
      %2996 = vmatpush1.msra.mxu0 0.0
      %2997 = vmatprep.subr.mxu0 0.0
      %2998 = vmatpush1.msra.mxu0 0.0
      %2999 = vmatprep.subr.mxu0 0.0
      %3000 = vmatpush1.msra.mxu0 0.0
      %3001 = vmatprep.subr.mxu0 0.0
      %3002 = vmatpush1.msra.mxu0 0.0
      %3003 = vmatprep.subr.mxu0 0.0
      %3004 = vmatpush1.msra.mxu0 0.0
      %3005 = vmatprep.subr.mxu0 0.0
      %3006 = vmatpush1.msra.mxu0 0.0
      %3007 = vmatprep.subr.mxu0 0.0
      %3008 = vmatpush1.msra.mxu0 0.0
      %3009 = vmatprep.subr.mxu0 0.0
      %3010 = vmatpush1.msra.mxu0 0.0
      %3011 = vmatprep.subr.mxu0 0.0
      %3012 = vmatpush1.msra.mxu0 0.0
      %3013 = vmatprep.subr.mxu0 0.0
      %3014 = vmatpush1.msra.mxu0 0.0
      %3015 = vmatprep.mubr.f32.mxu0 0.0
      %3016 = vmatmul.mubr.f32.gmra.mrb[0].mxu0 %v2928
      %v3017 = vpop.f32.mrb[0].mxu0
      %v3018 = vadd.f32 0.0, %v3017
      %v3019 = vpop.f32.mrb[0].mxu0
      %v3020 = vadd.f32 0.0, %v3019
      %3021 = vmatprep.mubr.f32.mxu0 0.0
      %3022 = vmatmul.mubr.f32.gmra.mrb[0].mxu0 %v2931
      %v3023 = vpop.f32.mrb[0].mxu0
      %v3024 = vadd.f32 0.0, %v3023
      %v3025 = vpop.f32.mrb[0].mxu0
      %v3026 = vadd.f32 0.0, %v3025
      %3027 = vmatprep.mubr.f32.mxu0 0.0
      %3028 = vmatmul.mubr.f32.gmra.mrb[0].mxu0 %v2934
      %v3029 = vpop.f32.mrb[0].mxu0
      %v3030 = vadd.f32 0.0, %v3029
      %v3031 = vpop.f32.mrb[0].mxu0
      %v3032 = vadd.f32 0.0, %v3031
      %3033 = vmatprep.mubr.f32.mxu0 0.0
      %3034 = vmatmul.mubr.f32.gmra.mrb[0].mxu0 %v2937
      %v3035 = vpop.f32.mrb[0].mxu0
      %v3036 = vadd.f32 0.0, %v3035
      %v3037 = vpop.f32.mrb[0].mxu0
      %v3038 = vadd.f32 0.0, %v3037
      %3039 = vmatprep.mubr.f32.mxu0 0.0
      %3040 = vmatmul.mubr.f32.gmra.mrb[0].mxu0 %v2940
      %v3041 = vpop.f32.mrb[0].mxu0
      %v3042 = vadd.f32 0.0, %v3041
      %v3043 = vpop.f32.mrb[0].mxu0
      %v3044 = vadd.f32 0.0, %v3043
      %3045 = vmatprep.mubr.f32.mxu0 0.0
      %3046 = vmatmul.mubr.f32.gmra.mrb[0].mxu0 %v2943
      %v3047 = vpop.f32.mrb[0].mxu0
      %v3048 = vadd.f32 0.0, %v3047
      %v3049 = vpop.f32.mrb[0].mxu0
      %v3050 = vadd.f32 0.0, %v3049
      %3051 = vmatprep.mubr.f32.mxu0 0.0
      %3052 = vmatmul.mubr.f32.gmra.mrb[0].mxu0 %v2946
      %v3053 = vpop.f32.mrb[0].mxu0
      %v3054 = vadd.f32 0.0, %v3053
      %v3055 = vpop.f32.mrb[0].mxu0
      %v3056 = vadd.f32 0.0, %v3055
      %3057 = vmatprep.mubr.f32.mxu0 0.0
      %3058 = vmatmul.mubr.f32.gmra.mrb[0].mxu0 %v2949
      %v3059 = vpop.f32.mrb[0].mxu0
      %v3060 = vadd.f32 0.0, %v3059
      %v3061 = vpop.f32.mrb[0].mxu0
      %v3062 = vadd.f32 0.0, %v3061
      %3063 = vdwg.mxu0
      %v3064 = vadd.f32 %v2870, %v3018
      %v3065 = vadd.f32 %v2871, %v3020
      %v3066 = vadd.f32 %v2872, %v3024
      %v3067 = vadd.f32 %v2873, %v3026
      %v3068 = vadd.f32 %v2874, %v3030
      %v3069 = vadd.f32 %v2875, %v3032
      %v3070 = vadd.f32 %v2876, %v3036
      %v3071 = vadd.f32 %v2877, %v3038
      %v3072 = vadd.f32 %v2878, %v3042
      %v3073 = vadd.f32 %v2879, %v3044
      %v3074 = vadd.f32 %v2880, %v3048
      %v3075 = vadd.f32 %v2881, %v3050
      %v3076 = vadd.f32 %v2882, %v3054
      %v3077 = vadd.f32 %v2883, %v3056
      %v3078 = vadd.f32 %v2884, %v3060
      %v3079 = vadd.f32 %v2885, %v3062
      %3080 = vrot.lane.b32.xlu0 %v1584, 111
      %v3081 = vpop.permute.xlu0 %3080
      %3082 = vrot.lane.b32.xlu0 %v1586, 111
      %v3083 = vpop.permute.xlu0 %3082
      %3084 = vrot.lane.b32.xlu0 %v1588, 111
      %v3085 = vpop.permute.xlu0 %3084
      %3086 = vrot.lane.b32.xlu0 %v1590, 111
      %v3087 = vpop.permute.xlu0 %3086
      %3088 = vrot.lane.b32.xlu0 %v1585, 111
      %v3089 = vpop.permute.xlu0 %3088
      %3090 = vrot.lane.b32.xlu0 %v1587, 111
      %v3091 = vpop.permute.xlu0 %3090
      %3092 = vrot.lane.b32.xlu0 %v1589, 111
      %v3093 = vpop.permute.xlu0 %3092
      %3094 = vrot.lane.b32.xlu0 %v1591, 111
      %v3095 = vpop.permute.xlu0 %3094
      %v3096 = vsel %vm1420, %v3081, %v3089
      %v3097 = vsel %vm1420, %v3083, %v3091
      %v3098 = vsel %vm1420, %v3085, %v3093
      %v3099 = vsel %vm1420, %v3087, %v3095
      %v3100 = vsel %vm1420, %v3089, %v3081
      %v3101 = vsel %vm1420, %v3091, %v3083
      %v3102 = vsel %vm1420, %v3093, %v3085
      %v3103 = vsel %vm1420, %v3095, %v3087
      %v3104 = vmul.f32 %v3096, %v1429
      %v3105 = vmul.f32 %v3100, %v1433
      %v3106 = vmul.f32 %v3097, %v1429
      %v3107 = vmul.f32 %v3101, %v1433
      %v3108 = vmul.f32 %v3098, %v1429
      %v3109 = vmul.f32 %v3102, %v1433
      %v3110 = vmul.f32 %v3099, %v1429
      %v3111 = vmul.f32 %v3103, %v1433
      %s3112 = scalar_lea.vmem %s4, 512
      %v3113 = vld [vmem:[%s3112] sm:$0xff]
      %v3114 = vld [vmem:[%s3112 + $0x8] sm:$0xff]
      %v3115 = vld [vmem:[%s3112 + $0x10] sm:$0xff]
      %v3116 = vld [vmem:[%s3112 + $0x18] sm:$0xff]
      %v3117 = vld [vmem:[%s3112 + $0x20] sm:$0xff]
      %v3118 = vld [vmem:[%s3112 + $0x28] sm:$0xff]
      %v3119 = vld [vmem:[%s3112 + $0x30] sm:$0xff]
      %v3120 = vld [vmem:[%s3112 + $0x38] sm:$0xff]
      %v3122 = vsel %vm1673, %v3113, 0
      %v3125 = vsel %vm1673, %v3114, 0
      %v3128 = vsel %vm1673, %v3115, 0
      %v3131 = vsel %vm1673, %v3116, 0
      %v3134 = vsel %vm1673, %v3117, 0
      %v3137 = vsel %vm1673, %v3118, 0
      %v3140 = vsel %vm1673, %v3119, 0
      %v3143 = vsel %vm1673, %v3120, 0
      %3145 = vmatprep.subr.mxu0 %v3105
      %3146 = vmatpush1.msra.mxu0 %v3104
      %3147 = vmatprep.subr.mxu0 %v3107
      %3148 = vmatpush1.msra.mxu0 %v3106
      %3149 = vmatprep.subr.mxu0 %v3109
      %3150 = vmatpush1.msra.mxu0 %v3108
      %3151 = vmatprep.subr.mxu0 %v3111
      %3152 = vmatpush1.msra.mxu0 %v3110
      %3153 = vmatprep.subr.mxu0 0.0
      %3154 = vmatpush1.msra.mxu0 0.0
      %3155 = vmatprep.subr.mxu0 0.0
      %3156 = vmatpush1.msra.mxu0 0.0
      %3157 = vmatprep.subr.mxu0 0.0
      %3158 = vmatpush1.msra.mxu0 0.0
      %3159 = vmatprep.subr.mxu0 0.0
      %3160 = vmatpush1.msra.mxu0 0.0
      %3161 = vmatprep.subr.mxu0 0.0
      %3162 = vmatpush1.msra.mxu0 0.0
      %3163 = vmatprep.subr.mxu0 0.0
      %3164 = vmatpush1.msra.mxu0 0.0
      %3165 = vmatprep.subr.mxu0 0.0
      %3166 = vmatpush1.msra.mxu0 0.0
      %3167 = vmatprep.subr.mxu0 0.0
      %3168 = vmatpush1.msra.mxu0 0.0
      %3169 = vmatprep.subr.mxu0 0.0
      %3170 = vmatpush1.msra.mxu0 0.0
      %3171 = vmatprep.subr.mxu0 0.0
      %3172 = vmatpush1.msra.mxu0 0.0
      %3173 = vmatprep.subr.mxu0 0.0
      %3174 = vmatpush1.msra.mxu0 0.0
      %3175 = vmatprep.subr.mxu0 0.0
      %3176 = vmatpush1.msra.mxu0 0.0
      %3177 = vmatprep.subr.mxu0 0.0
      %3178 = vmatpush1.msra.mxu0 0.0
      %3179 = vmatprep.subr.mxu0 0.0
      %3180 = vmatpush1.msra.mxu0 0.0
      %3181 = vmatprep.subr.mxu0 0.0
      %3182 = vmatpush1.msra.mxu0 0.0
      %3183 = vmatprep.subr.mxu0 0.0
      %3184 = vmatpush1.msra.mxu0 0.0
      %3185 = vmatprep.subr.mxu0 0.0
      %3186 = vmatpush1.msra.mxu0 0.0
      %3187 = vmatprep.subr.mxu0 0.0
      %3188 = vmatpush1.msra.mxu0 0.0
      %3189 = vmatprep.subr.mxu0 0.0
      %3190 = vmatpush1.msra.mxu0 0.0
      %3191 = vmatprep.subr.mxu0 0.0
      %3192 = vmatpush1.msra.mxu0 0.0
      %3193 = vmatprep.subr.mxu0 0.0
      %3194 = vmatpush1.msra.mxu0 0.0
      %3195 = vmatprep.subr.mxu0 0.0
      %3196 = vmatpush1.msra.mxu0 0.0
      %3197 = vmatprep.subr.mxu0 0.0
      %3198 = vmatpush1.msra.mxu0 0.0
      %3199 = vmatprep.subr.mxu0 0.0
      %3200 = vmatpush1.msra.mxu0 0.0
      %3201 = vmatprep.subr.mxu0 0.0
      %3202 = vmatpush1.msra.mxu0 0.0
      %3203 = vmatprep.subr.mxu0 0.0
      %3204 = vmatpush1.msra.mxu0 0.0
      %3205 = vmatprep.subr.mxu0 0.0
      %3206 = vmatpush1.msra.mxu0 0.0
      %3207 = vmatprep.subr.mxu0 0.0
      %3208 = vmatpush1.msra.mxu0 0.0
      %3209 = vmatprep.mubr.f32.mxu0 0.0
      %3210 = vmatmul.mubr.f32.gmra.mrb[0].mxu0 %v3122
      %v3211 = vpop.f32.mrb[0].mxu0
      %v3212 = vadd.f32 0.0, %v3211
      %v3213 = vpop.f32.mrb[0].mxu0
      %v3214 = vadd.f32 0.0, %v3213
      %3215 = vmatprep.mubr.f32.mxu0 0.0
      %3216 = vmatmul.mubr.f32.gmra.mrb[0].mxu0 %v3125
      %v3217 = vpop.f32.mrb[0].mxu0
      %v3218 = vadd.f32 0.0, %v3217
      %v3219 = vpop.f32.mrb[0].mxu0
      %v3220 = vadd.f32 0.0, %v3219
      %3221 = vmatprep.mubr.f32.mxu0 0.0
      %3222 = vmatmul.mubr.f32.gmra.mrb[0].mxu0 %v3128
      %v3223 = vpop.f32.mrb[0].mxu0
      %v3224 = vadd.f32 0.0, %v3223
      %v3225 = vpop.f32.mrb[0].mxu0
      %v3226 = vadd.f32 0.0, %v3225
      %3227 = vmatprep.mubr.f32.mxu0 0.0
      %3228 = vmatmul.mubr.f32.gmra.mrb[0].mxu0 %v3131
      %v3229 = vpop.f32.mrb[0].mxu0
      %v3230 = vadd.f32 0.0, %v3229
      %v3231 = vpop.f32.mrb[0].mxu0
      %v3232 = vadd.f32 0.0, %v3231
      %3233 = vmatprep.mubr.f32.mxu0 0.0
      %3234 = vmatmul.mubr.f32.gmra.mrb[0].mxu0 %v3134
      %v3235 = vpop.f32.mrb[0].mxu0
      %v3236 = vadd.f32 0.0, %v3235
      %v3237 = vpop.f32.mrb[0].mxu0
      %v3238 = vadd.f32 0.0, %v3237
      %3239 = vmatprep.mubr.f32.mxu0 0.0
      %3240 = vmatmul.mubr.f32.gmra.mrb[0].mxu0 %v3137
      %v3241 = vpop.f32.mrb[0].mxu0
      %v3242 = vadd.f32 0.0, %v3241
      %v3243 = vpop.f32.mrb[0].mxu0
      %v3244 = vadd.f32 0.0, %v3243
      %3245 = vmatprep.mubr.f32.mxu0 0.0
      %3246 = vmatmul.mubr.f32.gmra.mrb[0].mxu0 %v3140
      %v3247 = vpop.f32.mrb[0].mxu0
      %v3248 = vadd.f32 0.0, %v3247
      %v3249 = vpop.f32.mrb[0].mxu0
      %v3250 = vadd.f32 0.0, %v3249
      %3251 = vmatprep.mubr.f32.mxu0 0.0
      %3252 = vmatmul.mubr.f32.gmra.mrb[0].mxu0 %v3143
      %v3253 = vpop.f32.mrb[0].mxu0
      %v3254 = vadd.f32 0.0, %v3253
      %v3255 = vpop.f32.mrb[0].mxu0
      %v3256 = vadd.f32 0.0, %v3255
      %3257 = vdwg.mxu0
      %v3258 = vadd.f32 %v3064, %v3212
      %v3259 = vadd.f32 %v3065, %v3214
      %v3260 = vadd.f32 %v3066, %v3218
      %v3261 = vadd.f32 %v3067, %v3220
      %v3262 = vadd.f32 %v3068, %v3224
      %v3263 = vadd.f32 %v3069, %v3226
      %v3264 = vadd.f32 %v3070, %v3230
      %v3265 = vadd.f32 %v3071, %v3232
      %v3266 = vadd.f32 %v3072, %v3236
      %v3267 = vadd.f32 %v3073, %v3238
      %v3268 = vadd.f32 %v3074, %v3242
      %v3269 = vadd.f32 %v3075, %v3244
      %v3270 = vadd.f32 %v3076, %v3248
      %v3271 = vadd.f32 %v3077, %v3250
      %v3272 = vadd.f32 %v3078, %v3254
      %v3273 = vadd.f32 %v3079, %v3256
      %v3274 = vld [vmem:[%s5] sm:$0xff]
      %v3275 = vld [vmem:[%s5 + $0x8] sm:$0xff]
      %v3276 = vld [vmem:[%s5 + $0x10] sm:$0xff]
      %v3277 = vld [vmem:[%s5 + $0x18] sm:$0xff]
      %v3278 = vld [vmem:[%s5 + $0x20] sm:$0xff]
      %v3279 = vld [vmem:[%s5 + $0x28] sm:$0xff]
      %v3280 = vld [vmem:[%s5 + $0x30] sm:$0xff]
      %v3281 = vld [vmem:[%s5 + $0x38] sm:$0xff]
      %3283 = vset.pattern.permute.xlu0 0
      %3284 = vperm.xlu0 %3283, %v3274
      %v3285 = vpop.permute.xlu0 %3284
      %3288 = vset.pattern.permute.xlu0 0
      %3289 = vperm.xlu0 %3288, %v3275
      %v3290 = vpop.permute.xlu0 %3289
      %3293 = vset.pattern.permute.xlu0 0
      %3294 = vperm.xlu0 %3293, %v3276
      %v3295 = vpop.permute.xlu0 %3294
      %3298 = vset.pattern.permute.xlu0 0
      %3299 = vperm.xlu0 %3298, %v3277
      %v3300 = vpop.permute.xlu0 %3299
      %3303 = vset.pattern.permute.xlu0 0
      %3304 = vperm.xlu0 %3303, %v3278
      %v3305 = vpop.permute.xlu0 %3304
      %3308 = vset.pattern.permute.xlu0 0
      %3309 = vperm.xlu0 %3308, %v3279
      %v3310 = vpop.permute.xlu0 %3309
      %3313 = vset.pattern.permute.xlu0 0
      %3314 = vperm.xlu0 %3313, %v3280
      %v3315 = vpop.permute.xlu0 %3314
      %3318 = vset.pattern.permute.xlu0 0
      %3319 = vperm.xlu0 %3318, %v3281
      %v3320 = vpop.permute.xlu0 %3319
      %v3322 = vadd.f32 %v3258, %v3285
      %v3323 = vadd.f32 %v3259, %v3285
      %v3324 = vadd.f32 %v3260, %v3290
      %v3325 = vadd.f32 %v3261, %v3290
      %v3326 = vadd.f32 %v3262, %v3295
      %v3327 = vadd.f32 %v3263, %v3295
      %v3328 = vadd.f32 %v3264, %v3300
      %v3329 = vadd.f32 %v3265, %v3300
      %v3330 = vadd.f32 %v3266, %v3305
      %v3331 = vadd.f32 %v3267, %v3305
      %v3332 = vadd.f32 %v3268, %v3310
      %v3333 = vadd.f32 %v3269, %v3310
      %v3334 = vadd.f32 %v3270, %v3315
      %v3335 = vadd.f32 %v3271, %v3315
      %v3336 = vadd.f32 %v3272, %v3320
      %v3337 = vadd.f32 %v3273, %v3320
      %v3338 = vmax.f32 %v3322, 0.0
      %v3339 = vmax.f32 %v3323, 0.0
      %v3340 = vmax.f32 %v3324, 0.0
      %v3341 = vmax.f32 %v3325, 0.0
      %v3342 = vmax.f32 %v3326, 0.0
      %v3343 = vmax.f32 %v3327, 0.0
      %v3344 = vmax.f32 %v3328, 0.0
      %v3345 = vmax.f32 %v3329, 0.0
      %v3346 = vmax.f32 %v3330, 0.0
      %v3347 = vmax.f32 %v3331, 0.0
      %v3348 = vmax.f32 %v3332, 0.0
      %v3349 = vmax.f32 %v3333, 0.0
      %v3350 = vmax.f32 %v3334, 0.0
      %v3351 = vmax.f32 %v3335, 0.0
      %v3352 = vmax.f32 %v3336, 0.0
      %v3353 = vmax.f32 %v3337, 0.0
      %3354 = vrot.lane.b32.xlu0 %v3338, 17
      %v3355 = vpop.permute.xlu0 %3354
      %3356 = vrot.lane.b32.xlu0 %v3340, 17
      %v3357 = vpop.permute.xlu0 %3356
      %3358 = vrot.lane.b32.xlu0 %v3342, 17
      %v3359 = vpop.permute.xlu0 %3358
      %3360 = vrot.lane.b32.xlu0 %v3344, 17
      %v3361 = vpop.permute.xlu0 %3360
      %3362 = vrot.lane.b32.xlu0 %v3346, 17
      %v3363 = vpop.permute.xlu0 %3362
      %3364 = vrot.lane.b32.xlu0 %v3348, 17
      %v3365 = vpop.permute.xlu0 %3364
      %3366 = vrot.lane.b32.xlu0 %v3350, 17
      %v3367 = vpop.permute.xlu0 %3366
      %3368 = vrot.lane.b32.xlu0 %v3352, 17
      %v3369 = vpop.permute.xlu0 %3368
      %3370 = vrot.lane.b32.xlu0 %v3339, 17
      %v3371 = vpop.permute.xlu0 %3370
      %3372 = vrot.lane.b32.xlu0 %v3341, 17
      %v3373 = vpop.permute.xlu0 %3372
      %3374 = vrot.lane.b32.xlu0 %v3343, 17
      %v3375 = vpop.permute.xlu0 %3374
      %3376 = vrot.lane.b32.xlu0 %v3345, 17
      %v3377 = vpop.permute.xlu0 %3376
      %3378 = vrot.lane.b32.xlu0 %v3347, 17
      %v3379 = vpop.permute.xlu0 %3378
      %3380 = vrot.lane.b32.xlu0 %v3349, 17
      %v3381 = vpop.permute.xlu0 %3380
      %3382 = vrot.lane.b32.xlu0 %v3351, 17
      %v3383 = vpop.permute.xlu0 %3382
      %3384 = vrot.lane.b32.xlu0 %v3353, 17
      %v3385 = vpop.permute.xlu0 %3384
      %v3386 = vsel %vm371, %v3355, %v3371
      %v3387 = vsel %vm371, %v3357, %v3373
      %v3388 = vsel %vm371, %v3359, %v3375
      %v3389 = vsel %vm371, %v3361, %v3377
      %v3390 = vsel %vm371, %v3363, %v3379
      %v3391 = vsel %vm371, %v3365, %v3381
      %v3392 = vsel %vm371, %v3367, %v3383
      %v3393 = vsel %vm371, %v3369, %v3385
      %v3394 = vsel %vm371, %v3371, %v3355
      %v3395 = vsel %vm371, %v3373, %v3357
      %v3396 = vsel %vm371, %v3375, %v3359
      %v3397 = vsel %vm371, %v3377, %v3361
      %v3398 = vsel %vm371, %v3379, %v3363
      %v3399 = vsel %vm371, %v3381, %v3365
      %v3400 = vsel %vm371, %v3383, %v3367
      %v3401 = vsel %vm371, %v3385, %v3369
      %v3402 = vmul.f32 %v3394, %v379
      %v3403 = vmul.f32 %v3386, %v383
      %v3404 = vmul.f32 %v3395, %v379
      %v3405 = vmul.f32 %v3387, %v383
      %v3406 = vmul.f32 %v3396, %v379
      %v3407 = vmul.f32 %v3388, %v383
      %v3408 = vmul.f32 %v3397, %v379
      %v3409 = vmul.f32 %v3389, %v383
      %v3410 = vmul.f32 %v3398, %v379
      %v3411 = vmul.f32 %v3390, %v383
      %v3412 = vmul.f32 %v3399, %v379
      %v3413 = vmul.f32 %v3391, %v383
      %v3414 = vmul.f32 %v3400, %v379
      %v3415 = vmul.f32 %v3392, %v383
      %v3416 = vmul.f32 %v3401, %v379
      %v3417 = vmul.f32 %v3393, %v383
      %v3418 = vld [vmem:[%s6] sm:$0xff]
      %v3419 = vld [vmem:[%s6 + $0x8] sm:$0xff]
      %v3420 = vld [vmem:[%s6 + $0x10] sm:$0xff]
      %v3421 = vld [vmem:[%s6 + $0x18] sm:$0xff]
      %3422 = vrot.lane.b32.xlu0 %v3338, 16
      %v3423 = vpop.permute.xlu0 %3422
      %3424 = vrot.lane.b32.xlu0 %v3340, 16
      %v3425 = vpop.permute.xlu0 %3424
      %3426 = vrot.lane.b32.xlu0 %v3342, 16
      %v3427 = vpop.permute.xlu0 %3426
      %3428 = vrot.lane.b32.xlu0 %v3344, 16
      %v3429 = vpop.permute.xlu0 %3428
      %3430 = vrot.lane.b32.xlu0 %v3346, 16
      %v3431 = vpop.permute.xlu0 %3430
      %3432 = vrot.lane.b32.xlu0 %v3348, 16
      %v3433 = vpop.permute.xlu0 %3432
      %3434 = vrot.lane.b32.xlu0 %v3350, 16
      %v3435 = vpop.permute.xlu0 %3434
      %3436 = vrot.lane.b32.xlu0 %v3352, 16
      %v3437 = vpop.permute.xlu0 %3436
      %3438 = vrot.lane.b32.xlu0 %v3339, 16
      %v3439 = vpop.permute.xlu0 %3438
      %3440 = vrot.lane.b32.xlu0 %v3341, 16
      %v3441 = vpop.permute.xlu0 %3440
      %3442 = vrot.lane.b32.xlu0 %v3343, 16
      %v3443 = vpop.permute.xlu0 %3442
      %3444 = vrot.lane.b32.xlu0 %v3345, 16
      %v3445 = vpop.permute.xlu0 %3444
      %3446 = vrot.lane.b32.xlu0 %v3347, 16
      %v3447 = vpop.permute.xlu0 %3446
      %3448 = vrot.lane.b32.xlu0 %v3349, 16
      %v3449 = vpop.permute.xlu0 %3448
      %3450 = vrot.lane.b32.xlu0 %v3351, 16
      %v3451 = vpop.permute.xlu0 %3450
      %3452 = vrot.lane.b32.xlu0 %v3353, 16
      %v3453 = vpop.permute.xlu0 %3452
      %v3454 = vsel %vm396, %v3423, %v3439
      %v3455 = vsel %vm396, %v3425, %v3441
      %v3456 = vsel %vm396, %v3427, %v3443
      %v3457 = vsel %vm396, %v3429, %v3445
      %v3458 = vsel %vm396, %v3431, %v3447
      %v3459 = vsel %vm396, %v3433, %v3449
      %v3460 = vsel %vm396, %v3435, %v3451
      %v3461 = vsel %vm396, %v3437, %v3453
      %v3462 = vsel %vm396, %v3439, %v3423
      %v3463 = vsel %vm396, %v3441, %v3425
      %v3464 = vsel %vm396, %v3443, %v3427
      %v3465 = vsel %vm396, %v3445, %v3429
      %v3466 = vsel %vm396, %v3447, %v3431
      %v3467 = vsel %vm396, %v3449, %v3433
      %v3468 = vsel %vm396, %v3451, %v3435
      %v3469 = vsel %vm396, %v3453, %v3437
      %v3470 = vmul.f32 %v3462, %v405
      %v3471 = vmul.f32 %v3454, %v409
      %v3472 = vmul.f32 %v3463, %v405
      %v3473 = vmul.f32 %v3455, %v409
      %v3474 = vmul.f32 %v3464, %v405
      %v3475 = vmul.f32 %v3456, %v409
      %v3476 = vmul.f32 %v3465, %v405
      %v3477 = vmul.f32 %v3457, %v409
      %v3478 = vmul.f32 %v3466, %v405
      %v3479 = vmul.f32 %v3458, %v409
      %v3480 = vmul.f32 %v3467, %v405
      %v3481 = vmul.f32 %v3459, %v409
      %v3482 = vmul.f32 %v3468, %v405
      %v3483 = vmul.f32 %v3460, %v409
      %v3484 = vmul.f32 %v3469, %v405
      %v3485 = vmul.f32 %v3461, %v409
      %s3486 = scalar_lea.vmem %s6, 32
      %v3487 = vld [vmem:[%s3486] sm:$0xff]
      %v3488 = vld [vmem:[%s3486 + $0x8] sm:$0xff]
      %v3489 = vld [vmem:[%s3486 + $0x10] sm:$0xff]
      %v3490 = vld [vmem:[%s3486 + $0x18] sm:$0xff]
      %vm3491 = vcmask 523264
      %v3493 = vsel %vm3491, %v3487, 0
      %v3496 = vsel %vm3491, %v3488, 0
      %v3499 = vsel %vm3491, %v3489, 0
      %v3502 = vsel %vm3491, %v3490, 0
      %3504 = vmatprep.subr.mxu0 %v3471
      %3505 = vmatpush1.msra.mxu0 %v3470
      %3506 = vmatprep.subr.mxu0 %v3473
      %3507 = vmatpush1.msra.mxu0 %v3472
      %3508 = vmatprep.subr.mxu0 %v3475
      %3509 = vmatpush1.msra.mxu0 %v3474
      %3510 = vmatprep.subr.mxu0 %v3477
      %3511 = vmatpush1.msra.mxu0 %v3476
      %3512 = vmatprep.subr.mxu0 %v3479
      %3513 = vmatpush1.msra.mxu0 %v3478
      %3514 = vmatprep.subr.mxu0 %v3481
      %3515 = vmatpush1.msra.mxu0 %v3480
      %3516 = vmatprep.subr.mxu0 %v3483
      %3517 = vmatpush1.msra.mxu0 %v3482
      %3518 = vmatprep.subr.mxu0 %v3485
      %3519 = vmatpush1.msra.mxu0 %v3484
      %3520 = vmatprep.subr.mxu0 0.0
      %3521 = vmatpush1.msra.mxu0 0.0
      %3522 = vmatprep.subr.mxu0 0.0
      %3523 = vmatpush1.msra.mxu0 0.0
      %3524 = vmatprep.subr.mxu0 0.0
      %3525 = vmatpush1.msra.mxu0 0.0
      %3526 = vmatprep.subr.mxu0 0.0
      %3527 = vmatpush1.msra.mxu0 0.0
      %3528 = vmatprep.subr.mxu0 0.0
      %3529 = vmatpush1.msra.mxu0 0.0
      %3530 = vmatprep.subr.mxu0 0.0
      %3531 = vmatpush1.msra.mxu0 0.0
      %3532 = vmatprep.subr.mxu0 0.0
      %3533 = vmatpush1.msra.mxu0 0.0
      %3534 = vmatprep.subr.mxu0 0.0
      %3535 = vmatpush1.msra.mxu0 0.0
      %3536 = vmatprep.subr.mxu0 0.0
      %3537 = vmatpush1.msra.mxu0 0.0
      %3538 = vmatprep.subr.mxu0 0.0
      %3539 = vmatpush1.msra.mxu0 0.0
      %3540 = vmatprep.subr.mxu0 0.0
      %3541 = vmatpush1.msra.mxu0 0.0
      %3542 = vmatprep.subr.mxu0 0.0
      %3543 = vmatpush1.msra.mxu0 0.0
      %3544 = vmatprep.subr.mxu0 0.0
      %3545 = vmatpush1.msra.mxu0 0.0
      %3546 = vmatprep.subr.mxu0 0.0
      %3547 = vmatpush1.msra.mxu0 0.0
      %3548 = vmatprep.subr.mxu0 0.0
      %3549 = vmatpush1.msra.mxu0 0.0
      %3550 = vmatprep.subr.mxu0 0.0
      %3551 = vmatpush1.msra.mxu0 0.0
      %3552 = vmatprep.subr.mxu0 0.0
      %3553 = vmatpush1.msra.mxu0 0.0
      %3554 = vmatprep.subr.mxu0 0.0
      %3555 = vmatpush1.msra.mxu0 0.0
      %3556 = vmatprep.subr.mxu0 0.0
      %3557 = vmatpush1.msra.mxu0 0.0
      %3558 = vmatprep.subr.mxu0 0.0
      %3559 = vmatpush1.msra.mxu0 0.0
      %3560 = vmatprep.subr.mxu0 0.0
      %3561 = vmatpush1.msra.mxu0 0.0
      %3562 = vmatprep.subr.mxu0 0.0
      %3563 = vmatpush1.msra.mxu0 0.0
      %3564 = vmatprep.subr.mxu0 0.0
      %3565 = vmatpush1.msra.mxu0 0.0
      %3566 = vmatprep.subr.mxu0 0.0
      %3567 = vmatpush1.msra.mxu0 0.0
      %3568 = vmatprep.mubr.f32.mxu0 0.0
      %3569 = vmatmul.mubr.f32.gmra.mrb[0].mxu0 %v3493
      %v3570 = vpop.f32.mrb[0].mxu0
      %v3571 = vadd.f32 0.0, %v3570
      %v3572 = vpop.f32.mrb[0].mxu0
      %v3573 = vadd.f32 0.0, %v3572
      %3574 = vmatprep.mubr.f32.mxu0 0.0
      %3575 = vmatmul.mubr.f32.gmra.mrb[0].mxu0 %v3496
      %v3576 = vpop.f32.mrb[0].mxu0
      %v3577 = vadd.f32 0.0, %v3576
      %v3578 = vpop.f32.mrb[0].mxu0
      %v3579 = vadd.f32 0.0, %v3578
      %3580 = vmatprep.mubr.f32.mxu0 0.0
      %3581 = vmatmul.mubr.f32.gmra.mrb[0].mxu0 %v3499
      %v3582 = vpop.f32.mrb[0].mxu0
      %v3583 = vadd.f32 0.0, %v3582
      %v3584 = vpop.f32.mrb[0].mxu0
      %v3585 = vadd.f32 0.0, %v3584
      %3586 = vmatprep.mubr.f32.mxu0 0.0
      %3587 = vmatmul.mubr.f32.gmra.mrb[0].mxu0 %v3502
      %v3588 = vpop.f32.mrb[0].mxu0
      %v3589 = vadd.f32 0.0, %v3588
      %v3590 = vpop.f32.mrb[0].mxu0
      %v3591 = vadd.f32 0.0, %v3590
      %3592 = vdwg.mxu0
      %v3594 = vsel %vm3491, %v3418, 0
      %v3597 = vsel %vm3491, %v3419, 0
      %v3600 = vsel %vm3491, %v3420, 0
      %v3603 = vsel %vm3491, %v3421, 0
      %3605 = vmatprep.subr.mxu0 %v3403
      %3606 = vmatpush1.msra.mxu0 %v3402
      %3607 = vmatprep.subr.mxu0 %v3405
      %3608 = vmatpush1.msra.mxu0 %v3404
      %3609 = vmatprep.subr.mxu0 %v3407
      %3610 = vmatpush1.msra.mxu0 %v3406
      %3611 = vmatprep.subr.mxu0 %v3409
      %3612 = vmatpush1.msra.mxu0 %v3408
      %3613 = vmatprep.subr.mxu0 %v3411
      %3614 = vmatpush1.msra.mxu0 %v3410
      %3615 = vmatprep.subr.mxu0 %v3413
      %3616 = vmatpush1.msra.mxu0 %v3412
      %3617 = vmatprep.subr.mxu0 %v3415
      %3618 = vmatpush1.msra.mxu0 %v3414
      %3619 = vmatprep.subr.mxu0 %v3417
      %3620 = vmatpush1.msra.mxu0 %v3416
      %3621 = vmatprep.subr.mxu0 0.0
      %3622 = vmatpush1.msra.mxu0 0.0
      %3623 = vmatprep.subr.mxu0 0.0
      %3624 = vmatpush1.msra.mxu0 0.0
      %3625 = vmatprep.subr.mxu0 0.0
      %3626 = vmatpush1.msra.mxu0 0.0
      %3627 = vmatprep.subr.mxu0 0.0
      %3628 = vmatpush1.msra.mxu0 0.0
      %3629 = vmatprep.subr.mxu0 0.0
      %3630 = vmatpush1.msra.mxu0 0.0
      %3631 = vmatprep.subr.mxu0 0.0
      %3632 = vmatpush1.msra.mxu0 0.0
      %3633 = vmatprep.subr.mxu0 0.0
      %3634 = vmatpush1.msra.mxu0 0.0
      %3635 = vmatprep.subr.mxu0 0.0
      %3636 = vmatpush1.msra.mxu0 0.0
      %3637 = vmatprep.subr.mxu0 0.0
      %3638 = vmatpush1.msra.mxu0 0.0
      %3639 = vmatprep.subr.mxu0 0.0
      %3640 = vmatpush1.msra.mxu0 0.0
      %3641 = vmatprep.subr.mxu0 0.0
      %3642 = vmatpush1.msra.mxu0 0.0
      %3643 = vmatprep.subr.mxu0 0.0
      %3644 = vmatpush1.msra.mxu0 0.0
      %3645 = vmatprep.subr.mxu0 0.0
      %3646 = vmatpush1.msra.mxu0 0.0
      %3647 = vmatprep.subr.mxu0 0.0
      %3648 = vmatpush1.msra.mxu0 0.0
      %3649 = vmatprep.subr.mxu0 0.0
      %3650 = vmatpush1.msra.mxu0 0.0
      %3651 = vmatprep.subr.mxu0 0.0
      %3652 = vmatpush1.msra.mxu0 0.0
      %3653 = vmatprep.subr.mxu0 0.0
      %3654 = vmatpush1.msra.mxu0 0.0
      %3655 = vmatprep.subr.mxu0 0.0
      %3656 = vmatpush1.msra.mxu0 0.0
      %3657 = vmatprep.subr.mxu0 0.0
      %3658 = vmatpush1.msra.mxu0 0.0
      %3659 = vmatprep.subr.mxu0 0.0
      %3660 = vmatpush1.msra.mxu0 0.0
      %3661 = vmatprep.subr.mxu0 0.0
      %3662 = vmatpush1.msra.mxu0 0.0
      %3663 = vmatprep.subr.mxu0 0.0
      %3664 = vmatpush1.msra.mxu0 0.0
      %3665 = vmatprep.subr.mxu0 0.0
      %3666 = vmatpush1.msra.mxu0 0.0
      %3667 = vmatprep.subr.mxu0 0.0
      %3668 = vmatpush1.msra.mxu0 0.0
      %3669 = vmatprep.mubr.f32.mxu0 0.0
      %3670 = vmatmul.mubr.f32.gmra.mrb[0].mxu0 %v3594
      %v3671 = vpop.f32.mrb[0].mxu0
      %v3672 = vadd.f32 %v3571, %v3671
      %v3673 = vpop.f32.mrb[0].mxu0
      %v3674 = vadd.f32 %v3573, %v3673
      %3675 = vmatprep.mubr.f32.mxu0 0.0
      %3676 = vmatmul.mubr.f32.gmra.mrb[0].mxu0 %v3597
      %v3677 = vpop.f32.mrb[0].mxu0
      %v3678 = vadd.f32 %v3577, %v3677
      %v3679 = vpop.f32.mrb[0].mxu0
      %v3680 = vadd.f32 %v3579, %v3679
      %3681 = vmatprep.mubr.f32.mxu0 0.0
      %3682 = vmatmul.mubr.f32.gmra.mrb[0].mxu0 %v3600
      %v3683 = vpop.f32.mrb[0].mxu0
      %v3684 = vadd.f32 %v3583, %v3683
      %v3685 = vpop.f32.mrb[0].mxu0
      %v3686 = vadd.f32 %v3585, %v3685
      %3687 = vmatprep.mubr.f32.mxu0 0.0
      %3688 = vmatmul.mubr.f32.gmra.mrb[0].mxu0 %v3603
      %v3689 = vpop.f32.mrb[0].mxu0
      %v3690 = vadd.f32 %v3589, %v3689
      %v3691 = vpop.f32.mrb[0].mxu0
      %v3692 = vadd.f32 %v3591, %v3691
      %3693 = vdwg.mxu0
      %3694 = vrot.lane.b32.xlu0 %v3338, 15
      %v3695 = vpop.permute.xlu0 %3694
      %3696 = vrot.lane.b32.xlu0 %v3340, 15
      %v3697 = vpop.permute.xlu0 %3696
      %3698 = vrot.lane.b32.xlu0 %v3342, 15
      %v3699 = vpop.permute.xlu0 %3698
      %3700 = vrot.lane.b32.xlu0 %v3344, 15
      %v3701 = vpop.permute.xlu0 %3700
      %3702 = vrot.lane.b32.xlu0 %v3346, 15
      %v3703 = vpop.permute.xlu0 %3702
      %3704 = vrot.lane.b32.xlu0 %v3348, 15
      %v3705 = vpop.permute.xlu0 %3704
      %3706 = vrot.lane.b32.xlu0 %v3350, 15
      %v3707 = vpop.permute.xlu0 %3706
      %3708 = vrot.lane.b32.xlu0 %v3352, 15
      %v3709 = vpop.permute.xlu0 %3708
      %3710 = vrot.lane.b32.xlu0 %v3339, 15
      %v3711 = vpop.permute.xlu0 %3710
      %3712 = vrot.lane.b32.xlu0 %v3341, 15
      %v3713 = vpop.permute.xlu0 %3712
      %3714 = vrot.lane.b32.xlu0 %v3343, 15
      %v3715 = vpop.permute.xlu0 %3714
      %3716 = vrot.lane.b32.xlu0 %v3345, 15
      %v3717 = vpop.permute.xlu0 %3716
      %3718 = vrot.lane.b32.xlu0 %v3347, 15
      %v3719 = vpop.permute.xlu0 %3718
      %3720 = vrot.lane.b32.xlu0 %v3349, 15
      %v3721 = vpop.permute.xlu0 %3720
      %3722 = vrot.lane.b32.xlu0 %v3351, 15
      %v3723 = vpop.permute.xlu0 %3722
      %3724 = vrot.lane.b32.xlu0 %v3353, 15
      %v3725 = vpop.permute.xlu0 %3724
      %v3726 = vsel %vm626, %v3695, %v3711
      %v3727 = vsel %vm626, %v3697, %v3713
      %v3728 = vsel %vm626, %v3699, %v3715
      %v3729 = vsel %vm626, %v3701, %v3717
      %v3730 = vsel %vm626, %v3703, %v3719
      %v3731 = vsel %vm626, %v3705, %v3721
      %v3732 = vsel %vm626, %v3707, %v3723
      %v3733 = vsel %vm626, %v3709, %v3725
      %v3734 = vsel %vm626, %v3711, %v3695
      %v3735 = vsel %vm626, %v3713, %v3697
      %v3736 = vsel %vm626, %v3715, %v3699
      %v3737 = vsel %vm626, %v3717, %v3701
      %v3738 = vsel %vm626, %v3719, %v3703
      %v3739 = vsel %vm626, %v3721, %v3705
      %v3740 = vsel %vm626, %v3723, %v3707
      %v3741 = vsel %vm626, %v3725, %v3709
      %v3742 = vmul.f32 %v3734, %v635
      %v3743 = vmul.f32 %v3726, %v639
      %v3744 = vmul.f32 %v3735, %v635
      %v3745 = vmul.f32 %v3727, %v639
      %v3746 = vmul.f32 %v3736, %v635
      %v3747 = vmul.f32 %v3728, %v639
      %v3748 = vmul.f32 %v3737, %v635
      %v3749 = vmul.f32 %v3729, %v639
      %v3750 = vmul.f32 %v3738, %v635
      %v3751 = vmul.f32 %v3730, %v639
      %v3752 = vmul.f32 %v3739, %v635
      %v3753 = vmul.f32 %v3731, %v639
      %v3754 = vmul.f32 %v3740, %v635
      %v3755 = vmul.f32 %v3732, %v639
      %v3756 = vmul.f32 %v3741, %v635
      %v3757 = vmul.f32 %v3733, %v639
      %s3758 = scalar_lea.vmem %s6, 64
      %v3759 = vld [vmem:[%s3758] sm:$0xff]
      %v3760 = vld [vmem:[%s3758 + $0x8] sm:$0xff]
      %v3761 = vld [vmem:[%s3758 + $0x10] sm:$0xff]
      %v3762 = vld [vmem:[%s3758 + $0x18] sm:$0xff]
      %v3764 = vsel %vm3491, %v3759, 0
      %v3767 = vsel %vm3491, %v3760, 0
      %v3770 = vsel %vm3491, %v3761, 0
      %v3773 = vsel %vm3491, %v3762, 0
      %3775 = vmatprep.subr.mxu0 %v3743
      %3776 = vmatpush1.msra.mxu0 %v3742
      %3777 = vmatprep.subr.mxu0 %v3745
      %3778 = vmatpush1.msra.mxu0 %v3744
      %3779 = vmatprep.subr.mxu0 %v3747
      %3780 = vmatpush1.msra.mxu0 %v3746
      %3781 = vmatprep.subr.mxu0 %v3749
      %3782 = vmatpush1.msra.mxu0 %v3748
      %3783 = vmatprep.subr.mxu0 %v3751
      %3784 = vmatpush1.msra.mxu0 %v3750
      %3785 = vmatprep.subr.mxu0 %v3753
      %3786 = vmatpush1.msra.mxu0 %v3752
      %3787 = vmatprep.subr.mxu0 %v3755
      %3788 = vmatpush1.msra.mxu0 %v3754
      %3789 = vmatprep.subr.mxu0 %v3757
      %3790 = vmatpush1.msra.mxu0 %v3756
      %3791 = vmatprep.subr.mxu0 0.0
      %3792 = vmatpush1.msra.mxu0 0.0
      %3793 = vmatprep.subr.mxu0 0.0
      %3794 = vmatpush1.msra.mxu0 0.0
      %3795 = vmatprep.subr.mxu0 0.0
      %3796 = vmatpush1.msra.mxu0 0.0
      %3797 = vmatprep.subr.mxu0 0.0
      %3798 = vmatpush1.msra.mxu0 0.0
      %3799 = vmatprep.subr.mxu0 0.0
      %3800 = vmatpush1.msra.mxu0 0.0
      %3801 = vmatprep.subr.mxu0 0.0
      %3802 = vmatpush1.msra.mxu0 0.0
      %3803 = vmatprep.subr.mxu0 0.0
      %3804 = vmatpush1.msra.mxu0 0.0
      %3805 = vmatprep.subr.mxu0 0.0
      %3806 = vmatpush1.msra.mxu0 0.0
      %3807 = vmatprep.subr.mxu0 0.0
      %3808 = vmatpush1.msra.mxu0 0.0
      %3809 = vmatprep.subr.mxu0 0.0
      %3810 = vmatpush1.msra.mxu0 0.0
      %3811 = vmatprep.subr.mxu0 0.0
      %3812 = vmatpush1.msra.mxu0 0.0
      %3813 = vmatprep.subr.mxu0 0.0
      %3814 = vmatpush1.msra.mxu0 0.0
      %3815 = vmatprep.subr.mxu0 0.0
      %3816 = vmatpush1.msra.mxu0 0.0
      %3817 = vmatprep.subr.mxu0 0.0
      %3818 = vmatpush1.msra.mxu0 0.0
      %3819 = vmatprep.subr.mxu0 0.0
      %3820 = vmatpush1.msra.mxu0 0.0
      %3821 = vmatprep.subr.mxu0 0.0
      %3822 = vmatpush1.msra.mxu0 0.0
      %3823 = vmatprep.subr.mxu0 0.0
      %3824 = vmatpush1.msra.mxu0 0.0
      %3825 = vmatprep.subr.mxu0 0.0
      %3826 = vmatpush1.msra.mxu0 0.0
      %3827 = vmatprep.subr.mxu0 0.0
      %3828 = vmatpush1.msra.mxu0 0.0
      %3829 = vmatprep.subr.mxu0 0.0
      %3830 = vmatpush1.msra.mxu0 0.0
      %3831 = vmatprep.subr.mxu0 0.0
      %3832 = vmatpush1.msra.mxu0 0.0
      %3833 = vmatprep.subr.mxu0 0.0
      %3834 = vmatpush1.msra.mxu0 0.0
      %3835 = vmatprep.subr.mxu0 0.0
      %3836 = vmatpush1.msra.mxu0 0.0
      %3837 = vmatprep.subr.mxu0 0.0
      %3838 = vmatpush1.msra.mxu0 0.0
      %3839 = vmatprep.mubr.f32.mxu0 0.0
      %3840 = vmatmul.mubr.f32.gmra.mrb[0].mxu0 %v3764
      %v3841 = vpop.f32.mrb[0].mxu0
      %v3842 = vadd.f32 0.0, %v3841
      %v3843 = vpop.f32.mrb[0].mxu0
      %v3844 = vadd.f32 0.0, %v3843
      %3845 = vmatprep.mubr.f32.mxu0 0.0
      %3846 = vmatmul.mubr.f32.gmra.mrb[0].mxu0 %v3767
      %v3847 = vpop.f32.mrb[0].mxu0
      %v3848 = vadd.f32 0.0, %v3847
      %v3849 = vpop.f32.mrb[0].mxu0
      %v3850 = vadd.f32 0.0, %v3849
      %3851 = vmatprep.mubr.f32.mxu0 0.0
      %3852 = vmatmul.mubr.f32.gmra.mrb[0].mxu0 %v3770
      %v3853 = vpop.f32.mrb[0].mxu0
      %v3854 = vadd.f32 0.0, %v3853
      %v3855 = vpop.f32.mrb[0].mxu0
      %v3856 = vadd.f32 0.0, %v3855
      %3857 = vmatprep.mubr.f32.mxu0 0.0
      %3858 = vmatmul.mubr.f32.gmra.mrb[0].mxu0 %v3773
      %v3859 = vpop.f32.mrb[0].mxu0
      %v3860 = vadd.f32 0.0, %v3859
      %v3861 = vpop.f32.mrb[0].mxu0
      %v3862 = vadd.f32 0.0, %v3861
      %3863 = vdwg.mxu0
      %v3864 = vadd.f32 %v3672, %v3842
      %v3865 = vadd.f32 %v3674, %v3844
      %v3866 = vadd.f32 %v3678, %v3848
      %v3867 = vadd.f32 %v3680, %v3850
      %v3868 = vadd.f32 %v3684, %v3854
      %v3869 = vadd.f32 %v3686, %v3856
      %v3870 = vadd.f32 %v3690, %v3860
      %v3871 = vadd.f32 %v3692, %v3862
      %3872 = vrot.lane.b32.xlu0 %v3338, 1
      %v3873 = vpop.permute.xlu0 %3872
      %3874 = vrot.lane.b32.xlu0 %v3340, 1
      %v3875 = vpop.permute.xlu0 %3874
      %3876 = vrot.lane.b32.xlu0 %v3342, 1
      %v3877 = vpop.permute.xlu0 %3876
      %3878 = vrot.lane.b32.xlu0 %v3344, 1
      %v3879 = vpop.permute.xlu0 %3878
      %3880 = vrot.lane.b32.xlu0 %v3346, 1
      %v3881 = vpop.permute.xlu0 %3880
      %3882 = vrot.lane.b32.xlu0 %v3348, 1
      %v3883 = vpop.permute.xlu0 %3882
      %3884 = vrot.lane.b32.xlu0 %v3350, 1
      %v3885 = vpop.permute.xlu0 %3884
      %3886 = vrot.lane.b32.xlu0 %v3352, 1
      %v3887 = vpop.permute.xlu0 %3886
      %3888 = vrot.lane.b32.xlu0 %v3339, 1
      %v3889 = vpop.permute.xlu0 %3888
      %3890 = vrot.lane.b32.xlu0 %v3341, 1
      %v3891 = vpop.permute.xlu0 %3890
      %3892 = vrot.lane.b32.xlu0 %v3343, 1
      %v3893 = vpop.permute.xlu0 %3892
      %3894 = vrot.lane.b32.xlu0 %v3345, 1
      %v3895 = vpop.permute.xlu0 %3894
      %3896 = vrot.lane.b32.xlu0 %v3347, 1
      %v3897 = vpop.permute.xlu0 %3896
      %3898 = vrot.lane.b32.xlu0 %v3349, 1
      %v3899 = vpop.permute.xlu0 %3898
      %3900 = vrot.lane.b32.xlu0 %v3351, 1
      %v3901 = vpop.permute.xlu0 %3900
      %3902 = vrot.lane.b32.xlu0 %v3353, 1
      %v3903 = vpop.permute.xlu0 %3902
      %v3904 = vsel %vm762, %v3873, %v3889
      %v3905 = vsel %vm762, %v3875, %v3891
      %v3906 = vsel %vm762, %v3877, %v3893
      %v3907 = vsel %vm762, %v3879, %v3895
      %v3908 = vsel %vm762, %v3881, %v3897
      %v3909 = vsel %vm762, %v3883, %v3899
      %v3910 = vsel %vm762, %v3885, %v3901
      %v3911 = vsel %vm762, %v3887, %v3903
      %v3912 = vsel %vm762, %v3889, %v3873
      %v3913 = vsel %vm762, %v3891, %v3875
      %v3914 = vsel %vm762, %v3893, %v3877
      %v3915 = vsel %vm762, %v3895, %v3879
      %v3916 = vsel %vm762, %v3897, %v3881
      %v3917 = vsel %vm762, %v3899, %v3883
      %v3918 = vsel %vm762, %v3901, %v3885
      %v3919 = vsel %vm762, %v3903, %v3887
      %v3920 = vmul.f32 %v3912, %v771
      %v3921 = vmul.f32 %v3904, %v775
      %v3922 = vmul.f32 %v3913, %v771
      %v3923 = vmul.f32 %v3905, %v775
      %v3924 = vmul.f32 %v3914, %v771
      %v3925 = vmul.f32 %v3906, %v775
      %v3926 = vmul.f32 %v3915, %v771
      %v3927 = vmul.f32 %v3907, %v775
      %v3928 = vmul.f32 %v3916, %v771
      %v3929 = vmul.f32 %v3908, %v775
      %v3930 = vmul.f32 %v3917, %v771
      %v3931 = vmul.f32 %v3909, %v775
      %v3932 = vmul.f32 %v3918, %v771
      %v3933 = vmul.f32 %v3910, %v775
      %v3934 = vmul.f32 %v3919, %v771
      %v3935 = vmul.f32 %v3911, %v775
      %s3936 = scalar_lea.vmem %s6, 96
      %v3937 = vld [vmem:[%s3936] sm:$0xff]
      %v3938 = vld [vmem:[%s3936 + $0x8] sm:$0xff]
      %v3939 = vld [vmem:[%s3936 + $0x10] sm:$0xff]
      %v3940 = vld [vmem:[%s3936 + $0x18] sm:$0xff]
      %v3942 = vsel %vm3491, %v3937, 0
      %v3945 = vsel %vm3491, %v3938, 0
      %v3948 = vsel %vm3491, %v3939, 0
      %v3951 = vsel %vm3491, %v3940, 0
      %3953 = vmatprep.subr.mxu0 %v3921
      %3954 = vmatpush1.msra.mxu0 %v3920
      %3955 = vmatprep.subr.mxu0 %v3923
      %3956 = vmatpush1.msra.mxu0 %v3922
      %3957 = vmatprep.subr.mxu0 %v3925
      %3958 = vmatpush1.msra.mxu0 %v3924
      %3959 = vmatprep.subr.mxu0 %v3927
      %3960 = vmatpush1.msra.mxu0 %v3926
      %3961 = vmatprep.subr.mxu0 %v3929
      %3962 = vmatpush1.msra.mxu0 %v3928
      %3963 = vmatprep.subr.mxu0 %v3931
      %3964 = vmatpush1.msra.mxu0 %v3930
      %3965 = vmatprep.subr.mxu0 %v3933
      %3966 = vmatpush1.msra.mxu0 %v3932
      %3967 = vmatprep.subr.mxu0 %v3935
      %3968 = vmatpush1.msra.mxu0 %v3934
      %3969 = vmatprep.subr.mxu0 0.0
      %3970 = vmatpush1.msra.mxu0 0.0
      %3971 = vmatprep.subr.mxu0 0.0
      %3972 = vmatpush1.msra.mxu0 0.0
      %3973 = vmatprep.subr.mxu0 0.0
      %3974 = vmatpush1.msra.mxu0 0.0
      %3975 = vmatprep.subr.mxu0 0.0
      %3976 = vmatpush1.msra.mxu0 0.0
      %3977 = vmatprep.subr.mxu0 0.0
      %3978 = vmatpush1.msra.mxu0 0.0
      %3979 = vmatprep.subr.mxu0 0.0
      %3980 = vmatpush1.msra.mxu0 0.0
      %3981 = vmatprep.subr.mxu0 0.0
      %3982 = vmatpush1.msra.mxu0 0.0
      %3983 = vmatprep.subr.mxu0 0.0
      %3984 = vmatpush1.msra.mxu0 0.0
      %3985 = vmatprep.subr.mxu0 0.0
      %3986 = vmatpush1.msra.mxu0 0.0
      %3987 = vmatprep.subr.mxu0 0.0
      %3988 = vmatpush1.msra.mxu0 0.0
      %3989 = vmatprep.subr.mxu0 0.0
      %3990 = vmatpush1.msra.mxu0 0.0
      %3991 = vmatprep.subr.mxu0 0.0
      %3992 = vmatpush1.msra.mxu0 0.0
      %3993 = vmatprep.subr.mxu0 0.0
      %3994 = vmatpush1.msra.mxu0 0.0
      %3995 = vmatprep.subr.mxu0 0.0
      %3996 = vmatpush1.msra.mxu0 0.0
      %3997 = vmatprep.subr.mxu0 0.0
      %3998 = vmatpush1.msra.mxu0 0.0
      %3999 = vmatprep.subr.mxu0 0.0
      %4000 = vmatpush1.msra.mxu0 0.0
      %4001 = vmatprep.subr.mxu0 0.0
      %4002 = vmatpush1.msra.mxu0 0.0
      %4003 = vmatprep.subr.mxu0 0.0
      %4004 = vmatpush1.msra.mxu0 0.0
      %4005 = vmatprep.subr.mxu0 0.0
      %4006 = vmatpush1.msra.mxu0 0.0
      %4007 = vmatprep.subr.mxu0 0.0
      %4008 = vmatpush1.msra.mxu0 0.0
      %4009 = vmatprep.subr.mxu0 0.0
      %4010 = vmatpush1.msra.mxu0 0.0
      %4011 = vmatprep.subr.mxu0 0.0
      %4012 = vmatpush1.msra.mxu0 0.0
      %4013 = vmatprep.subr.mxu0 0.0
      %4014 = vmatpush1.msra.mxu0 0.0
      %4015 = vmatprep.subr.mxu0 0.0
      %4016 = vmatpush1.msra.mxu0 0.0
      %4017 = vmatprep.mubr.f32.mxu0 0.0
      %4018 = vmatmul.mubr.f32.gmra.mrb[0].mxu0 %v3942
      %v4019 = vpop.f32.mrb[0].mxu0
      %v4020 = vadd.f32 0.0, %v4019
      %v4021 = vpop.f32.mrb[0].mxu0
      %v4022 = vadd.f32 0.0, %v4021
      %4023 = vmatprep.mubr.f32.mxu0 0.0
      %4024 = vmatmul.mubr.f32.gmra.mrb[0].mxu0 %v3945
      %v4025 = vpop.f32.mrb[0].mxu0
      %v4026 = vadd.f32 0.0, %v4025
      %v4027 = vpop.f32.mrb[0].mxu0
      %v4028 = vadd.f32 0.0, %v4027
      %4029 = vmatprep.mubr.f32.mxu0 0.0
      %4030 = vmatmul.mubr.f32.gmra.mrb[0].mxu0 %v3948
      %v4031 = vpop.f32.mrb[0].mxu0
      %v4032 = vadd.f32 0.0, %v4031
      %v4033 = vpop.f32.mrb[0].mxu0
      %v4034 = vadd.f32 0.0, %v4033
      %4035 = vmatprep.mubr.f32.mxu0 0.0
      %4036 = vmatmul.mubr.f32.gmra.mrb[0].mxu0 %v3951
      %v4037 = vpop.f32.mrb[0].mxu0
      %v4038 = vadd.f32 0.0, %v4037
      %v4039 = vpop.f32.mrb[0].mxu0
      %v4040 = vadd.f32 0.0, %v4039
      %4041 = vdwg.mxu0
      %v4042 = vadd.f32 %v3864, %v4020
      %v4043 = vadd.f32 %v3865, %v4022
      %v4044 = vadd.f32 %v3866, %v4026
      %v4045 = vadd.f32 %v3867, %v4028
      %v4046 = vadd.f32 %v3868, %v4032
      %v4047 = vadd.f32 %v3869, %v4034
      %v4048 = vadd.f32 %v3870, %v4038
      %v4049 = vadd.f32 %v3871, %v4040
      %s4050 = scalar_lea.vmem %s6, 128
      %v4051 = vld [vmem:[%s4050] sm:$0xff]
      %v4052 = vld [vmem:[%s4050 + $0x8] sm:$0xff]
      %v4053 = vld [vmem:[%s4050 + $0x10] sm:$0xff]
      %v4054 = vld [vmem:[%s4050 + $0x18] sm:$0xff]
      %v4056 = vsel %vm3491, %v4051, 0
      %v4059 = vsel %vm3491, %v4052, 0
      %v4062 = vsel %vm3491, %v4053, 0
      %v4065 = vsel %vm3491, %v4054, 0
      %4067 = vmatprep.subr.mxu0 %v3339
      %4068 = vmatpush1.msra.mxu0 %v3338
      %4069 = vmatprep.subr.mxu0 %v3341
      %4070 = vmatpush1.msra.mxu0 %v3340
      %4071 = vmatprep.subr.mxu0 %v3343
      %4072 = vmatpush1.msra.mxu0 %v3342
      %4073 = vmatprep.subr.mxu0 %v3345
      %4074 = vmatpush1.msra.mxu0 %v3344
      %4075 = vmatprep.subr.mxu0 %v3347
      %4076 = vmatpush1.msra.mxu0 %v3346
      %4077 = vmatprep.subr.mxu0 %v3349
      %4078 = vmatpush1.msra.mxu0 %v3348
      %4079 = vmatprep.subr.mxu0 %v3351
      %4080 = vmatpush1.msra.mxu0 %v3350
      %4081 = vmatprep.subr.mxu0 %v3353
      %4082 = vmatpush1.msra.mxu0 %v3352
      %4083 = vmatprep.subr.mxu0 0.0
      %4084 = vmatpush1.msra.mxu0 0.0
      %4085 = vmatprep.subr.mxu0 0.0
      %4086 = vmatpush1.msra.mxu0 0.0
      %4087 = vmatprep.subr.mxu0 0.0
      %4088 = vmatpush1.msra.mxu0 0.0
      %4089 = vmatprep.subr.mxu0 0.0
      %4090 = vmatpush1.msra.mxu0 0.0
      %4091 = vmatprep.subr.mxu0 0.0
      %4092 = vmatpush1.msra.mxu0 0.0
      %4093 = vmatprep.subr.mxu0 0.0
      %4094 = vmatpush1.msra.mxu0 0.0
      %4095 = vmatprep.subr.mxu0 0.0
      %4096 = vmatpush1.msra.mxu0 0.0
      %4097 = vmatprep.subr.mxu0 0.0
      %4098 = vmatpush1.msra.mxu0 0.0
      %4099 = vmatprep.subr.mxu0 0.0
      %4100 = vmatpush1.msra.mxu0 0.0
      %4101 = vmatprep.subr.mxu0 0.0
      %4102 = vmatpush1.msra.mxu0 0.0
      %4103 = vmatprep.subr.mxu0 0.0
      %4104 = vmatpush1.msra.mxu0 0.0
      %4105 = vmatprep.subr.mxu0 0.0
      %4106 = vmatpush1.msra.mxu0 0.0
      %4107 = vmatprep.subr.mxu0 0.0
      %4108 = vmatpush1.msra.mxu0 0.0
      %4109 = vmatprep.subr.mxu0 0.0
      %4110 = vmatpush1.msra.mxu0 0.0
      %4111 = vmatprep.subr.mxu0 0.0
      %4112 = vmatpush1.msra.mxu0 0.0
      %4113 = vmatprep.subr.mxu0 0.0
      %4114 = vmatpush1.msra.mxu0 0.0
      %4115 = vmatprep.subr.mxu0 0.0
      %4116 = vmatpush1.msra.mxu0 0.0
      %4117 = vmatprep.subr.mxu0 0.0
      %4118 = vmatpush1.msra.mxu0 0.0
      %4119 = vmatprep.subr.mxu0 0.0
      %4120 = vmatpush1.msra.mxu0 0.0
      %4121 = vmatprep.subr.mxu0 0.0
      %4122 = vmatpush1.msra.mxu0 0.0
      %4123 = vmatprep.subr.mxu0 0.0
      %4124 = vmatpush1.msra.mxu0 0.0
      %4125 = vmatprep.subr.mxu0 0.0
      %4126 = vmatpush1.msra.mxu0 0.0
      %4127 = vmatprep.subr.mxu0 0.0
      %4128 = vmatpush1.msra.mxu0 0.0
      %4129 = vmatprep.subr.mxu0 0.0
      %4130 = vmatpush1.msra.mxu0 0.0
      %4131 = vmatprep.mubr.f32.mxu0 0.0
      %4132 = vmatmul.mubr.f32.gmra.mrb[0].mxu0 %v4056
      %v4133 = vpop.f32.mrb[0].mxu0
      %v4134 = vadd.f32 0.0, %v4133
      %v4135 = vpop.f32.mrb[0].mxu0
      %v4136 = vadd.f32 0.0, %v4135
      %4137 = vmatprep.mubr.f32.mxu0 0.0
      %4138 = vmatmul.mubr.f32.gmra.mrb[0].mxu0 %v4059
      %v4139 = vpop.f32.mrb[0].mxu0
      %v4140 = vadd.f32 0.0, %v4139
      %v4141 = vpop.f32.mrb[0].mxu0
      %v4142 = vadd.f32 0.0, %v4141
      %4143 = vmatprep.mubr.f32.mxu0 0.0
      %4144 = vmatmul.mubr.f32.gmra.mrb[0].mxu0 %v4062
      %v4145 = vpop.f32.mrb[0].mxu0
      %v4146 = vadd.f32 0.0, %v4145
      %v4147 = vpop.f32.mrb[0].mxu0
      %v4148 = vadd.f32 0.0, %v4147
      %4149 = vmatprep.mubr.f32.mxu0 0.0
      %4150 = vmatmul.mubr.f32.gmra.mrb[0].mxu0 %v4065
      %v4151 = vpop.f32.mrb[0].mxu0
      %v4152 = vadd.f32 0.0, %v4151
      %v4153 = vpop.f32.mrb[0].mxu0
      %v4154 = vadd.f32 0.0, %v4153
      %4155 = vdwg.mxu0
      %v4156 = vadd.f32 %v4042, %v4134
      %v4157 = vadd.f32 %v4043, %v4136
      %v4158 = vadd.f32 %v4044, %v4140
      %v4159 = vadd.f32 %v4045, %v4142
      %v4160 = vadd.f32 %v4046, %v4146
      %v4161 = vadd.f32 %v4047, %v4148
      %v4162 = vadd.f32 %v4048, %v4152
      %v4163 = vadd.f32 %v4049, %v4154
      %4164 = vrot.lane.b32.xlu0 %v3338, 127
      %v4165 = vpop.permute.xlu0 %4164
      %4166 = vrot.lane.b32.xlu0 %v3340, 127
      %v4167 = vpop.permute.xlu0 %4166
      %4168 = vrot.lane.b32.xlu0 %v3342, 127
      %v4169 = vpop.permute.xlu0 %4168
      %4170 = vrot.lane.b32.xlu0 %v3344, 127
      %v4171 = vpop.permute.xlu0 %4170
      %4172 = vrot.lane.b32.xlu0 %v3346, 127
      %v4173 = vpop.permute.xlu0 %4172
      %4174 = vrot.lane.b32.xlu0 %v3348, 127
      %v4175 = vpop.permute.xlu0 %4174
      %4176 = vrot.lane.b32.xlu0 %v3350, 127
      %v4177 = vpop.permute.xlu0 %4176
      %4178 = vrot.lane.b32.xlu0 %v3352, 127
      %v4179 = vpop.permute.xlu0 %4178
      %4180 = vrot.lane.b32.xlu0 %v3339, 127
      %v4181 = vpop.permute.xlu0 %4180
      %4182 = vrot.lane.b32.xlu0 %v3341, 127
      %v4183 = vpop.permute.xlu0 %4182
      %4184 = vrot.lane.b32.xlu0 %v3343, 127
      %v4185 = vpop.permute.xlu0 %4184
      %4186 = vrot.lane.b32.xlu0 %v3345, 127
      %v4187 = vpop.permute.xlu0 %4186
      %4188 = vrot.lane.b32.xlu0 %v3347, 127
      %v4189 = vpop.permute.xlu0 %4188
      %4190 = vrot.lane.b32.xlu0 %v3349, 127
      %v4191 = vpop.permute.xlu0 %4190
      %4192 = vrot.lane.b32.xlu0 %v3351, 127
      %v4193 = vpop.permute.xlu0 %4192
      %4194 = vrot.lane.b32.xlu0 %v3353, 127
      %v4195 = vpop.permute.xlu0 %4194
      %v4196 = vsel %vm1012, %v4165, %v4181
      %v4197 = vsel %vm1012, %v4167, %v4183
      %v4198 = vsel %vm1012, %v4169, %v4185
      %v4199 = vsel %vm1012, %v4171, %v4187
      %v4200 = vsel %vm1012, %v4173, %v4189
      %v4201 = vsel %vm1012, %v4175, %v4191
      %v4202 = vsel %vm1012, %v4177, %v4193
      %v4203 = vsel %vm1012, %v4179, %v4195
      %v4204 = vsel %vm1012, %v4181, %v4165
      %v4205 = vsel %vm1012, %v4183, %v4167
      %v4206 = vsel %vm1012, %v4185, %v4169
      %v4207 = vsel %vm1012, %v4187, %v4171
      %v4208 = vsel %vm1012, %v4189, %v4173
      %v4209 = vsel %vm1012, %v4191, %v4175
      %v4210 = vsel %vm1012, %v4193, %v4177
      %v4211 = vsel %vm1012, %v4195, %v4179
      %v4212 = vmul.f32 %v4196, %v1021
      %v4213 = vmul.f32 %v4204, %v1025
      %v4214 = vmul.f32 %v4197, %v1021
      %v4215 = vmul.f32 %v4205, %v1025
      %v4216 = vmul.f32 %v4198, %v1021
      %v4217 = vmul.f32 %v4206, %v1025
      %v4218 = vmul.f32 %v4199, %v1021
      %v4219 = vmul.f32 %v4207, %v1025
      %v4220 = vmul.f32 %v4200, %v1021
      %v4221 = vmul.f32 %v4208, %v1025
      %v4222 = vmul.f32 %v4201, %v1021
      %v4223 = vmul.f32 %v4209, %v1025
      %v4224 = vmul.f32 %v4202, %v1021
      %v4225 = vmul.f32 %v4210, %v1025
      %v4226 = vmul.f32 %v4203, %v1021
      %v4227 = vmul.f32 %v4211, %v1025
      %s4228 = scalar_lea.vmem %s6, 160
      %v4229 = vld [vmem:[%s4228] sm:$0xff]
      %v4230 = vld [vmem:[%s4228 + $0x8] sm:$0xff]
      %v4231 = vld [vmem:[%s4228 + $0x10] sm:$0xff]
      %v4232 = vld [vmem:[%s4228 + $0x18] sm:$0xff]
      %v4234 = vsel %vm3491, %v4229, 0
      %v4237 = vsel %vm3491, %v4230, 0
      %v4240 = vsel %vm3491, %v4231, 0
      %v4243 = vsel %vm3491, %v4232, 0
      %4245 = vmatprep.subr.mxu0 %v4213
      %4246 = vmatpush1.msra.mxu0 %v4212
      %4247 = vmatprep.subr.mxu0 %v4215
      %4248 = vmatpush1.msra.mxu0 %v4214
      %4249 = vmatprep.subr.mxu0 %v4217
      %4250 = vmatpush1.msra.mxu0 %v4216
      %4251 = vmatprep.subr.mxu0 %v4219
      %4252 = vmatpush1.msra.mxu0 %v4218
      %4253 = vmatprep.subr.mxu0 %v4221
      %4254 = vmatpush1.msra.mxu0 %v4220
      %4255 = vmatprep.subr.mxu0 %v4223
      %4256 = vmatpush1.msra.mxu0 %v4222
      %4257 = vmatprep.subr.mxu0 %v4225
      %4258 = vmatpush1.msra.mxu0 %v4224
      %4259 = vmatprep.subr.mxu0 %v4227
      %4260 = vmatpush1.msra.mxu0 %v4226
      %4261 = vmatprep.subr.mxu0 0.0
      %4262 = vmatpush1.msra.mxu0 0.0
      %4263 = vmatprep.subr.mxu0 0.0
      %4264 = vmatpush1.msra.mxu0 0.0
      %4265 = vmatprep.subr.mxu0 0.0
      %4266 = vmatpush1.msra.mxu0 0.0
      %4267 = vmatprep.subr.mxu0 0.0
      %4268 = vmatpush1.msra.mxu0 0.0
      %4269 = vmatprep.subr.mxu0 0.0
      %4270 = vmatpush1.msra.mxu0 0.0
      %4271 = vmatprep.subr.mxu0 0.0
      %4272 = vmatpush1.msra.mxu0 0.0
      %4273 = vmatprep.subr.mxu0 0.0
      %4274 = vmatpush1.msra.mxu0 0.0
      %4275 = vmatprep.subr.mxu0 0.0
      %4276 = vmatpush1.msra.mxu0 0.0
      %4277 = vmatprep.subr.mxu0 0.0
      %4278 = vmatpush1.msra.mxu0 0.0
      %4279 = vmatprep.subr.mxu0 0.0
      %4280 = vmatpush1.msra.mxu0 0.0
      %4281 = vmatprep.subr.mxu0 0.0
      %4282 = vmatpush1.msra.mxu0 0.0
      %4283 = vmatprep.subr.mxu0 0.0
      %4284 = vmatpush1.msra.mxu0 0.0
      %4285 = vmatprep.subr.mxu0 0.0
      %4286 = vmatpush1.msra.mxu0 0.0
      %4287 = vmatprep.subr.mxu0 0.0
      %4288 = vmatpush1.msra.mxu0 0.0
      %4289 = vmatprep.subr.mxu0 0.0
      %4290 = vmatpush1.msra.mxu0 0.0
      %4291 = vmatprep.subr.mxu0 0.0
      %4292 = vmatpush1.msra.mxu0 0.0
      %4293 = vmatprep.subr.mxu0 0.0
      %4294 = vmatpush1.msra.mxu0 0.0
      %4295 = vmatprep.subr.mxu0 0.0
      %4296 = vmatpush1.msra.mxu0 0.0
      %4297 = vmatprep.subr.mxu0 0.0
      %4298 = vmatpush1.msra.mxu0 0.0
      %4299 = vmatprep.subr.mxu0 0.0
      %4300 = vmatpush1.msra.mxu0 0.0
      %4301 = vmatprep.subr.mxu0 0.0
      %4302 = vmatpush1.msra.mxu0 0.0
      %4303 = vmatprep.subr.mxu0 0.0
      %4304 = vmatpush1.msra.mxu0 0.0
      %4305 = vmatprep.subr.mxu0 0.0
      %4306 = vmatpush1.msra.mxu0 0.0
      %4307 = vmatprep.subr.mxu0 0.0
      %4308 = vmatpush1.msra.mxu0 0.0
      %4309 = vmatprep.mubr.f32.mxu0 0.0
      %4310 = vmatmul.mubr.f32.gmra.mrb[0].mxu0 %v4234
      %v4311 = vpop.f32.mrb[0].mxu0
      %v4312 = vadd.f32 0.0, %v4311
      %v4313 = vpop.f32.mrb[0].mxu0
      %v4314 = vadd.f32 0.0, %v4313
      %4315 = vmatprep.mubr.f32.mxu0 0.0
      %4316 = vmatmul.mubr.f32.gmra.mrb[0].mxu0 %v4237
      %v4317 = vpop.f32.mrb[0].mxu0
      %v4318 = vadd.f32 0.0, %v4317
      %v4319 = vpop.f32.mrb[0].mxu0
      %v4320 = vadd.f32 0.0, %v4319
      %4321 = vmatprep.mubr.f32.mxu0 0.0
      %4322 = vmatmul.mubr.f32.gmra.mrb[0].mxu0 %v4240
      %v4323 = vpop.f32.mrb[0].mxu0
      %v4324 = vadd.f32 0.0, %v4323
      %v4325 = vpop.f32.mrb[0].mxu0
      %v4326 = vadd.f32 0.0, %v4325
      %4327 = vmatprep.mubr.f32.mxu0 0.0
      %4328 = vmatmul.mubr.f32.gmra.mrb[0].mxu0 %v4243
      %v4329 = vpop.f32.mrb[0].mxu0
      %v4330 = vadd.f32 0.0, %v4329
      %v4331 = vpop.f32.mrb[0].mxu0
      %v4332 = vadd.f32 0.0, %v4331
      %4333 = vdwg.mxu0
      %v4334 = vadd.f32 %v4156, %v4312
      %v4335 = vadd.f32 %v4157, %v4314
      %v4336 = vadd.f32 %v4158, %v4318
      %v4337 = vadd.f32 %v4159, %v4320
      %v4338 = vadd.f32 %v4160, %v4324
      %v4339 = vadd.f32 %v4161, %v4326
      %v4340 = vadd.f32 %v4162, %v4330
      %v4341 = vadd.f32 %v4163, %v4332
      %4342 = vrot.lane.b32.xlu0 %v3338, 113
      %v4343 = vpop.permute.xlu0 %4342
      %4344 = vrot.lane.b32.xlu0 %v3340, 113
      %v4345 = vpop.permute.xlu0 %4344
      %4346 = vrot.lane.b32.xlu0 %v3342, 113
      %v4347 = vpop.permute.xlu0 %4346
      %4348 = vrot.lane.b32.xlu0 %v3344, 113
      %v4349 = vpop.permute.xlu0 %4348
      %4350 = vrot.lane.b32.xlu0 %v3346, 113
      %v4351 = vpop.permute.xlu0 %4350
      %4352 = vrot.lane.b32.xlu0 %v3348, 113
      %v4353 = vpop.permute.xlu0 %4352
      %4354 = vrot.lane.b32.xlu0 %v3350, 113
      %v4355 = vpop.permute.xlu0 %4354
      %4356 = vrot.lane.b32.xlu0 %v3352, 113
      %v4357 = vpop.permute.xlu0 %4356
      %4358 = vrot.lane.b32.xlu0 %v3339, 113
      %v4359 = vpop.permute.xlu0 %4358
      %4360 = vrot.lane.b32.xlu0 %v3341, 113
      %v4361 = vpop.permute.xlu0 %4360
      %4362 = vrot.lane.b32.xlu0 %v3343, 113
      %v4363 = vpop.permute.xlu0 %4362
      %4364 = vrot.lane.b32.xlu0 %v3345, 113
      %v4365 = vpop.permute.xlu0 %4364
      %4366 = vrot.lane.b32.xlu0 %v3347, 113
      %v4367 = vpop.permute.xlu0 %4366
      %4368 = vrot.lane.b32.xlu0 %v3349, 113
      %v4369 = vpop.permute.xlu0 %4368
      %4370 = vrot.lane.b32.xlu0 %v3351, 113
      %v4371 = vpop.permute.xlu0 %4370
      %4372 = vrot.lane.b32.xlu0 %v3353, 113
      %v4373 = vpop.permute.xlu0 %4372
      %v4374 = vsel %vm1148, %v4343, %v4359
      %v4375 = vsel %vm1148, %v4345, %v4361
      %v4376 = vsel %vm1148, %v4347, %v4363
      %v4377 = vsel %vm1148, %v4349, %v4365
      %v4378 = vsel %vm1148, %v4351, %v4367
      %v4379 = vsel %vm1148, %v4353, %v4369
      %v4380 = vsel %vm1148, %v4355, %v4371
      %v4381 = vsel %vm1148, %v4357, %v4373
      %v4382 = vsel %vm1148, %v4359, %v4343
      %v4383 = vsel %vm1148, %v4361, %v4345
      %v4384 = vsel %vm1148, %v4363, %v4347
      %v4385 = vsel %vm1148, %v4365, %v4349
      %v4386 = vsel %vm1148, %v4367, %v4351
      %v4387 = vsel %vm1148, %v4369, %v4353
      %v4388 = vsel %vm1148, %v4371, %v4355
      %v4389 = vsel %vm1148, %v4373, %v4357
      %v4390 = vmul.f32 %v4374, %v1157
      %v4391 = vmul.f32 %v4382, %v1161
      %v4392 = vmul.f32 %v4375, %v1157
      %v4393 = vmul.f32 %v4383, %v1161
      %v4394 = vmul.f32 %v4376, %v1157
      %v4395 = vmul.f32 %v4384, %v1161
      %v4396 = vmul.f32 %v4377, %v1157
      %v4397 = vmul.f32 %v4385, %v1161
      %v4398 = vmul.f32 %v4378, %v1157
      %v4399 = vmul.f32 %v4386, %v1161
      %v4400 = vmul.f32 %v4379, %v1157
      %v4401 = vmul.f32 %v4387, %v1161
      %v4402 = vmul.f32 %v4380, %v1157
      %v4403 = vmul.f32 %v4388, %v1161
      %v4404 = vmul.f32 %v4381, %v1157
      %v4405 = vmul.f32 %v4389, %v1161
      %s4406 = scalar_lea.vmem %s6, 192
      %v4407 = vld [vmem:[%s4406] sm:$0xff]
      %v4408 = vld [vmem:[%s4406 + $0x8] sm:$0xff]
      %v4409 = vld [vmem:[%s4406 + $0x10] sm:$0xff]
      %v4410 = vld [vmem:[%s4406 + $0x18] sm:$0xff]
      %v4412 = vsel %vm3491, %v4407, 0
      %v4415 = vsel %vm3491, %v4408, 0
      %v4418 = vsel %vm3491, %v4409, 0
      %v4421 = vsel %vm3491, %v4410, 0
      %4423 = vmatprep.subr.mxu0 %v4391
      %4424 = vmatpush1.msra.mxu0 %v4390
      %4425 = vmatprep.subr.mxu0 %v4393
      %4426 = vmatpush1.msra.mxu0 %v4392
      %4427 = vmatprep.subr.mxu0 %v4395
      %4428 = vmatpush1.msra.mxu0 %v4394
      %4429 = vmatprep.subr.mxu0 %v4397
      %4430 = vmatpush1.msra.mxu0 %v4396
      %4431 = vmatprep.subr.mxu0 %v4399
      %4432 = vmatpush1.msra.mxu0 %v4398
      %4433 = vmatprep.subr.mxu0 %v4401
      %4434 = vmatpush1.msra.mxu0 %v4400
      %4435 = vmatprep.subr.mxu0 %v4403
      %4436 = vmatpush1.msra.mxu0 %v4402
      %4437 = vmatprep.subr.mxu0 %v4405
      %4438 = vmatpush1.msra.mxu0 %v4404
      %4439 = vmatprep.subr.mxu0 0.0
      %4440 = vmatpush1.msra.mxu0 0.0
      %4441 = vmatprep.subr.mxu0 0.0
      %4442 = vmatpush1.msra.mxu0 0.0
      %4443 = vmatprep.subr.mxu0 0.0
      %4444 = vmatpush1.msra.mxu0 0.0
      %4445 = vmatprep.subr.mxu0 0.0
      %4446 = vmatpush1.msra.mxu0 0.0
      %4447 = vmatprep.subr.mxu0 0.0
      %4448 = vmatpush1.msra.mxu0 0.0
      %4449 = vmatprep.subr.mxu0 0.0
      %4450 = vmatpush1.msra.mxu0 0.0
      %4451 = vmatprep.subr.mxu0 0.0
      %4452 = vmatpush1.msra.mxu0 0.0
      %4453 = vmatprep.subr.mxu0 0.0
      %4454 = vmatpush1.msra.mxu0 0.0
      %4455 = vmatprep.subr.mxu0 0.0
      %4456 = vmatpush1.msra.mxu0 0.0
      %4457 = vmatprep.subr.mxu0 0.0
      %4458 = vmatpush1.msra.mxu0 0.0
      %4459 = vmatprep.subr.mxu0 0.0
      %4460 = vmatpush1.msra.mxu0 0.0
      %4461 = vmatprep.subr.mxu0 0.0
      %4462 = vmatpush1.msra.mxu0 0.0
      %4463 = vmatprep.subr.mxu0 0.0
      %4464 = vmatpush1.msra.mxu0 0.0
      %4465 = vmatprep.subr.mxu0 0.0
      %4466 = vmatpush1.msra.mxu0 0.0
      %4467 = vmatprep.subr.mxu0 0.0
      %4468 = vmatpush1.msra.mxu0 0.0
      %4469 = vmatprep.subr.mxu0 0.0
      %4470 = vmatpush1.msra.mxu0 0.0
      %4471 = vmatprep.subr.mxu0 0.0
      %4472 = vmatpush1.msra.mxu0 0.0
      %4473 = vmatprep.subr.mxu0 0.0
      %4474 = vmatpush1.msra.mxu0 0.0
      %4475 = vmatprep.subr.mxu0 0.0
      %4476 = vmatpush1.msra.mxu0 0.0
      %4477 = vmatprep.subr.mxu0 0.0
      %4478 = vmatpush1.msra.mxu0 0.0
      %4479 = vmatprep.subr.mxu0 0.0
      %4480 = vmatpush1.msra.mxu0 0.0
      %4481 = vmatprep.subr.mxu0 0.0
      %4482 = vmatpush1.msra.mxu0 0.0
      %4483 = vmatprep.subr.mxu0 0.0
      %4484 = vmatpush1.msra.mxu0 0.0
      %4485 = vmatprep.subr.mxu0 0.0
      %4486 = vmatpush1.msra.mxu0 0.0
      %4487 = vmatprep.mubr.f32.mxu0 0.0
      %4488 = vmatmul.mubr.f32.gmra.mrb[0].mxu0 %v4412
      %v4489 = vpop.f32.mrb[0].mxu0
      %v4490 = vadd.f32 0.0, %v4489
      %v4491 = vpop.f32.mrb[0].mxu0
      %v4492 = vadd.f32 0.0, %v4491
      %4493 = vmatprep.mubr.f32.mxu0 0.0
      %4494 = vmatmul.mubr.f32.gmra.mrb[0].mxu0 %v4415
      %v4495 = vpop.f32.mrb[0].mxu0
      %v4496 = vadd.f32 0.0, %v4495
      %v4497 = vpop.f32.mrb[0].mxu0
      %v4498 = vadd.f32 0.0, %v4497
      %4499 = vmatprep.mubr.f32.mxu0 0.0
      %4500 = vmatmul.mubr.f32.gmra.mrb[0].mxu0 %v4418
      %v4501 = vpop.f32.mrb[0].mxu0
      %v4502 = vadd.f32 0.0, %v4501
      %v4503 = vpop.f32.mrb[0].mxu0
      %v4504 = vadd.f32 0.0, %v4503
      %4505 = vmatprep.mubr.f32.mxu0 0.0
      %4506 = vmatmul.mubr.f32.gmra.mrb[0].mxu0 %v4421
      %v4507 = vpop.f32.mrb[0].mxu0
      %v4508 = vadd.f32 0.0, %v4507
      %v4509 = vpop.f32.mrb[0].mxu0
      %v4510 = vadd.f32 0.0, %v4509
      %4511 = vdwg.mxu0
      %v4512 = vadd.f32 %v4334, %v4490
      %v4513 = vadd.f32 %v4335, %v4492
      %v4514 = vadd.f32 %v4336, %v4496
      %v4515 = vadd.f32 %v4337, %v4498
      %v4516 = vadd.f32 %v4338, %v4502
      %v4517 = vadd.f32 %v4339, %v4504
      %v4518 = vadd.f32 %v4340, %v4508
      %v4519 = vadd.f32 %v4341, %v4510
      %4520 = vrot.lane.b32.xlu0 %v3338, 112
      %v4521 = vpop.permute.xlu0 %4520
      %4522 = vrot.lane.b32.xlu0 %v3340, 112
      %v4523 = vpop.permute.xlu0 %4522
      %4524 = vrot.lane.b32.xlu0 %v3342, 112
      %v4525 = vpop.permute.xlu0 %4524
      %4526 = vrot.lane.b32.xlu0 %v3344, 112
      %v4527 = vpop.permute.xlu0 %4526
      %4528 = vrot.lane.b32.xlu0 %v3346, 112
      %v4529 = vpop.permute.xlu0 %4528
      %4530 = vrot.lane.b32.xlu0 %v3348, 112
      %v4531 = vpop.permute.xlu0 %4530
      %4532 = vrot.lane.b32.xlu0 %v3350, 112
      %v4533 = vpop.permute.xlu0 %4532
      %4534 = vrot.lane.b32.xlu0 %v3352, 112
      %v4535 = vpop.permute.xlu0 %4534
      %4536 = vrot.lane.b32.xlu0 %v3339, 112
      %v4537 = vpop.permute.xlu0 %4536
      %4538 = vrot.lane.b32.xlu0 %v3341, 112
      %v4539 = vpop.permute.xlu0 %4538
      %4540 = vrot.lane.b32.xlu0 %v3343, 112
      %v4541 = vpop.permute.xlu0 %4540
      %4542 = vrot.lane.b32.xlu0 %v3345, 112
      %v4543 = vpop.permute.xlu0 %4542
      %4544 = vrot.lane.b32.xlu0 %v3347, 112
      %v4545 = vpop.permute.xlu0 %4544
      %4546 = vrot.lane.b32.xlu0 %v3349, 112
      %v4547 = vpop.permute.xlu0 %4546
      %4548 = vrot.lane.b32.xlu0 %v3351, 112
      %v4549 = vpop.permute.xlu0 %4548
      %4550 = vrot.lane.b32.xlu0 %v3353, 112
      %v4551 = vpop.permute.xlu0 %4550
      %v4552 = vsel %vm1284, %v4521, %v4537
      %v4553 = vsel %vm1284, %v4523, %v4539
      %v4554 = vsel %vm1284, %v4525, %v4541
      %v4555 = vsel %vm1284, %v4527, %v4543
      %v4556 = vsel %vm1284, %v4529, %v4545
      %v4557 = vsel %vm1284, %v4531, %v4547
      %v4558 = vsel %vm1284, %v4533, %v4549
      %v4559 = vsel %vm1284, %v4535, %v4551
      %v4560 = vsel %vm1284, %v4537, %v4521
      %v4561 = vsel %vm1284, %v4539, %v4523
      %v4562 = vsel %vm1284, %v4541, %v4525
      %v4563 = vsel %vm1284, %v4543, %v4527
      %v4564 = vsel %vm1284, %v4545, %v4529
      %v4565 = vsel %vm1284, %v4547, %v4531
      %v4566 = vsel %vm1284, %v4549, %v4533
      %v4567 = vsel %vm1284, %v4551, %v4535
      %v4568 = vmul.f32 %v4552, %v1293
      %v4569 = vmul.f32 %v4560, %v1297
      %v4570 = vmul.f32 %v4553, %v1293
      %v4571 = vmul.f32 %v4561, %v1297
      %v4572 = vmul.f32 %v4554, %v1293
      %v4573 = vmul.f32 %v4562, %v1297
      %v4574 = vmul.f32 %v4555, %v1293
      %v4575 = vmul.f32 %v4563, %v1297
      %v4576 = vmul.f32 %v4556, %v1293
      %v4577 = vmul.f32 %v4564, %v1297
      %v4578 = vmul.f32 %v4557, %v1293
      %v4579 = vmul.f32 %v4565, %v1297
      %v4580 = vmul.f32 %v4558, %v1293
      %v4581 = vmul.f32 %v4566, %v1297
      %v4582 = vmul.f32 %v4559, %v1293
      %v4583 = vmul.f32 %v4567, %v1297
      %s4584 = scalar_lea.vmem %s6, 224
      %v4585 = vld [vmem:[%s4584] sm:$0xff]
      %v4586 = vld [vmem:[%s4584 + $0x8] sm:$0xff]
      %v4587 = vld [vmem:[%s4584 + $0x10] sm:$0xff]
      %v4588 = vld [vmem:[%s4584 + $0x18] sm:$0xff]
      %v4590 = vsel %vm3491, %v4585, 0
      %v4593 = vsel %vm3491, %v4586, 0
      %v4596 = vsel %vm3491, %v4587, 0
      %v4599 = vsel %vm3491, %v4588, 0
      %4601 = vmatprep.subr.mxu0 %v4569
      %4602 = vmatpush1.msra.mxu0 %v4568
      %4603 = vmatprep.subr.mxu0 %v4571
      %4604 = vmatpush1.msra.mxu0 %v4570
      %4605 = vmatprep.subr.mxu0 %v4573
      %4606 = vmatpush1.msra.mxu0 %v4572
      %4607 = vmatprep.subr.mxu0 %v4575
      %4608 = vmatpush1.msra.mxu0 %v4574
      %4609 = vmatprep.subr.mxu0 %v4577
      %4610 = vmatpush1.msra.mxu0 %v4576
      %4611 = vmatprep.subr.mxu0 %v4579
      %4612 = vmatpush1.msra.mxu0 %v4578
      %4613 = vmatprep.subr.mxu0 %v4581
      %4614 = vmatpush1.msra.mxu0 %v4580
      %4615 = vmatprep.subr.mxu0 %v4583
      %4616 = vmatpush1.msra.mxu0 %v4582
      %4617 = vmatprep.subr.mxu0 0.0
      %4618 = vmatpush1.msra.mxu0 0.0
      %4619 = vmatprep.subr.mxu0 0.0
      %4620 = vmatpush1.msra.mxu0 0.0
      %4621 = vmatprep.subr.mxu0 0.0
      %4622 = vmatpush1.msra.mxu0 0.0
      %4623 = vmatprep.subr.mxu0 0.0
      %4624 = vmatpush1.msra.mxu0 0.0
      %4625 = vmatprep.subr.mxu0 0.0
      %4626 = vmatpush1.msra.mxu0 0.0
      %4627 = vmatprep.subr.mxu0 0.0
      %4628 = vmatpush1.msra.mxu0 0.0
      %4629 = vmatprep.subr.mxu0 0.0
      %4630 = vmatpush1.msra.mxu0 0.0
      %4631 = vmatprep.subr.mxu0 0.0
      %4632 = vmatpush1.msra.mxu0 0.0
      %4633 = vmatprep.subr.mxu0 0.0
      %4634 = vmatpush1.msra.mxu0 0.0
      %4635 = vmatprep.subr.mxu0 0.0
      %4636 = vmatpush1.msra.mxu0 0.0
      %4637 = vmatprep.subr.mxu0 0.0
      %4638 = vmatpush1.msra.mxu0 0.0
      %4639 = vmatprep.subr.mxu0 0.0
      %4640 = vmatpush1.msra.mxu0 0.0
      %4641 = vmatprep.subr.mxu0 0.0
      %4642 = vmatpush1.msra.mxu0 0.0
      %4643 = vmatprep.subr.mxu0 0.0
      %4644 = vmatpush1.msra.mxu0 0.0
      %4645 = vmatprep.subr.mxu0 0.0
      %4646 = vmatpush1.msra.mxu0 0.0
      %4647 = vmatprep.subr.mxu0 0.0
      %4648 = vmatpush1.msra.mxu0 0.0
      %4649 = vmatprep.subr.mxu0 0.0
      %4650 = vmatpush1.msra.mxu0 0.0
      %4651 = vmatprep.subr.mxu0 0.0
      %4652 = vmatpush1.msra.mxu0 0.0
      %4653 = vmatprep.subr.mxu0 0.0
      %4654 = vmatpush1.msra.mxu0 0.0
      %4655 = vmatprep.subr.mxu0 0.0
      %4656 = vmatpush1.msra.mxu0 0.0
      %4657 = vmatprep.subr.mxu0 0.0
      %4658 = vmatpush1.msra.mxu0 0.0
      %4659 = vmatprep.subr.mxu0 0.0
      %4660 = vmatpush1.msra.mxu0 0.0
      %4661 = vmatprep.subr.mxu0 0.0
      %4662 = vmatpush1.msra.mxu0 0.0
      %4663 = vmatprep.subr.mxu0 0.0
      %4664 = vmatpush1.msra.mxu0 0.0
      %4665 = vmatprep.mubr.f32.mxu0 0.0
      %4666 = vmatmul.mubr.f32.gmra.mrb[0].mxu0 %v4590
      %v4667 = vpop.f32.mrb[0].mxu0
      %v4668 = vadd.f32 0.0, %v4667
      %v4669 = vpop.f32.mrb[0].mxu0
      %v4670 = vadd.f32 0.0, %v4669
      %4671 = vmatprep.mubr.f32.mxu0 0.0
      %4672 = vmatmul.mubr.f32.gmra.mrb[0].mxu0 %v4593
      %v4673 = vpop.f32.mrb[0].mxu0
      %v4674 = vadd.f32 0.0, %v4673
      %v4675 = vpop.f32.mrb[0].mxu0
      %v4676 = vadd.f32 0.0, %v4675
      %4677 = vmatprep.mubr.f32.mxu0 0.0
      %4678 = vmatmul.mubr.f32.gmra.mrb[0].mxu0 %v4596
      %v4679 = vpop.f32.mrb[0].mxu0
      %v4680 = vadd.f32 0.0, %v4679
      %v4681 = vpop.f32.mrb[0].mxu0
      %v4682 = vadd.f32 0.0, %v4681
      %4683 = vmatprep.mubr.f32.mxu0 0.0
      %4684 = vmatmul.mubr.f32.gmra.mrb[0].mxu0 %v4599
      %v4685 = vpop.f32.mrb[0].mxu0
      %v4686 = vadd.f32 0.0, %v4685
      %v4687 = vpop.f32.mrb[0].mxu0
      %v4688 = vadd.f32 0.0, %v4687
      %4689 = vdwg.mxu0
      %v4690 = vadd.f32 %v4512, %v4668
      %v4691 = vadd.f32 %v4513, %v4670
      %v4692 = vadd.f32 %v4514, %v4674
      %v4693 = vadd.f32 %v4515, %v4676
      %v4694 = vadd.f32 %v4516, %v4680
      %v4695 = vadd.f32 %v4517, %v4682
      %v4696 = vadd.f32 %v4518, %v4686
      %v4697 = vadd.f32 %v4519, %v4688
      %4698 = vrot.lane.b32.xlu0 %v3338, 111
      %v4699 = vpop.permute.xlu0 %4698
      %4700 = vrot.lane.b32.xlu0 %v3340, 111
      %v4701 = vpop.permute.xlu0 %4700
      %4702 = vrot.lane.b32.xlu0 %v3342, 111
      %v4703 = vpop.permute.xlu0 %4702
      %4704 = vrot.lane.b32.xlu0 %v3344, 111
      %v4705 = vpop.permute.xlu0 %4704
      %4706 = vrot.lane.b32.xlu0 %v3346, 111
      %v4707 = vpop.permute.xlu0 %4706
      %4708 = vrot.lane.b32.xlu0 %v3348, 111
      %v4709 = vpop.permute.xlu0 %4708
      %4710 = vrot.lane.b32.xlu0 %v3350, 111
      %v4711 = vpop.permute.xlu0 %4710
      %4712 = vrot.lane.b32.xlu0 %v3352, 111
      %v4713 = vpop.permute.xlu0 %4712
      %4714 = vrot.lane.b32.xlu0 %v3339, 111
      %v4715 = vpop.permute.xlu0 %4714
      %4716 = vrot.lane.b32.xlu0 %v3341, 111
      %v4717 = vpop.permute.xlu0 %4716
      %4718 = vrot.lane.b32.xlu0 %v3343, 111
      %v4719 = vpop.permute.xlu0 %4718
      %4720 = vrot.lane.b32.xlu0 %v3345, 111
      %v4721 = vpop.permute.xlu0 %4720
      %4722 = vrot.lane.b32.xlu0 %v3347, 111
      %v4723 = vpop.permute.xlu0 %4722
      %4724 = vrot.lane.b32.xlu0 %v3349, 111
      %v4725 = vpop.permute.xlu0 %4724
      %4726 = vrot.lane.b32.xlu0 %v3351, 111
      %v4727 = vpop.permute.xlu0 %4726
      %4728 = vrot.lane.b32.xlu0 %v3353, 111
      %v4729 = vpop.permute.xlu0 %4728
      %v4730 = vsel %vm1420, %v4699, %v4715
      %v4731 = vsel %vm1420, %v4701, %v4717
      %v4732 = vsel %vm1420, %v4703, %v4719
      %v4733 = vsel %vm1420, %v4705, %v4721
      %v4734 = vsel %vm1420, %v4707, %v4723
      %v4735 = vsel %vm1420, %v4709, %v4725
      %v4736 = vsel %vm1420, %v4711, %v4727
      %v4737 = vsel %vm1420, %v4713, %v4729
      %v4738 = vsel %vm1420, %v4715, %v4699
      %v4739 = vsel %vm1420, %v4717, %v4701
      %v4740 = vsel %vm1420, %v4719, %v4703
      %v4741 = vsel %vm1420, %v4721, %v4705
      %v4742 = vsel %vm1420, %v4723, %v4707
      %v4743 = vsel %vm1420, %v4725, %v4709
      %v4744 = vsel %vm1420, %v4727, %v4711
      %v4745 = vsel %vm1420, %v4729, %v4713
      %v4746 = vmul.f32 %v4730, %v1429
      %v4747 = vmul.f32 %v4738, %v1433
      %v4748 = vmul.f32 %v4731, %v1429
      %v4749 = vmul.f32 %v4739, %v1433
      %v4750 = vmul.f32 %v4732, %v1429
      %v4751 = vmul.f32 %v4740, %v1433
      %v4752 = vmul.f32 %v4733, %v1429
      %v4753 = vmul.f32 %v4741, %v1433
      %v4754 = vmul.f32 %v4734, %v1429
      %v4755 = vmul.f32 %v4742, %v1433
      %v4756 = vmul.f32 %v4735, %v1429
      %v4757 = vmul.f32 %v4743, %v1433
      %v4758 = vmul.f32 %v4736, %v1429
      %v4759 = vmul.f32 %v4744, %v1433
      %v4760 = vmul.f32 %v4737, %v1429
      %v4761 = vmul.f32 %v4745, %v1433
      %s4762 = scalar_lea.vmem %s6, 256
      %v4763 = vld [vmem:[%s4762] sm:$0xff]
      %v4764 = vld [vmem:[%s4762 + $0x8] sm:$0xff]
      %v4765 = vld [vmem:[%s4762 + $0x10] sm:$0xff]
      %v4766 = vld [vmem:[%s4762 + $0x18] sm:$0xff]
      %v4768 = vsel %vm3491, %v4763, 0
      %v4771 = vsel %vm3491, %v4764, 0
      %v4774 = vsel %vm3491, %v4765, 0
      %v4777 = vsel %vm3491, %v4766, 0
      %4779 = vmatprep.subr.mxu0 %v4747
      %4780 = vmatpush1.msra.mxu0 %v4746
      %4781 = vmatprep.subr.mxu0 %v4749
      %4782 = vmatpush1.msra.mxu0 %v4748
      %4783 = vmatprep.subr.mxu0 %v4751
      %4784 = vmatpush1.msra.mxu0 %v4750
      %4785 = vmatprep.subr.mxu0 %v4753
      %4786 = vmatpush1.msra.mxu0 %v4752
      %4787 = vmatprep.subr.mxu0 %v4755
      %4788 = vmatpush1.msra.mxu0 %v4754
      %4789 = vmatprep.subr.mxu0 %v4757
      %4790 = vmatpush1.msra.mxu0 %v4756
      %4791 = vmatprep.subr.mxu0 %v4759
      %4792 = vmatpush1.msra.mxu0 %v4758
      %4793 = vmatprep.subr.mxu0 %v4761
      %4794 = vmatpush1.msra.mxu0 %v4760
      %4795 = vmatprep.subr.mxu0 0.0
      %4796 = vmatpush1.msra.mxu0 0.0
      %4797 = vmatprep.subr.mxu0 0.0
      %4798 = vmatpush1.msra.mxu0 0.0
      %4799 = vmatprep.subr.mxu0 0.0
      %4800 = vmatpush1.msra.mxu0 0.0
      %4801 = vmatprep.subr.mxu0 0.0
      %4802 = vmatpush1.msra.mxu0 0.0
      %4803 = vmatprep.subr.mxu0 0.0
      %4804 = vmatpush1.msra.mxu0 0.0
      %4805 = vmatprep.subr.mxu0 0.0
      %4806 = vmatpush1.msra.mxu0 0.0
      %4807 = vmatprep.subr.mxu0 0.0
      %4808 = vmatpush1.msra.mxu0 0.0
      %4809 = vmatprep.subr.mxu0 0.0
      %4810 = vmatpush1.msra.mxu0 0.0
      %4811 = vmatprep.subr.mxu0 0.0
      %4812 = vmatpush1.msra.mxu0 0.0
      %4813 = vmatprep.subr.mxu0 0.0
      %4814 = vmatpush1.msra.mxu0 0.0
      %4815 = vmatprep.subr.mxu0 0.0
      %4816 = vmatpush1.msra.mxu0 0.0
      %4817 = vmatprep.subr.mxu0 0.0
      %4818 = vmatpush1.msra.mxu0 0.0
      %4819 = vmatprep.subr.mxu0 0.0
      %4820 = vmatpush1.msra.mxu0 0.0
      %4821 = vmatprep.subr.mxu0 0.0
      %4822 = vmatpush1.msra.mxu0 0.0
      %4823 = vmatprep.subr.mxu0 0.0
      %4824 = vmatpush1.msra.mxu0 0.0
      %4825 = vmatprep.subr.mxu0 0.0
      %4826 = vmatpush1.msra.mxu0 0.0
      %4827 = vmatprep.subr.mxu0 0.0
      %4828 = vmatpush1.msra.mxu0 0.0
      %4829 = vmatprep.subr.mxu0 0.0
      %4830 = vmatpush1.msra.mxu0 0.0
      %4831 = vmatprep.subr.mxu0 0.0
      %4832 = vmatpush1.msra.mxu0 0.0
      %4833 = vmatprep.subr.mxu0 0.0
      %4834 = vmatpush1.msra.mxu0 0.0
      %4835 = vmatprep.subr.mxu0 0.0
      %4836 = vmatpush1.msra.mxu0 0.0
      %4837 = vmatprep.subr.mxu0 0.0
      %4838 = vmatpush1.msra.mxu0 0.0
      %4839 = vmatprep.subr.mxu0 0.0
      %4840 = vmatpush1.msra.mxu0 0.0
      %4841 = vmatprep.subr.mxu0 0.0
      %4842 = vmatpush1.msra.mxu0 0.0
      %4843 = vmatprep.mubr.f32.mxu0 0.0
      %4844 = vmatmul.mubr.f32.gmra.mrb[0].mxu0 %v4768
      %v4845 = vpop.f32.mrb[0].mxu0
      %v4846 = vadd.f32 0.0, %v4845
      %v4847 = vpop.f32.mrb[0].mxu0
      %v4848 = vadd.f32 0.0, %v4847
      %4849 = vmatprep.mubr.f32.mxu0 0.0
      %4850 = vmatmul.mubr.f32.gmra.mrb[0].mxu0 %v4771
      %v4851 = vpop.f32.mrb[0].mxu0
      %v4852 = vadd.f32 0.0, %v4851
      %v4853 = vpop.f32.mrb[0].mxu0
      %v4854 = vadd.f32 0.0, %v4853
      %4855 = vmatprep.mubr.f32.mxu0 0.0
      %4856 = vmatmul.mubr.f32.gmra.mrb[0].mxu0 %v4774
      %v4857 = vpop.f32.mrb[0].mxu0
      %v4858 = vadd.f32 0.0, %v4857
      %v4859 = vpop.f32.mrb[0].mxu0
      %v4860 = vadd.f32 0.0, %v4859
      %4861 = vmatprep.mubr.f32.mxu0 0.0
      %4862 = vmatmul.mubr.f32.gmra.mrb[0].mxu0 %v4777
      %v4863 = vpop.f32.mrb[0].mxu0
      %v4864 = vadd.f32 0.0, %v4863
      %v4865 = vpop.f32.mrb[0].mxu0
      %v4866 = vadd.f32 0.0, %v4865
      %4867 = vdwg.mxu0
      %v4868 = vadd.f32 %v4690, %v4846
      %v4869 = vadd.f32 %v4691, %v4848
      %v4870 = vadd.f32 %v4692, %v4852
      %v4871 = vadd.f32 %v4693, %v4854
      %v4872 = vadd.f32 %v4694, %v4858
      %v4873 = vadd.f32 %v4695, %v4860
      %v4874 = vadd.f32 %v4696, %v4864
      %v4875 = vadd.f32 %v4697, %v4866
      %v4876 = vld [vmem:[%s7] sm:$0xff]
      %v4877 = vld [vmem:[%s7 + $0x8] sm:$0xff]
      %v4878 = vld [vmem:[%s7 + $0x10] sm:$0xff]
      %v4879 = vld [vmem:[%s7 + $0x18] sm:$0xff]
      %4881 = vset.pattern.permute.xlu0 0
      %4882 = vperm.xlu0 %4881, %v4876
      %v4883 = vpop.permute.xlu0 %4882
      %4886 = vset.pattern.permute.xlu0 0
      %4887 = vperm.xlu0 %4886, %v4877
      %v4888 = vpop.permute.xlu0 %4887
      %4891 = vset.pattern.permute.xlu0 0
      %4892 = vperm.xlu0 %4891, %v4878
      %v4893 = vpop.permute.xlu0 %4892
      %4896 = vset.pattern.permute.xlu0 0
      %4897 = vperm.xlu0 %4896, %v4879
      %v4898 = vpop.permute.xlu0 %4897
      %v4900 = vadd.f32 %v4868, %v4883
      %v4901 = vadd.f32 %v4869, %v4883
      %v4902 = vadd.f32 %v4870, %v4888
      %v4903 = vadd.f32 %v4871, %v4888
      %v4904 = vadd.f32 %v4872, %v4893
      %v4905 = vadd.f32 %v4873, %v4893
      %v4906 = vadd.f32 %v4874, %v4898
      %v4907 = vadd.f32 %v4875, %v4898
      %v4908 = vmax.f32 %v4900, 0.0
      %v4909 = vmax.f32 %v4901, 0.0
      %v4910 = vmax.f32 %v4902, 0.0
      %v4911 = vmax.f32 %v4903, 0.0
      %v4912 = vmax.f32 %v4904, 0.0
      %v4913 = vmax.f32 %v4905, 0.0
      %v4914 = vmax.f32 %v4906, 0.0
      %v4915 = vmax.f32 %v4907, 0.0
      %v4916 = vld [vmem:[%s8] sm:$0xff]
      %v4917 = vld [vmem:[%s8 + $0x8] sm:$0xff]
      %v4918 = vld [vmem:[%s8 + $0x10] sm:$0xff]
      %v4919 = vld [vmem:[%s8 + $0x18] sm:$0xff]
      %4921 = vset.pattern.permute.xlu0 0
      %4922 = vperm.xlu0 %4921, %v4916
      %v4923 = vpop.permute.xlu0 %4922
      %4926 = vset.pattern.permute.xlu0 0
      %4927 = vperm.xlu0 %4926, %v4917
      %v4928 = vpop.permute.xlu0 %4927
      %4931 = vset.pattern.permute.xlu0 0
      %4932 = vperm.xlu0 %4931, %v4918
      %v4933 = vpop.permute.xlu0 %4932
      %4936 = vset.pattern.permute.xlu0 0
      %4937 = vperm.xlu0 %4936, %v4919
      %v4938 = vpop.permute.xlu0 %4937
      %v4940 = vmul.f32 %v4908, %v4923
      %v4941 = vmul.f32 %v4909, %v4923
      %v4942 = vmul.f32 %v4910, %v4928
      %v4943 = vmul.f32 %v4911, %v4928
      %v4944 = vmul.f32 %v4912, %v4933
      %v4945 = vmul.f32 %v4913, %v4933
      %v4946 = vmul.f32 %v4914, %v4938
      %v4947 = vmul.f32 %v4915, %v4938
      %v4948 = vadd.f32 %v4940, %v4942
      %v4949 = vadd.f32 %v4948, %v4944
      %v4950 = vadd.f32 %v4949, %v4946
      %v4951 = vrot.slane %v4950, 4
      %v4952 = vadd.f32 %v4950, %v4951
      %v4953 = vrot.slane %v4952, 2
      %v4954 = vadd.f32 %v4952, %v4953
      %v4955 = vrot.slane %v4954, 1
      %v4956 = vadd.f32 %v4954, %v4955
      %v4957 = vadd.f32 %v4941, %v4943
      %v4958 = vadd.f32 %v4957, %v4945
      %v4959 = vadd.f32 %v4958, %v4947
      %v4960 = vrot.slane %v4959, 4
      %v4961 = vadd.f32 %v4959, %v4960
      %v4962 = vrot.slane %v4961, 2
      %v4963 = vadd.f32 %v4961, %v4962
      %v4964 = vrot.slane %v4963, 1
      %v4965 = vadd.f32 %v4963, %v4964
      %v4966 = vld [vmem:[#allocation2] sm:$0x1]
      %4968 = vset.pattern.permute.xlu0 0
      %4969 = vperm.xlu0 %4968, %v4966
      %v4970 = vpop.permute.xlu0 %4969
      %v4972 = vlaneseq
      %v4973 = vshrl.u32 %v4972, 7
      %v4974 = vsub.s32 0, %v4973
      %v4975 = vrot.slane %v4970, %v4974
      %v4976 = vadd.f32 %v4956, %v4975
      %v4977 = vadd.f32 %v4965, %v4975
      %v4980 = vcombine.low %v4976, %v4977
      %v4982 = vunpack.c.l.s4 1966171168
      %v4983 = vunpack.c.0.s8 %v4982
      %v4984 = vlaneseq
      %v4985 = vshrl.u32 %v4984, 7
      %v4986 = vsub.s32 %v4983, %v4985
      %v4987 = vrot.slane %v4980, %v4986
      %v4989 = vunpack.c.l.s4 1966171168
      %v4990 = vunpack.c.0.s8 %v4989
      %v4991 = vlaneseq
      %v4992 = vshrl.u32 %v4991, 7
      %v4993 = vsub.s32 %v4990, %v4992
      %v4994 = vrot.slane %v4987, %v4993
      %v4996 = vlaneseq
      %vm4997 = vcmp.ge.s32.totalorder %v4996, 0
      %vm4998 = vcmp.lt.s32.totalorder %v4996, 256
      %vm4999 = vmand %vm4997, %vm4998
      %5000 = vst.msk [vmem:[%s361] sm:$0x3] %vm4999, %v4994
      %s5001 = smul.u32 2, %s23
      %p5002 = scmp.lt.s32.totalorder %s5001, 3
      %s5003 = scalar_select %p5002, %s5001, 3
      %s5004 = scalar_lea.vmem %s10, %s5003
      // Predicated region
      $region61: #{mini_unet_forward.1} parent=59 // pred_check
        %p5005 = pneg %p256
      $region62: #{mini_unet_forward.1} parent=59 // pred_check_branch
        %5007 = sbr.rel (%p5005) target = $region64
      $region63: #{mini_unet_forward.1} parent=59 // pred_region
        %s5008 = smul.u32 2, %s23
      $region64: #{mini_unet_forward.1} parent=59 // pred_fallthru
        _
    $region60: #{mini_unet_forward.1} parent=5 // pred_fallthru
      _
    %p5009 = scmp.le.s32.totalorder 2, %s18
    // Predicated region
    $region65: #{mini_unet_forward.1} parent=5 // pred_check
      %p5010 = pneg %p5009
    $region66: #{mini_unet_forward.1} parent=5 // pred_check_branch
      %5012 = sbr.rel (%p5010) target = $region68
    $region67: #{mini_unet_forward.1} parent=5 // pred_region
      %s5013 = ssub.s32 %s18, 2
      // Predicated region
      $region69: #{mini_unet_forward.1} parent=67 // pred_check
        %p5014 = pneg %p262
      $region70: #{mini_unet_forward.1} parent=67 // pred_check_branch
        %5016 = sbr.rel (%p5014) target = $region72
      $region71: #{mini_unet_forward.1} parent=67 // pred_region
        %s5017 = smul.u32 2, %s24
        %p5018 = scmp.lt.s32.totalorder %s5017, 3
        %s5019 = scalar_select %p5018, %s5017, 3
        %s5020 = scalar_lea.vmem %s10, %s5019
      $region72: #{mini_unet_forward.1} parent=67 // pred_fallthru
        _
    $region68: #{mini_unet_forward.1} parent=5 // pred_fallthru
      _
  $region6: #{mini_unet_forward.1} parent=0 // loop_footer
    %s22 = sadd.s32 1, %s18
  $region7: #{mini_unet_forward.1} parent=0 // loop_footer_branch
    %17 = sbr.rel target = $region3
  $region8: #{mini_unet_forward.1} parent=0 // loop_exit
    _

</llo_original>
